<compile_context>
chip_gen: v6e
topology: v6e:2x2x1
jax: 0.10.0
libtpu: 0.0.40
codegen_flags: <defaults>
</compile_context>

<pallas_src>
import math
from functools import partial

import jax
import jax.numpy as jnp
import numpy as np
from jax.experimental import pallas as pl
from jax.experimental.pallas import tpu as pltpu

NEG_SLOPE = 0.2
OUT_SCALE = 1.0 / math.sqrt(2.0)


def _disc_block_kernel(x_ref, w1_ref, b1_ref, w2_ref, b2_ref, wr_ref, br_ref,
                       mask_ref, dw_ref, out_ref, xp_ref, h1_ref, col_ref,
                       *, H, W, off):
    """One batch element per grid step.

    x_ref   : (1, Cin, H*W)    f32   raw image, spatially flattened
    w1_ref  : (Cin, 9*Cin)     bf16  conv1 weights, taps folded into K
    b1_ref  : (Cin, 1)         f32
    w2_ref  : (Cout, 9*Cin)    bf16  conv2 weights, taps folded into K
    b2_ref  : (Cout, 1)        f32
    wr_ref  : (Cout, Cin)      bf16  residual 1x1 conv
    br_ref  : (Cout, 1)        f32
    mask_ref: (1, S)           f32   1.0 at interior positions of padded grid
    dw_ref  : (W, W//2)        bf16  width avg-pool + stride-2 select (0.25's)
    out_ref : (1, Cout, Hh*Wh) bf16  lane-dense pooled output
    xp_ref  : (Cin, SW)        bf16  scratch: zero-padded flat image + margins
    h1_ref  : (Cin, SW)        bf16  scratch: conv1 activations + margins
    col_ref : (9*Cin, S)       bf16  scratch: im2col stacked taps (reused)
    """
    Hp, Wp = H + 2, W + 2
    S = Hp * Wp
    Hh, Wh = H // 2, W // 2
    cin = w1_ref.shape[0]

    def leaky(v):
        return jnp.where(v > 0, v, NEG_SLOPE * v)

    # One-time hygiene: zero the padded scratches (halo ring + tap-shift
    # margins).  Later grid steps only rewrite the interior rows / [off,off+S),
    # so the ring and margins stay zero and every read is deterministic.
    @pl.when(pl.program_id(0) == 0)
    def _():
        xp_ref[...] = jnp.zeros_like(xp_ref)
        h1_ref[...] = jnp.zeros_like(h1_ref)

    # In-kernel zero-pad + flatten: H row stores into the padded flat scratch.
    for y in range(H):
        dst = off + (y + 1) * Wp + 1
        xp_ref[:, dst:dst + W] = x_ref[0, :, y * W:(y + 1) * W].astype(jnp.bfloat16)

    interior = mask_ref[...] > 0.0                          # (1, S) bool

    # im2col: stack the 9 lane-shifted taps along the contraction (sublane) dim
    # so each 3x3 conv becomes a single K = 9*Cin MXU matmul.
    taps = [(ky - 1) * Wp + (kx - 1) for ky in range(3) for kx in range(3)]

    def build_col(src_ref):
        for t, d in enumerate(taps):
            col_ref[t * cin:(t + 1) * cin, :] = src_ref[:, off + d:off + d + S]

    # ---- conv #1: 3x3, Cin -> Cin, pad=1, LeakyReLU(0.2) ---------------------
    build_col(xp_ref)
    pre1 = jnp.dot(w1_ref[...], col_ref[...], preferred_element_type=jnp.float32)
    # Zeroing the ring IS conv2's "same" padding (and drops halo garbage).
    h1 = jnp.where(interior, leaky(pre1 + b1_ref[...]), 0.0)
    h1_ref[:, off:off + S] = h1.astype(jnp.bfloat16)        # single aligned store

    # ---- conv #2: 3x3, Cin -> Cout, pad=1, LeakyReLU(0.2) --------------------
    build_col(h1_ref)
    pre2 = jnp.dot(w2_ref[...], col_ref[...], preferred_element_type=jnp.float32)
    a2 = leaky(pre2 + b2_ref[...])                          # (Cout, S) f32
    # (no mask needed: only interior positions are ever pooled below)

    # ---- residual fused by linearity: avgpool(wr@x) == wr@avgpool(x) ---------
    res = jnp.dot(wr_ref[...], xp_ref[:, off:off + S],
                  preferred_element_type=jnp.float32)       # (Cout, S) f32
    comb = a2 + res

    # ---- 2x2 avg pool: height = shift+add (f32 VPU), width+downselect = slim
    # (W, Wh) matmul per output row; bias br added post-pool, then 1/sqrt(2). --
    rowsum = comb[:, :S - Wp] + comb[:, Wp:]                # (Cout, S-Wp) f32
    dw = dw_ref[...]
    for oi in range(Hh):
        start = (2 * oi + 1) * Wp + 1                       # interior row 2*oi+1, col 1
        seg = rowsum[:, start:start + W].astype(jnp.bfloat16)          # (Cout, W)
        pooled = jnp.dot(seg, dw, preferred_element_type=jnp.float32)  # (Cout, Wh)
        out_ref[0, :, oi * Wh:(oi + 1) * Wh] = (
            (pooled + br_ref[...]) * OUT_SCALE).astype(out_ref.dtype)


def discriminator_block(x, params):
    """x: (N, Cin, H, W) float32 NCHW.  Returns (N, Cout, H//2, W//2) bfloat16."""
    w1, b1 = params["w1"], params["b1"]
    w2, b2 = params["w2"], params["b2"]
    wr, br = params["wr"], params["br"]

    N, Cin, H, W = x.shape
    Cout = w2.shape[0]
    assert H % 2 == 0 and W % 2 == 0
    Hh, Wh = H // 2, W // 2
    Hp, Wp = H + 2, W + 2
    S = Hp * Wp
    OUT_N = Hh * Wh
    OFF = pl.cdiv(Wp + 1, 128) * 128              # lane-aligned margin >= Wp+1
    SW = OFF + pl.cdiv(S + Wp + 1, 128) * 128     # room for +/-(Wp+1) tap shifts

    xflat = x.astype(jnp.float32).reshape(N, Cin, H * W)    # free contiguous reshape

    # Weights with the 9 taps folded into the contraction dim:
    # column t*Cin + i  <->  tap t = ky*3+kx of input channel i.
    w1f = jnp.transpose(w1, (0, 2, 3, 1)).reshape(Cin, 9 * Cin).astype(jnp.bfloat16)
    w2f = jnp.transpose(w2, (0, 2, 3, 1)).reshape(Cout, 9 * Cin).astype(jnp.bfloat16)
    wrm = wr.reshape(Cout, Cin).astype(jnp.bfloat16)
    b1c = b1.reshape(Cin, 1).astype(jnp.float32)
    b2c = b2.reshape(Cout, 1).astype(jnp.float32)
    brc = br.reshape(Cout, 1).astype(jnp.float32)

    # Interior mask over the flattened padded grid (the zero ring = "same" pad).
    m2d = np.zeros((Hp, Wp), np.float32)
    m2d[1:H + 1, 1:W + 1] = 1.0
    mask = jnp.asarray(m2d.reshape(1, S))

    # Slim width-pool + stride-2 down-select matrix (0.25 is exact in bf16).
    dmat = np.zeros((W, Wh), np.float32)
    for j in range(Wh):
        dmat[2 * j, j] = 0.25
        dmat[2 * j + 1, j] = 0.25
    dw = jnp.asarray(dmat, dtype=jnp.bfloat16)

    # Working-set estimate -> explicit scoped-VMEM limit (v5e default is 16 MiB,
    # v7x physical is 64 MiB).
    est = (2 * Cin * H * W * 4                        # x block (double-buffered)
           + 2 * Cout * OUT_N * 2                     # out block (double-buffered)
           + 2 * Cin * SW * 2 + 9 * Cin * S * 2       # persistent scratches
           + (Cin + Cout) * 9 * Cin * 2 + Cout * Cin * 2 + W * Wh * 2
           + (Cin + 2 * Cout) * 4 + S * 4             # constants (single-buffered)
           + (5 * Cout + 2 * Cin) * S * 4)            # f32 intermediates headroom
    vmem_limit = int(min(64 * 2**20, max(16 * 2**20, 2 * est)))

    def call(single_buffer_constants):
        mode = pl.Buffered(1) if single_buffer_constants else None

        def const_spec(shape):
            imap = lambda n: (0,) * len(shape)
            if mode is None:
                return pl.BlockSpec(shape, imap)
            return pl.BlockSpec(shape, imap, pipeline_mode=mode)

        grid_spec = pltpu.PrefetchScalarGridSpec(
            num_scalar_prefetch=0,
            grid=(N,),
            in_specs=[
                pl.BlockSpec((1, Cin, H * W), lambda n: (n, 0, 0)),   # x
                const_spec((Cin, 9 * Cin)),                           # w1f
                const_spec((Cin, 1)),                                 # b1
                const_spec((Cout, 9 * Cin)),                          # w2f
                const_spec((Cout, 1)),                                # b2
                const_spec((Cout, Cin)),                              # wr
                const_spec((Cout, 1)),                                # br
                const_spec((1, S)),                                   # mask
                const_spec((W, Wh)),                                  # dw
            ],
            out_specs=pl.BlockSpec((1, Cout, OUT_N), lambda n: (n, 0, 0)),
            scratch_shapes=[
                pltpu.VMEM((Cin, SW), jnp.bfloat16),     # padded flat input
                pltpu.VMEM((Cin, SW), jnp.bfloat16),     # conv1 activations
                pltpu.VMEM((9 * Cin, S), jnp.bfloat16),  # im2col stacked taps
            ],
        )
        return pl.pallas_call(
            partial(_disc_block_kernel, H=H, W=W, off=OFF),
            out_shape=jax.ShapeDtypeStruct((N, Cout, OUT_N), jnp.bfloat16),
            grid_spec=grid_spec,
            compiler_params=pltpu.CompilerParams(
                dimension_semantics=("parallel",),
                vmem_limit_bytes=vmem_limit),
        )(xflat, w1f, b1c, w2f, b2c, wrm, brc, mask, dw)

    try:
        out = call(True)          # single-buffer the grid-invariant operands
    except Exception:             # pipeline_mode unsupported on this jax build
        out = call(False)

    # Layout plumbing back to NCHW (free reshape; a following block could also
    # consume the lane-dense (Cout, Hh*Wh) layout directly).
    return out.reshape(N, Cout, Hh, Wh)


def init_params(key, in_features, out_features):
    k1, k2, k3 = jax.random.split(key, 3)
    # EqualizedConv2d: weight ~ N(0,1), runtime scale sqrt(2/fan_in), bias = 0.
    w1 = jax.random.normal(k1, (in_features, in_features, 3, 3), jnp.float32)
    w2 = jax.random.normal(k2, (out_features, in_features, 3, 3), jnp.float32)
    wr = jax.random.normal(k3, (out_features, in_features, 1, 1), jnp.float32)
    c3 = math.sqrt(2.0 / (in_features * 3 * 3))
    c1 = math.sqrt(2.0 / (in_features * 1 * 1))
    return dict(
        w1=w1 * c3, b1=jnp.zeros((in_features,), jnp.float32),
        w2=w2 * c3, b2=jnp.zeros((out_features,), jnp.float32),
        wr=(wr * c1).reshape(out_features, in_features),
        br=jnp.zeros((out_features,), jnp.float32),
    )


def reference(x, p):
    """Pure-JAX f32 reference of the PyTorch forward (dropout=None path)."""
    def conv(v, w, pad):
        return jax.lax.conv_general_dilated(
            v, w, (1, 1), ((pad, pad), (pad, pad)),
            dimension_numbers=("NCHW", "OIHW", "NCHW"),
            precision=jax.lax.Precision.HIGHEST)

    def avgpool(v):
        n, c, h, w = v.shape
        return v.reshape(n, c, h // 2, 2, w // 2, 2).mean(axis=(3, 5))

    def leaky(v):
        return jnp.where(v > 0, v, NEG_SLOPE * v)

    res = conv(avgpool(x), p["wr"][:, :, None, None], 0) + p["br"][None, :, None, None]
    h = leaky(conv(x, p["w1"], 1) + p["b1"][None, :, None, None])
    h = leaky(conv(h, p["w2"], 1) + p["b2"][None, :, None, None])
    h = avgpool(h)
    return (h + res) * OUT_SCALE


if __name__ == "__main__":
    key = jax.random.PRNGKey(0)
    kx, kp = jax.random.split(key)

    N, Cin, Cout, H, W = 2, 4, 8, 16, 16
    x = jax.random.normal(kx, (N, Cin, H, W), jnp.float32)
    params = init_params(kp, Cin, Cout)

    out = jax.block_until_ready(discriminator_block(x, params))
    ref = reference(x, params)

    # bf16 MXU operands (f32 accumulation) + bf16 output vs an exact-f32
    # reference: ~1e-2-level differences expected; structural bugs would be O(1).
    np.testing.assert_allclose(np.asarray(out.astype(jnp.float32)),
                               np.asarray(ref), rtol=5e-2, atol=5e-2)

    print("KERNEL_OK")
</pallas_src>

<mosaic_0001>
module attributes {stable_mosaic.version = 11 : i64} {
  func.func @_disc_block_kernel(%arg0: i32, %arg1: memref<1x4x256xf32, #tpu.memory_space<vmem>>, %arg2: memref<4x36xbf16, #tpu.memory_space<vmem>>, %arg3: memref<4x1xf32, #tpu.memory_space<vmem>>, %arg4: memref<8x36xbf16, #tpu.memory_space<vmem>>, %arg5: memref<8x1xf32, #tpu.memory_space<vmem>>, %arg6: memref<8x4xbf16, #tpu.memory_space<vmem>>, %arg7: memref<8x1xf32, #tpu.memory_space<vmem>>, %arg8: memref<1x324xf32, #tpu.memory_space<vmem>>, %arg9: memref<16x8xbf16, #tpu.memory_space<vmem>>, %arg10: memref<1x8x64xbf16, #tpu.memory_space<vmem>>, %arg11: memref<4x512xbf16, #tpu.memory_space<vmem>>, %arg12: memref<4x512xbf16, #tpu.memory_space<vmem>>, %arg13: memref<36x324xbf16, #tpu.memory_space<vmem>>) attributes {dimension_semantics = [#tpu.dimension_semantics<parallel>], iteration_bounds = array<i64: 2>, scalar_prefetch = 0 : i64, scratch_operands = 3 : i64, tpu.core_type = #tpu.core_type<tc>, window_params = [{transform_indices = @transform_0, window_bounds = array<i64: 1, 4, 256>}, {pipeline_mode = #tpu.pipeline_mode<synchronous>, transform_indices = @transform_1, window_bounds = array<i64: 4, 36>}, {pipeline_mode = #tpu.pipeline_mode<synchronous>, transform_indices = @transform_2, window_bounds = array<i64: 4, 1>}, {pipeline_mode = #tpu.pipeline_mode<synchronous>, transform_indices = @transform_3, window_bounds = array<i64: 8, 36>}, {pipeline_mode = #tpu.pipeline_mode<synchronous>, transform_indices = @transform_4, window_bounds = array<i64: 8, 1>}, {pipeline_mode = #tpu.pipeline_mode<synchronous>, transform_indices = @transform_5, window_bounds = array<i64: 8, 4>}, {pipeline_mode = #tpu.pipeline_mode<synchronous>, transform_indices = @transform_6, window_bounds = array<i64: 8, 1>}, {pipeline_mode = #tpu.pipeline_mode<synchronous>, transform_indices = @transform_7, window_bounds = array<i64: 1, 324>}, {pipeline_mode = #tpu.pipeline_mode<synchronous>, transform_indices = @transform_8, window_bounds = array<i64: 16, 8>}, {transform_indices = @transform_9, window_bounds = array<i64: 1, 8, 64>}]} {
    %c0_i32 = arith.constant 0 : i32
    %0 = arith.cmpi eq, %arg0, %c0_i32 : i32
    %1 = arith.extui %0 : i1 to i32
    %c0_i32_0 = arith.constant 0 : i32
    %2 = arith.cmpi ne, %1, %c0_i32_0 : i32
    scf.if %2 {
      %cst_192 = arith.constant 0.000000e+00 : bf16
      %238 = vector.broadcast %cst_192 : bf16 to vector<4x512xbf16>
      %c0_193 = arith.constant 0 : index
      %c0_194 = arith.constant 0 : index
      %239 = vector.load %arg11[%c0_193, %c0_194] : memref<4x512xbf16, #tpu.memory_space<vmem>>, vector<4x512xbf16>
      tpu.vector_store %arg11[%c0_193, %c0_194], %238 {strides = array<i32>} : memref<4x512xbf16, #tpu.memory_space<vmem>>, vector<4x512xbf16>,
      %cst_195 = arith.constant 0.000000e+00 : bf16
      %240 = vector.broadcast %cst_195 : bf16 to vector<4x512xbf16>
      %c0_196 = arith.constant 0 : index
      %c0_197 = arith.constant 0 : index
      %241 = vector.load %arg12[%c0_196, %c0_197] : memref<4x512xbf16, #tpu.memory_space<vmem>>, vector<4x512xbf16>
      tpu.vector_store %arg12[%c0_196, %c0_197], %240 {strides = array<i32>} : memref<4x512xbf16, #tpu.memory_space<vmem>>, vector<4x512xbf16>,
    } else {
    }
    %c0 = arith.constant 0 : index
    %c0_1 = arith.constant 0 : index
    %c0_2 = arith.constant 0 : index
    %3 = vector.load %arg1[%c0, %c0_1, %c0_2] : memref<1x4x256xf32, #tpu.memory_space<vmem>>, vector<1x4x16xf32>
    %4 = vector.shape_cast %3 : vector<1x4x16xf32> to vector<4x16xf32>
    %5 = arith.truncf %4 : vector<4x16xf32> to vector<4x16xbf16>
    %c0_3 = arith.constant 0 : index
    %c147 = arith.constant 147 : index
    %6 = vector.load %arg11[%c0_3, %c147] : memref<4x512xbf16, #tpu.memory_space<vmem>>, vector<4x16xbf16>
    tpu.vector_store %arg11[%c0_3, %c147], %5 {strides = array<i32>} : memref<4x512xbf16, #tpu.memory_space<vmem>>, vector<4x16xbf16>,
    %c0_4 = arith.constant 0 : index
    %c0_5 = arith.constant 0 : index
    %c16 = arith.constant 16 : index
    %7 = vector.load %arg1[%c0_4, %c0_5, %c16] : memref<1x4x256xf32, #tpu.memory_space<vmem>>, vector<1x4x16xf32>
    %8 = vector.shape_cast %7 : vector<1x4x16xf32> to vector<4x16xf32>
    %9 = arith.truncf %8 : vector<4x16xf32> to vector<4x16xbf16>
    %c0_6 = arith.constant 0 : index
    %c165 = arith.constant 165 : index
    %10 = vector.load %arg11[%c0_6, %c165] : memref<4x512xbf16, #tpu.memory_space<vmem>>, vector<4x16xbf16>
    tpu.vector_store %arg11[%c0_6, %c165], %9 {strides = array<i32>} : memref<4x512xbf16, #tpu.memory_space<vmem>>, vector<4x16xbf16>,
    %c0_7 = arith.constant 0 : index
    %c0_8 = arith.constant 0 : index
    %c32 = arith.constant 32 : index
    %11 = vector.load %arg1[%c0_7, %c0_8, %c32] : memref<1x4x256xf32, #tpu.memory_space<vmem>>, vector<1x4x16xf32>
    %12 = vector.shape_cast %11 : vector<1x4x16xf32> to vector<4x16xf32>
    %13 = arith.truncf %12 : vector<4x16xf32> to vector<4x16xbf16>
    %c0_9 = arith.constant 0 : index
    %c183 = arith.constant 183 : index
    %14 = vector.load %arg11[%c0_9, %c183] : memref<4x512xbf16, #tpu.memory_space<vmem>>, vector<4x16xbf16>
    tpu.vector_store %arg11[%c0_9, %c183], %13 {strides = array<i32>} : memref<4x512xbf16, #tpu.memory_space<vmem>>, vector<4x16xbf16>,
    %c0_10 = arith.constant 0 : index
    %c0_11 = arith.constant 0 : index
    %c48 = arith.constant 48 : index
    %15 = vector.load %arg1[%c0_10, %c0_11, %c48] : memref<1x4x256xf32, #tpu.memory_space<vmem>>, vector<1x4x16xf32>
    %16 = vector.shape_cast %15 : vector<1x4x16xf32> to vector<4x16xf32>
    %17 = arith.truncf %16 : vector<4x16xf32> to vector<4x16xbf16>
    %c0_12 = arith.constant 0 : index
    %c201 = arith.constant 201 : index
    %18 = vector.load %arg11[%c0_12, %c201] : memref<4x512xbf16, #tpu.memory_space<vmem>>, vector<4x16xbf16>
    tpu.vector_store %arg11[%c0_12, %c201], %17 {strides = array<i32>} : memref<4x512xbf16, #tpu.memory_space<vmem>>, vector<4x16xbf16>,
    %c0_13 = arith.constant 0 : index
    %c0_14 = arith.constant 0 : index
    %c64 = arith.constant 64 : index
    %19 = vector.load %arg1[%c0_13, %c0_14, %c64] : memref<1x4x256xf32, #tpu.memory_space<vmem>>, vector<1x4x16xf32>
    %20 = vector.shape_cast %19 : vector<1x4x16xf32> to vector<4x16xf32>
    %21 = arith.truncf %20 : vector<4x16xf32> to vector<4x16xbf16>
    %c0_15 = arith.constant 0 : index
    %c219 = arith.constant 219 : index
    %22 = vector.load %arg11[%c0_15, %c219] : memref<4x512xbf16, #tpu.memory_space<vmem>>, vector<4x16xbf16>
    tpu.vector_store %arg11[%c0_15, %c219], %21 {strides = array<i32>} : memref<4x512xbf16, #tpu.memory_space<vmem>>, vector<4x16xbf16>,
    %c0_16 = arith.constant 0 : index
    %c0_17 = arith.constant 0 : index
    %c80 = arith.constant 80 : index
    %23 = vector.load %arg1[%c0_16, %c0_17, %c80] : memref<1x4x256xf32, #tpu.memory_space<vmem>>, vector<1x4x16xf32>
    %24 = vector.shape_cast %23 : vector<1x4x16xf32> to vector<4x16xf32>
    %25 = arith.truncf %24 : vector<4x16xf32> to vector<4x16xbf16>
    %c0_18 = arith.constant 0 : index
    %c237 = arith.constant 237 : index
    %26 = vector.load %arg11[%c0_18, %c237] : memref<4x512xbf16, #tpu.memory_space<vmem>>, vector<4x16xbf16>
    tpu.vector_store %arg11[%c0_18, %c237], %25 {strides = array<i32>} : memref<4x512xbf16, #tpu.memory_space<vmem>>, vector<4x16xbf16>,
    %c0_19 = arith.constant 0 : index
    %c0_20 = arith.constant 0 : index
    %c96 = arith.constant 96 : index
    %27 = vector.load %arg1[%c0_19, %c0_20, %c96] : memref<1x4x256xf32, #tpu.memory_space<vmem>>, vector<1x4x16xf32>
    %28 = vector.shape_cast %27 : vector<1x4x16xf32> to vector<4x16xf32>
    %29 = arith.truncf %28 : vector<4x16xf32> to vector<4x16xbf16>
    %c0_21 = arith.constant 0 : index
    %c255 = arith.constant 255 : index
    %30 = vector.load %arg11[%c0_21, %c255] : memref<4x512xbf16, #tpu.memory_space<vmem>>, vector<4x16xbf16>
    tpu.vector_store %arg11[%c0_21, %c255], %29 {strides = array<i32>} : memref<4x512xbf16, #tpu.memory_space<vmem>>, vector<4x16xbf16>,
    %c0_22 = arith.constant 0 : index
    %c0_23 = arith.constant 0 : index
    %c112 = arith.constant 112 : index
    %31 = vector.load %arg1[%c0_22, %c0_23, %c112] : memref<1x4x256xf32, #tpu.memory_space<vmem>>, vector<1x4x16xf32>
    %32 = vector.shape_cast %31 : vector<1x4x16xf32> to vector<4x16xf32>
    %33 = arith.truncf %32 : vector<4x16xf32> to vector<4x16xbf16>
    %c0_24 = arith.constant 0 : index
    %c273 = arith.constant 273 : index
    %34 = vector.load %arg11[%c0_24, %c273] : memref<4x512xbf16, #tpu.memory_space<vmem>>, vector<4x16xbf16>
    tpu.vector_store %arg11[%c0_24, %c273], %33 {strides = array<i32>} : memref<4x512xbf16, #tpu.memory_space<vmem>>, vector<4x16xbf16>,
    %c0_25 = arith.constant 0 : index
    %c0_26 = arith.constant 0 : index
    %c128 = arith.constant 128 : index
    %35 = vector.load %arg1[%c0_25, %c0_26, %c128] : memref<1x4x256xf32, #tpu.memory_space<vmem>>, vector<1x4x16xf32>
    %36 = vector.shape_cast %35 : vector<1x4x16xf32> to vector<4x16xf32>
    %37 = arith.truncf %36 : vector<4x16xf32> to vector<4x16xbf16>
    %c0_27 = arith.constant 0 : index
    %c291 = arith.constant 291 : index
    %38 = vector.load %arg11[%c0_27, %c291] : memref<4x512xbf16, #tpu.memory_space<vmem>>, vector<4x16xbf16>
    tpu.vector_store %arg11[%c0_27, %c291], %37 {strides = array<i32>} : memref<4x512xbf16, #tpu.memory_space<vmem>>, vector<4x16xbf16>,
    %c0_28 = arith.constant 0 : index
    %c0_29 = arith.constant 0 : index
    %c144 = arith.constant 144 : index
    %39 = vector.load %arg1[%c0_28, %c0_29, %c144] : memref<1x4x256xf32, #tpu.memory_space<vmem>>, vector<1x4x16xf32>
    %40 = vector.shape_cast %39 : vector<1x4x16xf32> to vector<4x16xf32>
    %41 = arith.truncf %40 : vector<4x16xf32> to vector<4x16xbf16>
    %c0_30 = arith.constant 0 : index
    %c309 = arith.constant 309 : index
    %42 = vector.load %arg11[%c0_30, %c309] : memref<4x512xbf16, #tpu.memory_space<vmem>>, vector<4x16xbf16>
    tpu.vector_store %arg11[%c0_30, %c309], %41 {strides = array<i32>} : memref<4x512xbf16, #tpu.memory_space<vmem>>, vector<4x16xbf16>,
    %c0_31 = arith.constant 0 : index
    %c0_32 = arith.constant 0 : index
    %c160 = arith.constant 160 : index
    %43 = vector.load %arg1[%c0_31, %c0_32, %c160] : memref<1x4x256xf32, #tpu.memory_space<vmem>>, vector<1x4x16xf32>
    %44 = vector.shape_cast %43 : vector<1x4x16xf32> to vector<4x16xf32>
    %45 = arith.truncf %44 : vector<4x16xf32> to vector<4x16xbf16>
    %c0_33 = arith.constant 0 : index
    %c327 = arith.constant 327 : index
    %46 = vector.load %arg11[%c0_33, %c327] : memref<4x512xbf16, #tpu.memory_space<vmem>>, vector<4x16xbf16>
    tpu.vector_store %arg11[%c0_33, %c327], %45 {strides = array<i32>} : memref<4x512xbf16, #tpu.memory_space<vmem>>, vector<4x16xbf16>,
    %c0_34 = arith.constant 0 : index
    %c0_35 = arith.constant 0 : index
    %c176 = arith.constant 176 : index
    %47 = vector.load %arg1[%c0_34, %c0_35, %c176] : memref<1x4x256xf32, #tpu.memory_space<vmem>>, vector<1x4x16xf32>
    %48 = vector.shape_cast %47 : vector<1x4x16xf32> to vector<4x16xf32>
    %49 = arith.truncf %48 : vector<4x16xf32> to vector<4x16xbf16>
    %c0_36 = arith.constant 0 : index
    %c345 = arith.constant 345 : index
    %50 = vector.load %arg11[%c0_36, %c345] : memref<4x512xbf16, #tpu.memory_space<vmem>>, vector<4x16xbf16>
    tpu.vector_store %arg11[%c0_36, %c345], %49 {strides = array<i32>} : memref<4x512xbf16, #tpu.memory_space<vmem>>, vector<4x16xbf16>,
    %c0_37 = arith.constant 0 : index
    %c0_38 = arith.constant 0 : index
    %c192 = arith.constant 192 : index
    %51 = vector.load %arg1[%c0_37, %c0_38, %c192] : memref<1x4x256xf32, #tpu.memory_space<vmem>>, vector<1x4x16xf32>
    %52 = vector.shape_cast %51 : vector<1x4x16xf32> to vector<4x16xf32>
    %53 = arith.truncf %52 : vector<4x16xf32> to vector<4x16xbf16>
    %c0_39 = arith.constant 0 : index
    %c363 = arith.constant 363 : index
    %54 = vector.load %arg11[%c0_39, %c363] : memref<4x512xbf16, #tpu.memory_space<vmem>>, vector<4x16xbf16>
    tpu.vector_store %arg11[%c0_39, %c363], %53 {strides = array<i32>} : memref<4x512xbf16, #tpu.memory_space<vmem>>, vector<4x16xbf16>,
    %c0_40 = arith.constant 0 : index
    %c0_41 = arith.constant 0 : index
    %c208 = arith.constant 208 : index
    %55 = vector.load %arg1[%c0_40, %c0_41, %c208] : memref<1x4x256xf32, #tpu.memory_space<vmem>>, vector<1x4x16xf32>
    %56 = vector.shape_cast %55 : vector<1x4x16xf32> to vector<4x16xf32>
    %57 = arith.truncf %56 : vector<4x16xf32> to vector<4x16xbf16>
    %c0_42 = arith.constant 0 : index
    %c381 = arith.constant 381 : index
    %58 = vector.load %arg11[%c0_42, %c381] : memref<4x512xbf16, #tpu.memory_space<vmem>>, vector<4x16xbf16>
    tpu.vector_store %arg11[%c0_42, %c381], %57 {strides = array<i32>} : memref<4x512xbf16, #tpu.memory_space<vmem>>, vector<4x16xbf16>,
    %c0_43 = arith.constant 0 : index
    %c0_44 = arith.constant 0 : index
    %c224 = arith.constant 224 : index
    %59 = vector.load %arg1[%c0_43, %c0_44, %c224] : memref<1x4x256xf32, #tpu.memory_space<vmem>>, vector<1x4x16xf32>
    %60 = vector.shape_cast %59 : vector<1x4x16xf32> to vector<4x16xf32>
    %61 = arith.truncf %60 : vector<4x16xf32> to vector<4x16xbf16>
    %c0_45 = arith.constant 0 : index
    %c399 = arith.constant 399 : index
    %62 = vector.load %arg11[%c0_45, %c399] : memref<4x512xbf16, #tpu.memory_space<vmem>>, vector<4x16xbf16>
    tpu.vector_store %arg11[%c0_45, %c399], %61 {strides = array<i32>} : memref<4x512xbf16, #tpu.memory_space<vmem>>, vector<4x16xbf16>,
    %c0_46 = arith.constant 0 : index
    %c0_47 = arith.constant 0 : index
    %c240 = arith.constant 240 : index
    %63 = vector.load %arg1[%c0_46, %c0_47, %c240] : memref<1x4x256xf32, #tpu.memory_space<vmem>>, vector<1x4x16xf32>
    %64 = vector.shape_cast %63 : vector<1x4x16xf32> to vector<4x16xf32>
    %65 = arith.truncf %64 : vector<4x16xf32> to vector<4x16xbf16>
    %c0_48 = arith.constant 0 : index
    %c417 = arith.constant 417 : index
    %66 = vector.load %arg11[%c0_48, %c417] : memref<4x512xbf16, #tpu.memory_space<vmem>>, vector<4x16xbf16>
    tpu.vector_store %arg11[%c0_48, %c417], %65 {strides = array<i32>} : memref<4x512xbf16, #tpu.memory_space<vmem>>, vector<4x16xbf16>,
    %c0_49 = arith.constant 0 : index
    %c0_50 = arith.constant 0 : index
    %67 = vector.load %arg8[%c0_49, %c0_50] : memref<1x324xf32, #tpu.memory_space<vmem>>, vector<1x324xf32>
    %cst = arith.constant 0.000000e+00 : f32
    %68 = vector.broadcast %cst : f32 to vector<1x324xf32>
    %69 = arith.cmpf ogt, %67, %68 : vector<1x324xf32>
    %c0_51 = arith.constant 0 : index
    %c109 = arith.constant 109 : index
    %70 = vector.load %arg11[%c0_51, %c109] : memref<4x512xbf16, #tpu.memory_space<vmem>>, vector<4x324xbf16>
    %c0_52 = arith.constant 0 : index
    %c0_53 = arith.constant 0 : index
    %71 = vector.load %arg13[%c0_52, %c0_53] : memref<36x324xbf16, #tpu.memory_space<vmem>>, vector<4x324xbf16>
    tpu.vector_store %arg13[%c0_52, %c0_53], %70 {strides = array<i32>} : memref<36x324xbf16, #tpu.memory_space<vmem>>, vector<4x324xbf16>,
    %c0_54 = arith.constant 0 : index
    %c110 = arith.constant 110 : index
    %72 = vector.load %arg11[%c0_54, %c110] : memref<4x512xbf16, #tpu.memory_space<vmem>>, vector<4x324xbf16>
    %c4 = arith.constant 4 : index
    %c0_55 = arith.constant 0 : index
    %73 = vector.load %arg13[%c4, %c0_55] : memref<36x324xbf16, #tpu.memory_space<vmem>>, vector<4x324xbf16>
    tpu.vector_store %arg13[%c4, %c0_55], %72 {strides = array<i32>} : memref<36x324xbf16, #tpu.memory_space<vmem>>, vector<4x324xbf16>,
    %c0_56 = arith.constant 0 : index
    %c111 = arith.constant 111 : index
    %74 = vector.load %arg11[%c0_56, %c111] : memref<4x512xbf16, #tpu.memory_space<vmem>>, vector<4x324xbf16>
    %c8 = arith.constant 8 : index
    %c0_57 = arith.constant 0 : index
    %75 = vector.load %arg13[%c8, %c0_57] : memref<36x324xbf16, #tpu.memory_space<vmem>>, vector<4x324xbf16>
    tpu.vector_store %arg13[%c8, %c0_57], %74 {strides = array<i32>} : memref<36x324xbf16, #tpu.memory_space<vmem>>, vector<4x324xbf16>,
    %c0_58 = arith.constant 0 : index
    %c127 = arith.constant 127 : index
    %76 = vector.load %arg11[%c0_58, %c127] : memref<4x512xbf16, #tpu.memory_space<vmem>>, vector<4x324xbf16>
    %c12 = arith.constant 12 : index
    %c0_59 = arith.constant 0 : index
    %77 = vector.load %arg13[%c12, %c0_59] : memref<36x324xbf16, #tpu.memory_space<vmem>>, vector<4x324xbf16>
    tpu.vector_store %arg13[%c12, %c0_59], %76 {strides = array<i32>} : memref<36x324xbf16, #tpu.memory_space<vmem>>, vector<4x324xbf16>,
    %c0_60 = arith.constant 0 : index
    %c128_61 = arith.constant 128 : index
    %78 = vector.load %arg11[%c0_60, %c128_61] : memref<4x512xbf16, #tpu.memory_space<vmem>>, vector<4x324xbf16>
    %c16_62 = arith.constant 16 : index
    %c0_63 = arith.constant 0 : index
    %79 = vector.load %arg13[%c16_62, %c0_63] : memref<36x324xbf16, #tpu.memory_space<vmem>>, vector<4x324xbf16>
    tpu.vector_store %arg13[%c16_62, %c0_63], %78 {strides = array<i32>} : memref<36x324xbf16, #tpu.memory_space<vmem>>, vector<4x324xbf16>,
    %c0_64 = arith.constant 0 : index
    %c129 = arith.constant 129 : index
    %80 = vector.load %arg11[%c0_64, %c129] : memref<4x512xbf16, #tpu.memory_space<vmem>>, vector<4x324xbf16>
    %c20 = arith.constant 20 : index
    %c0_65 = arith.constant 0 : index
    %81 = vector.load %arg13[%c20, %c0_65] : memref<36x324xbf16, #tpu.memory_space<vmem>>, vector<4x324xbf16>
    tpu.vector_store %arg13[%c20, %c0_65], %80 {strides = array<i32>} : memref<36x324xbf16, #tpu.memory_space<vmem>>, vector<4x324xbf16>,
    %c0_66 = arith.constant 0 : index
    %c145 = arith.constant 145 : index
    %82 = vector.load %arg11[%c0_66, %c145] : memref<4x512xbf16, #tpu.memory_space<vmem>>, vector<4x324xbf16>
    %c24 = arith.constant 24 : index
    %c0_67 = arith.constant 0 : index
    %83 = vector.load %arg13[%c24, %c0_67] : memref<36x324xbf16, #tpu.memory_space<vmem>>, vector<4x324xbf16>
    tpu.vector_store %arg13[%c24, %c0_67], %82 {strides = array<i32>} : memref<36x324xbf16, #tpu.memory_space<vmem>>, vector<4x324xbf16>,
    %c0_68 = arith.constant 0 : index
    %c146 = arith.constant 146 : index
    %84 = vector.load %arg11[%c0_68, %c146] : memref<4x512xbf16, #tpu.memory_space<vmem>>, vector<4x324xbf16>
    %c28 = arith.constant 28 : index
    %c0_69 = arith.constant 0 : index
    %85 = vector.load %arg13[%c28, %c0_69] : memref<36x324xbf16, #tpu.memory_space<vmem>>, vector<4x324xbf16>
    tpu.vector_store %arg13[%c28, %c0_69], %84 {strides = array<i32>} : memref<36x324xbf16, #tpu.memory_space<vmem>>, vector<4x324xbf16>,
    %c0_70 = arith.constant 0 : index
    %c147_71 = arith.constant 147 : index
    %86 = vector.load %arg11[%c0_70, %c147_71] : memref<4x512xbf16, #tpu.memory_space<vmem>>, vector<4x324xbf16>
    %c32_72 = arith.constant 32 : index
    %c0_73 = arith.constant 0 : index
    %87 = vector.load %arg13[%c32_72, %c0_73] : memref<36x324xbf16, #tpu.memory_space<vmem>>, vector<4x324xbf16>
    tpu.vector_store %arg13[%c32_72, %c0_73], %86 {strides = array<i32>} : memref<36x324xbf16, #tpu.memory_space<vmem>>, vector<4x324xbf16>,
    %c0_74 = arith.constant 0 : index
    %c0_75 = arith.constant 0 : index
    %88 = vector.load %arg2[%c0_74, %c0_75] : memref<4x36xbf16, #tpu.memory_space<vmem>>, vector<4x36xbf16>
    %c0_76 = arith.constant 0 : index
    %c0_77 = arith.constant 0 : index
    %89 = vector.load %arg13[%c0_76, %c0_77] : memref<36x324xbf16, #tpu.memory_space<vmem>>, vector<36x324xbf16>
    %cst_78 = arith.constant dense<0.000000e+00> : vector<4x324xf32>
    %90 = tpu.matmul %88, %89, %cst_78 {dimension_numbers = #tpu.dot_dimension_numbers<[1], [0], [0], [1], [0, 0, 1, 1], [], []>} : vector<4x36xbf16>, vector<36x324xbf16>, vector<4x324xf32> -> vector<4x324xf32>
    %c0_79 = arith.constant 0 : index
    %c0_80 = arith.constant 0 : index
    %91 = vector.load %arg3[%c0_79, %c0_80] : memref<4x1xf32, #tpu.memory_space<vmem>>, vector<4x1xf32>
    %92 = vector.broadcast %91 : vector<4x1xf32> to vector<4x324xf32>
    %93 = arith.addf %90, %92 : vector<4x324xf32>
    %cst_81 = arith.constant 0.000000e+00 : f32
    %94 = vector.broadcast %cst_81 : f32 to vector<4x324xf32>
    %95 = arith.cmpf ogt, %93, %94 : vector<4x324xf32>
    %cst_82 = arith.constant 2.000000e-01 : f32
    %96 = vector.broadcast %cst_82 : f32 to vector<4x324xf32>
    %97 = arith.mulf %96, %93 : vector<4x324xf32>
    %98 = arith.select %95, %93, %97 : vector<4x324xi1>, vector<4x324xf32>
    %cst_83 = arith.constant 0.000000e+00 : f32
    %99 = vector.shape_cast %69 : vector<1x324xi1> to vector<1x324xi1>
    %100 = vector.broadcast %99 : vector<1x324xi1> to vector<4x324xi1>
    %101 = vector.broadcast %cst_83 : f32 to vector<4x324xf32>
    %102 = arith.select %100, %98, %101 : vector<4x324xi1>, vector<4x324xf32>
    %103 = arith.truncf %102 : vector<4x324xf32> to vector<4x324xbf16>
    %c0_84 = arith.constant 0 : index
    %c128_85 = arith.constant 128 : index
    %104 = vector.load %arg12[%c0_84, %c128_85] : memref<4x512xbf16, #tpu.memory_space<vmem>>, vector<4x324xbf16>
    tpu.vector_store %arg12[%c0_84, %c128_85], %103 {strides = array<i32>} : memref<4x512xbf16, #tpu.memory_space<vmem>>, vector<4x324xbf16>,
    %c0_86 = arith.constant 0 : index
    %c109_87 = arith.constant 109 : index
    %105 = vector.load %arg12[%c0_86, %c109_87] : memref<4x512xbf16, #tpu.memory_space<vmem>>, vector<4x324xbf16>
    %c0_88 = arith.constant 0 : index
    %c0_89 = arith.constant 0 : index
    %106 = vector.load %arg13[%c0_88, %c0_89] : memref<36x324xbf16, #tpu.memory_space<vmem>>, vector<4x324xbf16>
    tpu.vector_store %arg13[%c0_88, %c0_89], %105 {strides = array<i32>} : memref<36x324xbf16, #tpu.memory_space<vmem>>, vector<4x324xbf16>,
    %c0_90 = arith.constant 0 : index
    %c110_91 = arith.constant 110 : index
    %107 = vector.load %arg12[%c0_90, %c110_91] : memref<4x512xbf16, #tpu.memory_space<vmem>>, vector<4x324xbf16>
    %c4_92 = arith.constant 4 : index
    %c0_93 = arith.constant 0 : index
    %108 = vector.load %arg13[%c4_92, %c0_93] : memref<36x324xbf16, #tpu.memory_space<vmem>>, vector<4x324xbf16>
    tpu.vector_store %arg13[%c4_92, %c0_93], %107 {strides = array<i32>} : memref<36x324xbf16, #tpu.memory_space<vmem>>, vector<4x324xbf16>,
    %c0_94 = arith.constant 0 : index
    %c111_95 = arith.constant 111 : index
    %109 = vector.load %arg12[%c0_94, %c111_95] : memref<4x512xbf16, #tpu.memory_space<vmem>>, vector<4x324xbf16>
    %c8_96 = arith.constant 8 : index
    %c0_97 = arith.constant 0 : index
    %110 = vector.load %arg13[%c8_96, %c0_97] : memref<36x324xbf16, #tpu.memory_space<vmem>>, vector<4x324xbf16>
    tpu.vector_store %arg13[%c8_96, %c0_97], %109 {strides = array<i32>} : memref<36x324xbf16, #tpu.memory_space<vmem>>, vector<4x324xbf16>,
    %c0_98 = arith.constant 0 : index
    %c127_99 = arith.constant 127 : index
    %111 = vector.load %arg12[%c0_98, %c127_99] : memref<4x512xbf16, #tpu.memory_space<vmem>>, vector<4x324xbf16>
    %c12_100 = arith.constant 12 : index
    %c0_101 = arith.constant 0 : index
    %112 = vector.load %arg13[%c12_100, %c0_101] : memref<36x324xbf16, #tpu.memory_space<vmem>>, vector<4x324xbf16>
    tpu.vector_store %arg13[%c12_100, %c0_101], %111 {strides = array<i32>} : memref<36x324xbf16, #tpu.memory_space<vmem>>, vector<4x324xbf16>,
    %c0_102 = arith.constant 0 : index
    %c128_103 = arith.constant 128 : index
    %113 = vector.load %arg12[%c0_102, %c128_103] : memref<4x512xbf16, #tpu.memory_space<vmem>>, vector<4x324xbf16>
    %c16_104 = arith.constant 16 : index
    %c0_105 = arith.constant 0 : index
    %114 = vector.load %arg13[%c16_104, %c0_105] : memref<36x324xbf16, #tpu.memory_space<vmem>>, vector<4x324xbf16>
    tpu.vector_store %arg13[%c16_104, %c0_105], %113 {strides = array<i32>} : memref<36x324xbf16, #tpu.memory_space<vmem>>, vector<4x324xbf16>,
    %c0_106 = arith.constant 0 : index
    %c129_107 = arith.constant 129 : index
    %115 = vector.load %arg12[%c0_106, %c129_107] : memref<4x512xbf16, #tpu.memory_space<vmem>>, vector<4x324xbf16>
    %c20_108 = arith.constant 20 : index
    %c0_109 = arith.constant 0 : index
    %116 = vector.load %arg13[%c20_108, %c0_109] : memref<36x324xbf16, #tpu.memory_space<vmem>>, vector<4x324xbf16>
    tpu.vector_store %arg13[%c20_108, %c0_109], %115 {strides = array<i32>} : memref<36x324xbf16, #tpu.memory_space<vmem>>, vector<4x324xbf16>,
    %c0_110 = arith.constant 0 : index
    %c145_111 = arith.constant 145 : index
    %117 = vector.load %arg12[%c0_110, %c145_111] : memref<4x512xbf16, #tpu.memory_space<vmem>>, vector<4x324xbf16>
    %c24_112 = arith.constant 24 : index
    %c0_113 = arith.constant 0 : index
    %118 = vector.load %arg13[%c24_112, %c0_113] : memref<36x324xbf16, #tpu.memory_space<vmem>>, vector<4x324xbf16>
    tpu.vector_store %arg13[%c24_112, %c0_113], %117 {strides = array<i32>} : memref<36x324xbf16, #tpu.memory_space<vmem>>, vector<4x324xbf16>,
    %c0_114 = arith.constant 0 : index
    %c146_115 = arith.constant 146 : index
    %119 = vector.load %arg12[%c0_114, %c146_115] : memref<4x512xbf16, #tpu.memory_space<vmem>>, vector<4x324xbf16>
    %c28_116 = arith.constant 28 : index
    %c0_117 = arith.constant 0 : index
    %120 = vector.load %arg13[%c28_116, %c0_117] : memref<36x324xbf16, #tpu.memory_space<vmem>>, vector<4x324xbf16>
    tpu.vector_store %arg13[%c28_116, %c0_117], %119 {strides = array<i32>} : memref<36x324xbf16, #tpu.memory_space<vmem>>, vector<4x324xbf16>,
    %c0_118 = arith.constant 0 : index
    %c147_119 = arith.constant 147 : index
    %121 = vector.load %arg12[%c0_118, %c147_119] : memref<4x512xbf16, #tpu.memory_space<vmem>>, vector<4x324xbf16>
    %c32_120 = arith.constant 32 : index
    %c0_121 = arith.constant 0 : index
    %122 = vector.load %arg13[%c32_120, %c0_121] : memref<36x324xbf16, #tpu.memory_space<vmem>>, vector<4x324xbf16>
    tpu.vector_store %arg13[%c32_120, %c0_121], %121 {strides = array<i32>} : memref<36x324xbf16, #tpu.memory_space<vmem>>, vector<4x324xbf16>,
    %c0_122 = arith.constant 0 : index
    %c0_123 = arith.constant 0 : index
    %123 = vector.load %arg4[%c0_122, %c0_123] : memref<8x36xbf16, #tpu.memory_space<vmem>>, vector<8x36xbf16>
    %c0_124 = arith.constant 0 : index
    %c0_125 = arith.constant 0 : index
    %124 = vector.load %arg13[%c0_124, %c0_125] : memref<36x324xbf16, #tpu.memory_space<vmem>>, vector<36x324xbf16>
    %cst_126 = arith.constant dense<0.000000e+00> : vector<8x324xf32>
    %125 = tpu.matmul %123, %124, %cst_126 {dimension_numbers = #tpu.dot_dimension_numbers<[1], [0], [0], [1], [0, 0, 1, 1], [], []>} : vector<8x36xbf16>, vector<36x324xbf16>, vector<8x324xf32> -> vector<8x324xf32>
    %c0_127 = arith.constant 0 : index
    %c0_128 = arith.constant 0 : index
    %126 = vector.load %arg5[%c0_127, %c0_128] : memref<8x1xf32, #tpu.memory_space<vmem>>, vector<8x1xf32>
    %127 = vector.broadcast %126 : vector<8x1xf32> to vector<8x324xf32>
    %128 = arith.addf %125, %127 : vector<8x324xf32>
    %cst_129 = arith.constant 0.000000e+00 : f32
    %129 = vector.broadcast %cst_129 : f32 to vector<8x324xf32>
    %130 = arith.cmpf ogt, %128, %129 : vector<8x324xf32>
    %cst_130 = arith.constant 2.000000e-01 : f32
    %131 = vector.broadcast %cst_130 : f32 to vector<8x324xf32>
    %132 = arith.mulf %131, %128 : vector<8x324xf32>
    %133 = arith.select %130, %128, %132 : vector<8x324xi1>, vector<8x324xf32>
    %c0_131 = arith.constant 0 : index
    %c0_132 = arith.constant 0 : index
    %134 = vector.load %arg6[%c0_131, %c0_132] : memref<8x4xbf16, #tpu.memory_space<vmem>>, vector<8x4xbf16>
    %c0_133 = arith.constant 0 : index
    %c128_134 = arith.constant 128 : index
    %135 = vector.load %arg11[%c0_133, %c128_134] : memref<4x512xbf16, #tpu.memory_space<vmem>>, vector<4x324xbf16>
    %cst_135 = arith.constant dense<0.000000e+00> : vector<8x324xf32>
    %136 = tpu.matmul %134, %135, %cst_135 {dimension_numbers = #tpu.dot_dimension_numbers<[1], [0], [0], [1], [0, 0, 1, 1], [], []>} : vector<8x4xbf16>, vector<4x324xbf16>, vector<8x324xf32> -> vector<8x324xf32>
    %137 = arith.addf %133, %136 : vector<8x324xf32>
    %138 = vector.extract_strided_slice %137 {offsets = [0, 0], sizes = [8, 306], strides = [1, 1]} : vector<8x324xf32> to vector<8x306xf32>
    %139 = vector.extract_strided_slice %137 {offsets = [0, 18], sizes = [8, 306], strides = [1, 1]} : vector<8x324xf32> to vector<8x306xf32>
    %140 = arith.addf %138, %139 : vector<8x306xf32>
    %c0_136 = arith.constant 0 : index
    %c0_137 = arith.constant 0 : index
    %141 = vector.load %arg9[%c0_136, %c0_137] : memref<16x8xbf16, #tpu.memory_space<vmem>>, vector<16x8xbf16>
    %142 = vector.extract_strided_slice %140 {offsets = [0, 19], sizes = [8, 16], strides = [1, 1]} : vector<8x306xf32> to vector<8x16xf32>
    %143 = arith.truncf %142 : vector<8x16xf32> to vector<8x16xbf16>
    %cst_138 = arith.constant dense<0.000000e+00> : vector<8x8xf32>
    %144 = tpu.matmul %143, %141, %cst_138 {dimension_numbers = #tpu.dot_dimension_numbers<[1], [0], [0], [1], [0, 0, 1, 1], [], []>} : vector<8x16xbf16>, vector<16x8xbf16>, vector<8x8xf32> -> vector<8x8xf32>
    %c0_139 = arith.constant 0 : index
    %c0_140 = arith.constant 0 : index
    %145 = vector.load %arg7[%c0_139, %c0_140] : memref<8x1xf32, #tpu.memory_space<vmem>>, vector<8x1xf32>
    %146 = vector.broadcast %145 : vector<8x1xf32> to vector<8x8xf32>
    %147 = arith.addf %144, %146 : vector<8x8xf32>
    %cst_141 = arith.constant 0.707106769 : f32
    %148 = vector.broadcast %cst_141 : f32 to vector<8x8xf32>
    %149 = arith.mulf %147, %148 : vector<8x8xf32>
    %150 = arith.truncf %149 : vector<8x8xf32> to vector<8x8xbf16>
    %c0_142 = arith.constant 0 : index
    %c0_143 = arith.constant 0 : index
    %c0_144 = arith.constant 0 : index
    %151 = vector.load %arg10[%c0_142, %c0_143, %c0_144] : memref<1x8x64xbf16, #tpu.memory_space<vmem>>, vector<1x8x8xbf16>
    %152 = vector.shape_cast %151 : vector<1x8x8xbf16> to vector<8x8xbf16>
    %153 = vector.shape_cast %150 : vector<8x8xbf16> to vector<1x8x8xbf16>
    tpu.vector_store %arg10[%c0_142, %c0_143, %c0_144], %153 {strides = array<i32>} : memref<1x8x64xbf16, #tpu.memory_space<vmem>>, vector<1x8x8xbf16>,
    %154 = vector.extract_strided_slice %140 {offsets = [0, 55], sizes = [8, 16], strides = [1, 1]} : vector<8x306xf32> to vector<8x16xf32>
    %155 = arith.truncf %154 : vector<8x16xf32> to vector<8x16xbf16>
    %cst_145 = arith.constant dense<0.000000e+00> : vector<8x8xf32>
    %156 = tpu.matmul %155, %141, %cst_145 {dimension_numbers = #tpu.dot_dimension_numbers<[1], [0], [0], [1], [0, 0, 1, 1], [], []>} : vector<8x16xbf16>, vector<16x8xbf16>, vector<8x8xf32> -> vector<8x8xf32>
    %c0_146 = arith.constant 0 : index
    %c0_147 = arith.constant 0 : index
    %157 = vector.load %arg7[%c0_146, %c0_147] : memref<8x1xf32, #tpu.memory_space<vmem>>, vector<8x1xf32>
    %158 = vector.broadcast %157 : vector<8x1xf32> to vector<8x8xf32>
    %159 = arith.addf %156, %158 : vector<8x8xf32>
    %cst_148 = arith.constant 0.707106769 : f32
    %160 = vector.broadcast %cst_148 : f32 to vector<8x8xf32>
    %161 = arith.mulf %159, %160 : vector<8x8xf32>
    %162 = arith.truncf %161 : vector<8x8xf32> to vector<8x8xbf16>
    %c0_149 = arith.constant 0 : index
    %c0_150 = arith.constant 0 : index
    %c8_151 = arith.constant 8 : index
    %163 = vector.load %arg10[%c0_149, %c0_150, %c8_151] : memref<1x8x64xbf16, #tpu.memory_space<vmem>>, vector<1x8x8xbf16>
    %164 = vector.shape_cast %163 : vector<1x8x8xbf16> to vector<8x8xbf16>
    %165 = vector.shape_cast %162 : vector<8x8xbf16> to vector<1x8x8xbf16>
    tpu.vector_store %arg10[%c0_149, %c0_150, %c8_151], %165 {strides = array<i32>} : memref<1x8x64xbf16, #tpu.memory_space<vmem>>, vector<1x8x8xbf16>,
    %166 = vector.extract_strided_slice %140 {offsets = [0, 91], sizes = [8, 16], strides = [1, 1]} : vector<8x306xf32> to vector<8x16xf32>
    %167 = arith.truncf %166 : vector<8x16xf32> to vector<8x16xbf16>
    %cst_152 = arith.constant dense<0.000000e+00> : vector<8x8xf32>
    %168 = tpu.matmul %167, %141, %cst_152 {dimension_numbers = #tpu.dot_dimension_numbers<[1], [0], [0], [1], [0, 0, 1, 1], [], []>} : vector<8x16xbf16>, vector<16x8xbf16>, vector<8x8xf32> -> vector<8x8xf32>
    %c0_153 = arith.constant 0 : index
    %c0_154 = arith.constant 0 : index
    %169 = vector.load %arg7[%c0_153, %c0_154] : memref<8x1xf32, #tpu.memory_space<vmem>>, vector<8x1xf32>
    %170 = vector.broadcast %169 : vector<8x1xf32> to vector<8x8xf32>
    %171 = arith.addf %168, %170 : vector<8x8xf32>
    %cst_155 = arith.constant 0.707106769 : f32
    %172 = vector.broadcast %cst_155 : f32 to vector<8x8xf32>
    %173 = arith.mulf %171, %172 : vector<8x8xf32>
    %174 = arith.truncf %173 : vector<8x8xf32> to vector<8x8xbf16>
    %c0_156 = arith.constant 0 : index
    %c0_157 = arith.constant 0 : index
    %c16_158 = arith.constant 16 : index
    %175 = vector.load %arg10[%c0_156, %c0_157, %c16_158] : memref<1x8x64xbf16, #tpu.memory_space<vmem>>, vector<1x8x8xbf16>
    %176 = vector.shape_cast %175 : vector<1x8x8xbf16> to vector<8x8xbf16>
    %177 = vector.shape_cast %174 : vector<8x8xbf16> to vector<1x8x8xbf16>
    tpu.vector_store %arg10[%c0_156, %c0_157, %c16_158], %177 {strides = array<i32>} : memref<1x8x64xbf16, #tpu.memory_space<vmem>>, vector<1x8x8xbf16>,
    %178 = vector.extract_strided_slice %140 {offsets = [0, 127], sizes = [8, 16], strides = [1, 1]} : vector<8x306xf32> to vector<8x16xf32>
    %179 = arith.truncf %178 : vector<8x16xf32> to vector<8x16xbf16>
    %cst_159 = arith.constant dense<0.000000e+00> : vector<8x8xf32>
    %180 = tpu.matmul %179, %141, %cst_159 {dimension_numbers = #tpu.dot_dimension_numbers<[1], [0], [0], [1], [0, 0, 1, 1], [], []>} : vector<8x16xbf16>, vector<16x8xbf16>, vector<8x8xf32> -> vector<8x8xf32>
    %c0_160 = arith.constant 0 : index
    %c0_161 = arith.constant 0 : index
    %181 = vector.load %arg7[%c0_160, %c0_161] : memref<8x1xf32, #tpu.memory_space<vmem>>, vector<8x1xf32>
    %182 = vector.broadcast %181 : vector<8x1xf32> to vector<8x8xf32>
    %183 = arith.addf %180, %182 : vector<8x8xf32>
    %cst_162 = arith.constant 0.707106769 : f32
    %184 = vector.broadcast %cst_162 : f32 to vector<8x8xf32>
    %185 = arith.mulf %183, %184 : vector<8x8xf32>
    %186 = arith.truncf %185 : vector<8x8xf32> to vector<8x8xbf16>
    %c0_163 = arith.constant 0 : index
    %c0_164 = arith.constant 0 : index
    %c24_165 = arith.constant 24 : index
    %187 = vector.load %arg10[%c0_163, %c0_164, %c24_165] : memref<1x8x64xbf16, #tpu.memory_space<vmem>>, vector<1x8x8xbf16>
    %188 = vector.shape_cast %187 : vector<1x8x8xbf16> to vector<8x8xbf16>
    %189 = vector.shape_cast %186 : vector<8x8xbf16> to vector<1x8x8xbf16>
    tpu.vector_store %arg10[%c0_163, %c0_164, %c24_165], %189 {strides = array<i32>} : memref<1x8x64xbf16, #tpu.memory_space<vmem>>, vector<1x8x8xbf16>,
    %190 = vector.extract_strided_slice %140 {offsets = [0, 163], sizes = [8, 16], strides = [1, 1]} : vector<8x306xf32> to vector<8x16xf32>
    %191 = arith.truncf %190 : vector<8x16xf32> to vector<8x16xbf16>
    %cst_166 = arith.constant dense<0.000000e+00> : vector<8x8xf32>
    %192 = tpu.matmul %191, %141, %cst_166 {dimension_numbers = #tpu.dot_dimension_numbers<[1], [0], [0], [1], [0, 0, 1, 1], [], []>} : vector<8x16xbf16>, vector<16x8xbf16>, vector<8x8xf32> -> vector<8x8xf32>
    %c0_167 = arith.constant 0 : index
    %c0_168 = arith.constant 0 : index
    %193 = vector.load %arg7[%c0_167, %c0_168] : memref<8x1xf32, #tpu.memory_space<vmem>>, vector<8x1xf32>
    %194 = vector.broadcast %193 : vector<8x1xf32> to vector<8x8xf32>
    %195 = arith.addf %192, %194 : vector<8x8xf32>
    %cst_169 = arith.constant 0.707106769 : f32
    %196 = vector.broadcast %cst_169 : f32 to vector<8x8xf32>
    %197 = arith.mulf %195, %196 : vector<8x8xf32>
    %198 = arith.truncf %197 : vector<8x8xf32> to vector<8x8xbf16>
    %c0_170 = arith.constant 0 : index
    %c0_171 = arith.constant 0 : index
    %c32_172 = arith.constant 32 : index
    %199 = vector.load %arg10[%c0_170, %c0_171, %c32_172] : memref<1x8x64xbf16, #tpu.memory_space<vmem>>, vector<1x8x8xbf16>
    %200 = vector.shape_cast %199 : vector<1x8x8xbf16> to vector<8x8xbf16>
    %201 = vector.shape_cast %198 : vector<8x8xbf16> to vector<1x8x8xbf16>
    tpu.vector_store %arg10[%c0_170, %c0_171, %c32_172], %201 {strides = array<i32>} : memref<1x8x64xbf16, #tpu.memory_space<vmem>>, vector<1x8x8xbf16>,
    %202 = vector.extract_strided_slice %140 {offsets = [0, 199], sizes = [8, 16], strides = [1, 1]} : vector<8x306xf32> to vector<8x16xf32>
    %203 = arith.truncf %202 : vector<8x16xf32> to vector<8x16xbf16>
    %cst_173 = arith.constant dense<0.000000e+00> : vector<8x8xf32>
    %204 = tpu.matmul %203, %141, %cst_173 {dimension_numbers = #tpu.dot_dimension_numbers<[1], [0], [0], [1], [0, 0, 1, 1], [], []>} : vector<8x16xbf16>, vector<16x8xbf16>, vector<8x8xf32> -> vector<8x8xf32>
    %c0_174 = arith.constant 0 : index
    %c0_175 = arith.constant 0 : index
    %205 = vector.load %arg7[%c0_174, %c0_175] : memref<8x1xf32, #tpu.memory_space<vmem>>, vector<8x1xf32>
    %206 = vector.broadcast %205 : vector<8x1xf32> to vector<8x8xf32>
    %207 = arith.addf %204, %206 : vector<8x8xf32>
    %cst_176 = arith.constant 0.707106769 : f32
    %208 = vector.broadcast %cst_176 : f32 to vector<8x8xf32>
    %209 = arith.mulf %207, %208 : vector<8x8xf32>
    %210 = arith.truncf %209 : vector<8x8xf32> to vector<8x8xbf16>
    %c0_177 = arith.constant 0 : index
    %c0_178 = arith.constant 0 : index
    %c40 = arith.constant 40 : index
    %211 = vector.load %arg10[%c0_177, %c0_178, %c40] : memref<1x8x64xbf16, #tpu.memory_space<vmem>>, vector<1x8x8xbf16>
    %212 = vector.shape_cast %211 : vector<1x8x8xbf16> to vector<8x8xbf16>
    %213 = vector.shape_cast %210 : vector<8x8xbf16> to vector<1x8x8xbf16>
    tpu.vector_store %arg10[%c0_177, %c0_178, %c40], %213 {strides = array<i32>} : memref<1x8x64xbf16, #tpu.memory_space<vmem>>, vector<1x8x8xbf16>,
    %214 = vector.extract_strided_slice %140 {offsets = [0, 235], sizes = [8, 16], strides = [1, 1]} : vector<8x306xf32> to vector<8x16xf32>
    %215 = arith.truncf %214 : vector<8x16xf32> to vector<8x16xbf16>
    %cst_179 = arith.constant dense<0.000000e+00> : vector<8x8xf32>
    %216 = tpu.matmul %215, %141, %cst_179 {dimension_numbers = #tpu.dot_dimension_numbers<[1], [0], [0], [1], [0, 0, 1, 1], [], []>} : vector<8x16xbf16>, vector<16x8xbf16>, vector<8x8xf32> -> vector<8x8xf32>
    %c0_180 = arith.constant 0 : index
    %c0_181 = arith.constant 0 : index
    %217 = vector.load %arg7[%c0_180, %c0_181] : memref<8x1xf32, #tpu.memory_space<vmem>>, vector<8x1xf32>
    %218 = vector.broadcast %217 : vector<8x1xf32> to vector<8x8xf32>
    %219 = arith.addf %216, %218 : vector<8x8xf32>
    %cst_182 = arith.constant 0.707106769 : f32
    %220 = vector.broadcast %cst_182 : f32 to vector<8x8xf32>
    %221 = arith.mulf %219, %220 : vector<8x8xf32>
    %222 = arith.truncf %221 : vector<8x8xf32> to vector<8x8xbf16>
    %c0_183 = arith.constant 0 : index
    %c0_184 = arith.constant 0 : index
    %c48_185 = arith.constant 48 : index
    %223 = vector.load %arg10[%c0_183, %c0_184, %c48_185] : memref<1x8x64xbf16, #tpu.memory_space<vmem>>, vector<1x8x8xbf16>
    %224 = vector.shape_cast %223 : vector<1x8x8xbf16> to vector<8x8xbf16>
    %225 = vector.shape_cast %222 : vector<8x8xbf16> to vector<1x8x8xbf16>
    tpu.vector_store %arg10[%c0_183, %c0_184, %c48_185], %225 {strides = array<i32>} : memref<1x8x64xbf16, #tpu.memory_space<vmem>>, vector<1x8x8xbf16>,
    %226 = vector.extract_strided_slice %140 {offsets = [0, 271], sizes = [8, 16], strides = [1, 1]} : vector<8x306xf32> to vector<8x16xf32>
    %227 = arith.truncf %226 : vector<8x16xf32> to vector<8x16xbf16>
    %cst_186 = arith.constant dense<0.000000e+00> : vector<8x8xf32>
    %228 = tpu.matmul %227, %141, %cst_186 {dimension_numbers = #tpu.dot_dimension_numbers<[1], [0], [0], [1], [0, 0, 1, 1], [], []>} : vector<8x16xbf16>, vector<16x8xbf16>, vector<8x8xf32> -> vector<8x8xf32>
    %c0_187 = arith.constant 0 : index
    %c0_188 = arith.constant 0 : index
    %229 = vector.load %arg7[%c0_187, %c0_188] : memref<8x1xf32, #tpu.memory_space<vmem>>, vector<8x1xf32>
    %230 = vector.broadcast %229 : vector<8x1xf32> to vector<8x8xf32>
    %231 = arith.addf %228, %230 : vector<8x8xf32>
    %cst_189 = arith.constant 0.707106769 : f32
    %232 = vector.broadcast %cst_189 : f32 to vector<8x8xf32>
    %233 = arith.mulf %231, %232 : vector<8x8xf32>
    %234 = arith.truncf %233 : vector<8x8xf32> to vector<8x8xbf16>
    %c0_190 = arith.constant 0 : index
    %c0_191 = arith.constant 0 : index
    %c56 = arith.constant 56 : index
    %235 = vector.load %arg10[%c0_190, %c0_191, %c56] : memref<1x8x64xbf16, #tpu.memory_space<vmem>>, vector<1x8x8xbf16>
    %236 = vector.shape_cast %235 : vector<1x8x8xbf16> to vector<8x8xbf16>
    %237 = vector.shape_cast %234 : vector<8x8xbf16> to vector<1x8x8xbf16>
    tpu.vector_store %arg10[%c0_190, %c0_191, %c56], %237 {strides = array<i32>} : memref<1x8x64xbf16, #tpu.memory_space<vmem>>, vector<1x8x8xbf16>,
    return
  }
  func.func @transform_0(%arg0: i32) -> (i32, i32, i32) {
    %c0_i32 = arith.constant 0 : i32
    %c0_i32_0 = arith.constant 0 : i32
    %c0_i32_1 = arith.constant 0 : i32
    return %arg0, %c0_i32, %c0_i32_0 : i32, i32, i32
  }
  func.func @transform_1(%arg0: i32) -> (i32, i32) {
    %c0_i32 = arith.constant 0 : i32
    %c0_i32_0 = arith.constant 0 : i32
    %c0_i32_1 = arith.constant 0 : i32
    return %c0_i32, %c0_i32_0 : i32, i32
  }
  func.func @transform_2(%arg0: i32) -> (i32, i32) {
    %c0_i32 = arith.constant 0 : i32
    %c0_i32_0 = arith.constant 0 : i32
    %c0_i32_1 = arith.constant 0 : i32
    return %c0_i32, %c0_i32_0 : i32, i32
  }
  func.func @transform_3(%arg0: i32) -> (i32, i32) {
    %c0_i32 = arith.constant 0 : i32
    %c0_i32_0 = arith.constant 0 : i32
    %c0_i32_1 = arith.constant 0 : i32
    return %c0_i32, %c0_i32_0 : i32, i32
  }
  func.func @transform_4(%arg0: i32) -> (i32, i32) {
    %c0_i32 = arith.constant 0 : i32
    %c0_i32_0 = arith.constant 0 : i32
    %c0_i32_1 = arith.constant 0 : i32
    return %c0_i32, %c0_i32_0 : i32, i32
  }
  func.func @transform_5(%arg0: i32) -> (i32, i32) {
    %c0_i32 = arith.constant 0 : i32
    %c0_i32_0 = arith.constant 0 : i32
    %c0_i32_1 = arith.constant 0 : i32
    return %c0_i32, %c0_i32_0 : i32, i32
  }
  func.func @transform_6(%arg0: i32) -> (i32, i32) {
    %c0_i32 = arith.constant 0 : i32
    %c0_i32_0 = arith.constant 0 : i32
    %c0_i32_1 = arith.constant 0 : i32
    return %c0_i32, %c0_i32_0 : i32, i32
  }
  func.func @transform_7(%arg0: i32) -> (i32, i32) {
    %c0_i32 = arith.constant 0 : i32
    %c0_i32_0 = arith.constant 0 : i32
    %c0_i32_1 = arith.constant 0 : i32
    return %c0_i32, %c0_i32_0 : i32, i32
  }
  func.func @transform_8(%arg0: i32) -> (i32, i32) {
    %c0_i32 = arith.constant 0 : i32
    %c0_i32_0 = arith.constant 0 : i32
    %c0_i32_1 = arith.constant 0 : i32
    return %c0_i32, %c0_i32_0 : i32, i32
  }
  func.func @transform_9(%arg0: i32) -> (i32, i32, i32) {
    %c0_i32 = arith.constant 0 : i32
    %c0_i32_0 = arith.constant 0 : i32
    %c0_i32_1 = arith.constant 0 : i32
    return %arg0, %c0_i32, %c0_i32_0 : i32, i32, i32
  }
}

module attributes {stable_mosaic.version = 11 : i64} {
  func.func @_disc_block_kernel(%arg0: i32, %arg1: memref<1x4x256xf32, #tpu.memory_space<vmem>>, %arg2: memref<4x36xbf16, #tpu.memory_space<vmem>>, %arg3: memref<4x1xf32, #tpu.memory_space<vmem>>, %arg4: memref<8x36xbf16, #tpu.memory_space<vmem>>, %arg5: memref<8x1xf32, #tpu.memory_space<vmem>>, %arg6: memref<8x4xbf16, #tpu.memory_space<vmem>>, %arg7: memref<8x1xf32, #tpu.memory_space<vmem>>, %arg8: memref<1x324xf32, #tpu.memory_space<vmem>>, %arg9: memref<16x8xbf16, #tpu.memory_space<vmem>>, %arg10: memref<1x8x64xbf16, #tpu.memory_space<vmem>>, %arg11: memref<4x512xbf16, #tpu.memory_space<vmem>>, %arg12: memref<4x512xbf16, #tpu.memory_space<vmem>>, %arg13: memref<36x324xbf16, #tpu.memory_space<vmem>>) attributes {dimension_semantics = [#tpu.dimension_semantics<parallel>], iteration_bounds = array<i64: 2>, scalar_prefetch = 0 : i64, scratch_operands = 3 : i64, tpu.core_type = #tpu.core_type<tc>, window_params = [{transform_indices = @transform_0, window_bounds = array<i64: 1, 4, 256>}, {pipeline_mode = #tpu.pipeline_mode<synchronous>, transform_indices = @transform_1, window_bounds = array<i64: 4, 36>}, {pipeline_mode = #tpu.pipeline_mode<synchronous>, transform_indices = @transform_2, window_bounds = array<i64: 4, 1>}, {pipeline_mode = #tpu.pipeline_mode<synchronous>, transform_indices = @transform_3, window_bounds = array<i64: 8, 36>}, {pipeline_mode = #tpu.pipeline_mode<synchronous>, transform_indices = @transform_4, window_bounds = array<i64: 8, 1>}, {pipeline_mode = #tpu.pipeline_mode<synchronous>, transform_indices = @transform_5, window_bounds = array<i64: 8, 4>}, {pipeline_mode = #tpu.pipeline_mode<synchronous>, transform_indices = @transform_6, window_bounds = array<i64: 8, 1>}, {pipeline_mode = #tpu.pipeline_mode<synchronous>, transform_indices = @transform_7, window_bounds = array<i64: 1, 324>}, {pipeline_mode = #tpu.pipeline_mode<synchronous>, transform_indices = @transform_8, window_bounds = array<i64: 16, 8>}, {transform_indices = @transform_9, window_bounds = array<i64: 1, 8, 64>}]} {
    %c0_i32 = arith.constant 0 : i32
    %0 = arith.cmpi eq, %arg0, %c0_i32 : i32
    %1 = arith.extui %0 : i1 to i32
    %c0_i32_0 = arith.constant 0 : i32
    %2 = arith.cmpi ne, %1, %c0_i32_0 : i32
    scf.if %2 {
      %cst_192 = arith.constant 0.000000e+00 : bf16
      %238 = vector.broadcast %cst_192 : bf16 to vector<4x512xbf16>
      %c0_193 = arith.constant 0 : index
      %c0_194 = arith.constant 0 : index
      %239 = vector.load %arg11[%c0_193, %c0_194] : memref<4x512xbf16, #tpu.memory_space<vmem>>, vector<4x512xbf16>
      tpu.vector_store %arg11[%c0_193, %c0_194], %238 {strides = array<i32>} : memref<4x512xbf16, #tpu.memory_space<vmem>>, vector<4x512xbf16>,
      %cst_195 = arith.constant 0.000000e+00 : bf16
      %240 = vector.broadcast %cst_195 : bf16 to vector<4x512xbf16>
      %c0_196 = arith.constant 0 : index
      %c0_197 = arith.constant 0 : index
      %241 = vector.load %arg12[%c0_196, %c0_197] : memref<4x512xbf16, #tpu.memory_space<vmem>>, vector<4x512xbf16>
      tpu.vector_store %arg12[%c0_196, %c0_197], %240 {strides = array<i32>} : memref<4x512xbf16, #tpu.memory_space<vmem>>, vector<4x512xbf16>,
    } else {
    }
    %c0 = arith.constant 0 : index
    %c0_1 = arith.constant 0 : index
    %c0_2 = arith.constant 0 : index
    %3 = vector.load %arg1[%c0, %c0_1, %c0_2] : memref<1x4x256xf32, #tpu.memory_space<vmem>>, vector<1x4x16xf32>
    %4 = vector.shape_cast %3 : vector<1x4x16xf32> to vector<4x16xf32>
    %5 = arith.truncf %4 : vector<4x16xf32> to vector<4x16xbf16>
    %c0_3 = arith.constant 0 : index
    %c147 = arith.constant 147 : index
    %6 = vector.load %arg11[%c0_3, %c147] : memref<4x512xbf16, #tpu.memory_space<vmem>>, vector<4x16xbf16>
    tpu.vector_store %arg11[%c0_3, %c147], %5 {strides = array<i32>} : memref<4x512xbf16, #tpu.memory_space<vmem>>, vector<4x16xbf16>,
    %c0_4 = arith.constant 0 : index
    %c0_5 = arith.constant 0 : index
    %c16 = arith.constant 16 : index
    %7 = vector.load %arg1[%c0_4, %c0_5, %c16] : memref<1x4x256xf32, #tpu.memory_space<vmem>>, vector<1x4x16xf32>
    %8 = vector.shape_cast %7 : vector<1x4x16xf32> to vector<4x16xf32>
    %9 = arith.truncf %8 : vector<4x16xf32> to vector<4x16xbf16>
    %c0_6 = arith.constant 0 : index
    %c165 = arith.constant 165 : index
    %10 = vector.load %arg11[%c0_6, %c165] : memref<4x512xbf16, #tpu.memory_space<vmem>>, vector<4x16xbf16>
    tpu.vector_store %arg11[%c0_6, %c165], %9 {strides = array<i32>} : memref<4x512xbf16, #tpu.memory_space<vmem>>, vector<4x16xbf16>,
    %c0_7 = arith.constant 0 : index
    %c0_8 = arith.constant 0 : index
    %c32 = arith.constant 32 : index
    %11 = vector.load %arg1[%c0_7, %c0_8, %c32] : memref<1x4x256xf32, #tpu.memory_space<vmem>>, vector<1x4x16xf32>
    %12 = vector.shape_cast %11 : vector<1x4x16xf32> to vector<4x16xf32>
    %13 = arith.truncf %12 : vector<4x16xf32> to vector<4x16xbf16>
    %c0_9 = arith.constant 0 : index
    %c183 = arith.constant 183 : index
    %14 = vector.load %arg11[%c0_9, %c183] : memref<4x512xbf16, #tpu.memory_space<vmem>>, vector<4x16xbf16>
    tpu.vector_store %arg11[%c0_9, %c183], %13 {strides = array<i32>} : memref<4x512xbf16, #tpu.memory_space<vmem>>, vector<4x16xbf16>,
    %c0_10 = arith.constant 0 : index
    %c0_11 = arith.constant 0 : index
    %c48 = arith.constant 48 : index
    %15 = vector.load %arg1[%c0_10, %c0_11, %c48] : memref<1x4x256xf32, #tpu.memory_space<vmem>>, vector<1x4x16xf32>
    %16 = vector.shape_cast %15 : vector<1x4x16xf32> to vector<4x16xf32>
    %17 = arith.truncf %16 : vector<4x16xf32> to vector<4x16xbf16>
    %c0_12 = arith.constant 0 : index
    %c201 = arith.constant 201 : index
    %18 = vector.load %arg11[%c0_12, %c201] : memref<4x512xbf16, #tpu.memory_space<vmem>>, vector<4x16xbf16>
    tpu.vector_store %arg11[%c0_12, %c201], %17 {strides = array<i32>} : memref<4x512xbf16, #tpu.memory_space<vmem>>, vector<4x16xbf16>,
    %c0_13 = arith.constant 0 : index
    %c0_14 = arith.constant 0 : index
    %c64 = arith.constant 64 : index
    %19 = vector.load %arg1[%c0_13, %c0_14, %c64] : memref<1x4x256xf32, #tpu.memory_space<vmem>>, vector<1x4x16xf32>
    %20 = vector.shape_cast %19 : vector<1x4x16xf32> to vector<4x16xf32>
    %21 = arith.truncf %20 : vector<4x16xf32> to vector<4x16xbf16>
    %c0_15 = arith.constant 0 : index
    %c219 = arith.constant 219 : index
    %22 = vector.load %arg11[%c0_15, %c219] : memref<4x512xbf16, #tpu.memory_space<vmem>>, vector<4x16xbf16>
    tpu.vector_store %arg11[%c0_15, %c219], %21 {strides = array<i32>} : memref<4x512xbf16, #tpu.memory_space<vmem>>, vector<4x16xbf16>,
    %c0_16 = arith.constant 0 : index
    %c0_17 = arith.constant 0 : index
    %c80 = arith.constant 80 : index
    %23 = vector.load %arg1[%c0_16, %c0_17, %c80] : memref<1x4x256xf32, #tpu.memory_space<vmem>>, vector<1x4x16xf32>
    %24 = vector.shape_cast %23 : vector<1x4x16xf32> to vector<4x16xf32>
    %25 = arith.truncf %24 : vector<4x16xf32> to vector<4x16xbf16>
    %c0_18 = arith.constant 0 : index
    %c237 = arith.constant 237 : index
    %26 = vector.load %arg11[%c0_18, %c237] : memref<4x512xbf16, #tpu.memory_space<vmem>>, vector<4x16xbf16>
    tpu.vector_store %arg11[%c0_18, %c237], %25 {strides = array<i32>} : memref<4x512xbf16, #tpu.memory_space<vmem>>, vector<4x16xbf16>,
    %c0_19 = arith.constant 0 : index
    %c0_20 = arith.constant 0 : index
    %c96 = arith.constant 96 : index
    %27 = vector.load %arg1[%c0_19, %c0_20, %c96] : memref<1x4x256xf32, #tpu.memory_space<vmem>>, vector<1x4x16xf32>
    %28 = vector.shape_cast %27 : vector<1x4x16xf32> to vector<4x16xf32>
    %29 = arith.truncf %28 : vector<4x16xf32> to vector<4x16xbf16>
    %c0_21 = arith.constant 0 : index
    %c255 = arith.constant 255 : index
    %30 = vector.load %arg11[%c0_21, %c255] : memref<4x512xbf16, #tpu.memory_space<vmem>>, vector<4x16xbf16>
    tpu.vector_store %arg11[%c0_21, %c255], %29 {strides = array<i32>} : memref<4x512xbf16, #tpu.memory_space<vmem>>, vector<4x16xbf16>,
    %c0_22 = arith.constant 0 : index
    %c0_23 = arith.constant 0 : index
    %c112 = arith.constant 112 : index
    %31 = vector.load %arg1[%c0_22, %c0_23, %c112] : memref<1x4x256xf32, #tpu.memory_space<vmem>>, vector<1x4x16xf32>
    %32 = vector.shape_cast %31 : vector<1x4x16xf32> to vector<4x16xf32>
    %33 = arith.truncf %32 : vector<4x16xf32> to vector<4x16xbf16>
    %c0_24 = arith.constant 0 : index
    %c273 = arith.constant 273 : index
    %34 = vector.load %arg11[%c0_24, %c273] : memref<4x512xbf16, #tpu.memory_space<vmem>>, vector<4x16xbf16>
    tpu.vector_store %arg11[%c0_24, %c273], %33 {strides = array<i32>} : memref<4x512xbf16, #tpu.memory_space<vmem>>, vector<4x16xbf16>,
    %c0_25 = arith.constant 0 : index
    %c0_26 = arith.constant 0 : index
    %c128 = arith.constant 128 : index
    %35 = vector.load %arg1[%c0_25, %c0_26, %c128] : memref<1x4x256xf32, #tpu.memory_space<vmem>>, vector<1x4x16xf32>
    %36 = vector.shape_cast %35 : vector<1x4x16xf32> to vector<4x16xf32>
    %37 = arith.truncf %36 : vector<4x16xf32> to vector<4x16xbf16>
    %c0_27 = arith.constant 0 : index
    %c291 = arith.constant 291 : index
    %38 = vector.load %arg11[%c0_27, %c291] : memref<4x512xbf16, #tpu.memory_space<vmem>>, vector<4x16xbf16>
    tpu.vector_store %arg11[%c0_27, %c291], %37 {strides = array<i32>} : memref<4x512xbf16, #tpu.memory_space<vmem>>, vector<4x16xbf16>,
    %c0_28 = arith.constant 0 : index
    %c0_29 = arith.constant 0 : index
    %c144 = arith.constant 144 : index
    %39 = vector.load %arg1[%c0_28, %c0_29, %c144] : memref<1x4x256xf32, #tpu.memory_space<vmem>>, vector<1x4x16xf32>
    %40 = vector.shape_cast %39 : vector<1x4x16xf32> to vector<4x16xf32>
    %41 = arith.truncf %40 : vector<4x16xf32> to vector<4x16xbf16>
    %c0_30 = arith.constant 0 : index
    %c309 = arith.constant 309 : index
    %42 = vector.load %arg11[%c0_30, %c309] : memref<4x512xbf16, #tpu.memory_space<vmem>>, vector<4x16xbf16>
    tpu.vector_store %arg11[%c0_30, %c309], %41 {strides = array<i32>} : memref<4x512xbf16, #tpu.memory_space<vmem>>, vector<4x16xbf16>,
    %c0_31 = arith.constant 0 : index
    %c0_32 = arith.constant 0 : index
    %c160 = arith.constant 160 : index
    %43 = vector.load %arg1[%c0_31, %c0_32, %c160] : memref<1x4x256xf32, #tpu.memory_space<vmem>>, vector<1x4x16xf32>
    %44 = vector.shape_cast %43 : vector<1x4x16xf32> to vector<4x16xf32>
    %45 = arith.truncf %44 : vector<4x16xf32> to vector<4x16xbf16>
    %c0_33 = arith.constant 0 : index
    %c327 = arith.constant 327 : index
    %46 = vector.load %arg11[%c0_33, %c327] : memref<4x512xbf16, #tpu.memory_space<vmem>>, vector<4x16xbf16>
    tpu.vector_store %arg11[%c0_33, %c327], %45 {strides = array<i32>} : memref<4x512xbf16, #tpu.memory_space<vmem>>, vector<4x16xbf16>,
    %c0_34 = arith.constant 0 : index
    %c0_35 = arith.constant 0 : index
    %c176 = arith.constant 176 : index
    %47 = vector.load %arg1[%c0_34, %c0_35, %c176] : memref<1x4x256xf32, #tpu.memory_space<vmem>>, vector<1x4x16xf32>
    %48 = vector.shape_cast %47 : vector<1x4x16xf32> to vector<4x16xf32>
    %49 = arith.truncf %48 : vector<4x16xf32> to vector<4x16xbf16>
    %c0_36 = arith.constant 0 : index
    %c345 = arith.constant 345 : index
    %50 = vector.load %arg11[%c0_36, %c345] : memref<4x512xbf16, #tpu.memory_space<vmem>>, vector<4x16xbf16>
    tpu.vector_store %arg11[%c0_36, %c345], %49 {strides = array<i32>} : memref<4x512xbf16, #tpu.memory_space<vmem>>, vector<4x16xbf16>,
    %c0_37 = arith.constant 0 : index
    %c0_38 = arith.constant 0 : index
    %c192 = arith.constant 192 : index
    %51 = vector.load %arg1[%c0_37, %c0_38, %c192] : memref<1x4x256xf32, #tpu.memory_space<vmem>>, vector<1x4x16xf32>
    %52 = vector.shape_cast %51 : vector<1x4x16xf32> to vector<4x16xf32>
    %53 = arith.truncf %52 : vector<4x16xf32> to vector<4x16xbf16>
    %c0_39 = arith.constant 0 : index
    %c363 = arith.constant 363 : index
    %54 = vector.load %arg11[%c0_39, %c363] : memref<4x512xbf16, #tpu.memory_space<vmem>>, vector<4x16xbf16>
    tpu.vector_store %arg11[%c0_39, %c363], %53 {strides = array<i32>} : memref<4x512xbf16, #tpu.memory_space<vmem>>, vector<4x16xbf16>,
    %c0_40 = arith.constant 0 : index
    %c0_41 = arith.constant 0 : index
    %c208 = arith.constant 208 : index
    %55 = vector.load %arg1[%c0_40, %c0_41, %c208] : memref<1x4x256xf32, #tpu.memory_space<vmem>>, vector<1x4x16xf32>
    %56 = vector.shape_cast %55 : vector<1x4x16xf32> to vector<4x16xf32>
    %57 = arith.truncf %56 : vector<4x16xf32> to vector<4x16xbf16>
    %c0_42 = arith.constant 0 : index
    %c381 = arith.constant 381 : index
    %58 = vector.load %arg11[%c0_42, %c381] : memref<4x512xbf16, #tpu.memory_space<vmem>>, vector<4x16xbf16>
    tpu.vector_store %arg11[%c0_42, %c381], %57 {strides = array<i32>} : memref<4x512xbf16, #tpu.memory_space<vmem>>, vector<4x16xbf16>,
    %c0_43 = arith.constant 0 : index
    %c0_44 = arith.constant 0 : index
    %c224 = arith.constant 224 : index
    %59 = vector.load %arg1[%c0_43, %c0_44, %c224] : memref<1x4x256xf32, #tpu.memory_space<vmem>>, vector<1x4x16xf32>
    %60 = vector.shape_cast %59 : vector<1x4x16xf32> to vector<4x16xf32>
    %61 = arith.truncf %60 : vector<4x16xf32> to vector<4x16xbf16>
    %c0_45 = arith.constant 0 : index
    %c399 = arith.constant 399 : index
    %62 = vector.load %arg11[%c0_45, %c399] : memref<4x512xbf16, #tpu.memory_space<vmem>>, vector<4x16xbf16>
    tpu.vector_store %arg11[%c0_45, %c399], %61 {strides = array<i32>} : memref<4x512xbf16, #tpu.memory_space<vmem>>, vector<4x16xbf16>,
    %c0_46 = arith.constant 0 : index
    %c0_47 = arith.constant 0 : index
    %c240 = arith.constant 240 : index
    %63 = vector.load %arg1[%c0_46, %c0_47, %c240] : memref<1x4x256xf32, #tpu.memory_space<vmem>>, vector<1x4x16xf32>
    %64 = vector.shape_cast %63 : vector<1x4x16xf32> to vector<4x16xf32>
    %65 = arith.truncf %64 : vector<4x16xf32> to vector<4x16xbf16>
    %c0_48 = arith.constant 0 : index
    %c417 = arith.constant 417 : index
    %66 = vector.load %arg11[%c0_48, %c417] : memref<4x512xbf16, #tpu.memory_space<vmem>>, vector<4x16xbf16>
    tpu.vector_store %arg11[%c0_48, %c417], %65 {strides = array<i32>} : memref<4x512xbf16, #tpu.memory_space<vmem>>, vector<4x16xbf16>,
    %c0_49 = arith.constant 0 : index
    %c0_50 = arith.constant 0 : index
    %67 = vector.load %arg8[%c0_49, %c0_50] : memref<1x324xf32, #tpu.memory_space<vmem>>, vector<1x324xf32>
    %cst = arith.constant 0.000000e+00 : f32
    %68 = vector.broadcast %cst : f32 to vector<1x324xf32>
    %69 = arith.cmpf ogt, %67, %68 : vector<1x324xf32>
    %c0_51 = arith.constant 0 : index
    %c109 = arith.constant 109 : index
    %70 = vector.load %arg11[%c0_51, %c109] : memref<4x512xbf16, #tpu.memory_space<vmem>>, vector<4x324xbf16>
    %c0_52 = arith.constant 0 : index
    %c0_53 = arith.constant 0 : index
    %71 = vector.load %arg13[%c0_52, %c0_53] : memref<36x324xbf16, #tpu.memory_space<vmem>>, vector<4x324xbf16>
    tpu.vector_store %arg13[%c0_52, %c0_53], %70 {strides = array<i32>} : memref<36x324xbf16, #tpu.memory_space<vmem>>, vector<4x324xbf16>,
    %c0_54 = arith.constant 0 : index
    %c110 = arith.constant 110 : index
    %72 = vector.load %arg11[%c0_54, %c110] : memref<4x512xbf16, #tpu.memory_space<vmem>>, vector<4x324xbf16>
    %c4 = arith.constant 4 : index
    %c0_55 = arith.constant 0 : index
    %73 = vector.load %arg13[%c4, %c0_55] : memref<36x324xbf16, #tpu.memory_space<vmem>>, vector<4x324xbf16>
    tpu.vector_store %arg13[%c4, %c0_55], %72 {strides = array<i32>} : memref<36x324xbf16, #tpu.memory_space<vmem>>, vector<4x324xbf16>,
    %c0_56 = arith.constant 0 : index
    %c111 = arith.constant 111 : index
    %74 = vector.load %arg11[%c0_56, %c111] : memref<4x512xbf16, #tpu.memory_space<vmem>>, vector<4x324xbf16>
    %c8 = arith.constant 8 : index
    %c0_57 = arith.constant 0 : index
    %75 = vector.load %arg13[%c8, %c0_57] : memref<36x324xbf16, #tpu.memory_space<vmem>>, vector<4x324xbf16>
    tpu.vector_store %arg13[%c8, %c0_57], %74 {strides = array<i32>} : memref<36x324xbf16, #tpu.memory_space<vmem>>, vector<4x324xbf16>,
    %c0_58 = arith.constant 0 : index
    %c127 = arith.constant 127 : index
    %76 = vector.load %arg11[%c0_58, %c127] : memref<4x512xbf16, #tpu.memory_space<vmem>>, vector<4x324xbf16>
    %c12 = arith.constant 12 : index
    %c0_59 = arith.constant 0 : index
    %77 = vector.load %arg13[%c12, %c0_59] : memref<36x324xbf16, #tpu.memory_space<vmem>>, vector<4x324xbf16>
    tpu.vector_store %arg13[%c12, %c0_59], %76 {strides = array<i32>} : memref<36x324xbf16, #tpu.memory_space<vmem>>, vector<4x324xbf16>,
    %c0_60 = arith.constant 0 : index
    %c128_61 = arith.constant 128 : index
    %78 = vector.load %arg11[%c0_60, %c128_61] : memref<4x512xbf16, #tpu.memory_space<vmem>>, vector<4x324xbf16>
    %c16_62 = arith.constant 16 : index
    %c0_63 = arith.constant 0 : index
    %79 = vector.load %arg13[%c16_62, %c0_63] : memref<36x324xbf16, #tpu.memory_space<vmem>>, vector<4x324xbf16>
    tpu.vector_store %arg13[%c16_62, %c0_63], %78 {strides = array<i32>} : memref<36x324xbf16, #tpu.memory_space<vmem>>, vector<4x324xbf16>,
    %c0_64 = arith.constant 0 : index
    %c129 = arith.constant 129 : index
    %80 = vector.load %arg11[%c0_64, %c129] : memref<4x512xbf16, #tpu.memory_space<vmem>>, vector<4x324xbf16>
    %c20 = arith.constant 20 : index
    %c0_65 = arith.constant 0 : index
    %81 = vector.load %arg13[%c20, %c0_65] : memref<36x324xbf16, #tpu.memory_space<vmem>>, vector<4x324xbf16>
    tpu.vector_store %arg13[%c20, %c0_65], %80 {strides = array<i32>} : memref<36x324xbf16, #tpu.memory_space<vmem>>, vector<4x324xbf16>,
    %c0_66 = arith.constant 0 : index
    %c145 = arith.constant 145 : index
    %82 = vector.load %arg11[%c0_66, %c145] : memref<4x512xbf16, #tpu.memory_space<vmem>>, vector<4x324xbf16>
    %c24 = arith.constant 24 : index
    %c0_67 = arith.constant 0 : index
    %83 = vector.load %arg13[%c24, %c0_67] : memref<36x324xbf16, #tpu.memory_space<vmem>>, vector<4x324xbf16>
    tpu.vector_store %arg13[%c24, %c0_67], %82 {strides = array<i32>} : memref<36x324xbf16, #tpu.memory_space<vmem>>, vector<4x324xbf16>,
    %c0_68 = arith.constant 0 : index
    %c146 = arith.constant 146 : index
    %84 = vector.load %arg11[%c0_68, %c146] : memref<4x512xbf16, #tpu.memory_space<vmem>>, vector<4x324xbf16>
    %c28 = arith.constant 28 : index
    %c0_69 = arith.constant 0 : index
    %85 = vector.load %arg13[%c28, %c0_69] : memref<36x324xbf16, #tpu.memory_space<vmem>>, vector<4x324xbf16>
    tpu.vector_store %arg13[%c28, %c0_69], %84 {strides = array<i32>} : memref<36x324xbf16, #tpu.memory_space<vmem>>, vector<4x324xbf16>,
    %c0_70 = arith.constant 0 : index
    %c147_71 = arith.constant 147 : index
    %86 = vector.load %arg11[%c0_70, %c147_71] : memref<4x512xbf16, #tpu.memory_space<vmem>>, vector<4x324xbf16>
    %c32_72 = arith.constant 32 : index
    %c0_73 = arith.constant 0 : index
    %87 = vector.load %arg13[%c32_72, %c0_73] : memref<36x324xbf16, #tpu.memory_space<vmem>>, vector<4x324xbf16>
    tpu.vector_store %arg13[%c32_72, %c0_73], %86 {strides = array<i32>} : memref<36x324xbf16, #tpu.memory_space<vmem>>, vector<4x324xbf16>,
    %c0_74 = arith.constant 0 : index
    %c0_75 = arith.constant 0 : index
    %88 = vector.load %arg2[%c0_74, %c0_75] : memref<4x36xbf16, #tpu.memory_space<vmem>>, vector<4x36xbf16>
    %c0_76 = arith.constant 0 : index
    %c0_77 = arith.constant 0 : index
    %89 = vector.load %arg13[%c0_76, %c0_77] : memref<36x324xbf16, #tpu.memory_space<vmem>>, vector<36x324xbf16>
    %cst_78 = arith.constant dense<0.000000e+00> : vector<4x324xf32>
    %90 = tpu.matmul %88, %89, %cst_78 {dimension_numbers = #tpu.dot_dimension_numbers<[1], [0], [0], [1], [0, 0, 1, 1], [], []>} : vector<4x36xbf16>, vector<36x324xbf16>, vector<4x324xf32> -> vector<4x324xf32>
    %c0_79 = arith.constant 0 : index
    %c0_80 = arith.constant 0 : index
    %91 = vector.load %arg3[%c0_79, %c0_80] : memref<4x1xf32, #tpu.memory_space<vmem>>, vector<4x1xf32>
    %92 = vector.broadcast %91 : vector<4x1xf32> to vector<4x324xf32>
    %93 = arith.addf %90, %92 : vector<4x324xf32>
    %cst_81 = arith.constant 0.000000e+00 : f32
    %94 = vector.broadcast %cst_81 : f32 to vector<4x324xf32>
    %95 = arith.cmpf ogt, %93, %94 : vector<4x324xf32>
    %cst_82 = arith.constant 2.000000e-01 : f32
    %96 = vector.broadcast %cst_82 : f32 to vector<4x324xf32>
    %97 = arith.mulf %96, %93 : vector<4x324xf32>
    %98 = arith.select %95, %93, %97 : vector<4x324xi1>, vector<4x324xf32>
    %cst_83 = arith.constant 0.000000e+00 : f32
    %99 = vector.shape_cast %69 : vector<1x324xi1> to vector<1x324xi1>
    %100 = vector.broadcast %99 : vector<1x324xi1> to vector<4x324xi1>
    %101 = vector.broadcast %cst_83 : f32 to vector<4x324xf32>
    %102 = arith.select %100, %98, %101 : vector<4x324xi1>, vector<4x324xf32>
    %103 = arith.truncf %102 : vector<4x324xf32> to vector<4x324xbf16>
    %c0_84 = arith.constant 0 : index
    %c128_85 = arith.constant 128 : index
    %104 = vector.load %arg12[%c0_84, %c128_85] : memref<4x512xbf16, #tpu.memory_space<vmem>>, vector<4x324xbf16>
    tpu.vector_store %arg12[%c0_84, %c128_85], %103 {strides = array<i32>} : memref<4x512xbf16, #tpu.memory_space<vmem>>, vector<4x324xbf16>,
    %c0_86 = arith.constant 0 : index
    %c109_87 = arith.constant 109 : index
    %105 = vector.load %arg12[%c0_86, %c109_87] : memref<4x512xbf16, #tpu.memory_space<vmem>>, vector<4x324xbf16>
    %c0_88 = arith.constant 0 : index
    %c0_89 = arith.constant 0 : index
    %106 = vector.load %arg13[%c0_88, %c0_89] : memref<36x324xbf16, #tpu.memory_space<vmem>>, vector<4x324xbf16>
    tpu.vector_store %arg13[%c0_88, %c0_89], %105 {strides = array<i32>} : memref<36x324xbf16, #tpu.memory_space<vmem>>, vector<4x324xbf16>,
    %c0_90 = arith.constant 0 : index
    %c110_91 = arith.constant 110 : index
    %107 = vector.load %arg12[%c0_90, %c110_91] : memref<4x512xbf16, #tpu.memory_space<vmem>>, vector<4x324xbf16>
    %c4_92 = arith.constant 4 : index
    %c0_93 = arith.constant 0 : index
    %108 = vector.load %arg13[%c4_92, %c0_93] : memref<36x324xbf16, #tpu.memory_space<vmem>>, vector<4x324xbf16>
    tpu.vector_store %arg13[%c4_92, %c0_93], %107 {strides = array<i32>} : memref<36x324xbf16, #tpu.memory_space<vmem>>, vector<4x324xbf16>,
    %c0_94 = arith.constant 0 : index
    %c111_95 = arith.constant 111 : index
    %109 = vector.load %arg12[%c0_94, %c111_95] : memref<4x512xbf16, #tpu.memory_space<vmem>>, vector<4x324xbf16>
    %c8_96 = arith.constant 8 : index
    %c0_97 = arith.constant 0 : index
    %110 = vector.load %arg13[%c8_96, %c0_97] : memref<36x324xbf16, #tpu.memory_space<vmem>>, vector<4x324xbf16>
    tpu.vector_store %arg13[%c8_96, %c0_97], %109 {strides = array<i32>} : memref<36x324xbf16, #tpu.memory_space<vmem>>, vector<4x324xbf16>,
    %c0_98 = arith.constant 0 : index
    %c127_99 = arith.constant 127 : index
    %111 = vector.load %arg12[%c0_98, %c127_99] : memref<4x512xbf16, #tpu.memory_space<vmem>>, vector<4x324xbf16>
    %c12_100 = arith.constant 12 : index
    %c0_101 = arith.constant 0 : index
    %112 = vector.load %arg13[%c12_100, %c0_101] : memref<36x324xbf16, #tpu.memory_space<vmem>>, vector<4x324xbf16>
    tpu.vector_store %arg13[%c12_100, %c0_101], %111 {strides = array<i32>} : memref<36x324xbf16, #tpu.memory_space<vmem>>, vector<4x324xbf16>,
    %c0_102 = arith.constant 0 : index
    %c128_103 = arith.constant 128 : index
    %113 = vector.load %arg12[%c0_102, %c128_103] : memref<4x512xbf16, #tpu.memory_space<vmem>>, vector<4x324xbf16>
    %c16_104 = arith.constant 16 : index
    %c0_105 = arith.constant 0 : index
    %114 = vector.load %arg13[%c16_104, %c0_105] : memref<36x324xbf16, #tpu.memory_space<vmem>>, vector<4x324xbf16>
    tpu.vector_store %arg13[%c16_104, %c0_105], %113 {strides = array<i32>} : memref<36x324xbf16, #tpu.memory_space<vmem>>, vector<4x324xbf16>,
    %c0_106 = arith.constant 0 : index
    %c129_107 = arith.constant 129 : index
    %115 = vector.load %arg12[%c0_106, %c129_107] : memref<4x512xbf16, #tpu.memory_space<vmem>>, vector<4x324xbf16>
    %c20_108 = arith.constant 20 : index
    %c0_109 = arith.constant 0 : index
    %116 = vector.load %arg13[%c20_108, %c0_109] : memref<36x324xbf16, #tpu.memory_space<vmem>>, vector<4x324xbf16>
    tpu.vector_store %arg13[%c20_108, %c0_109], %115 {strides = array<i32>} : memref<36x324xbf16, #tpu.memory_space<vmem>>, vector<4x324xbf16>,
    %c0_110 = arith.constant 0 : index
    %c145_111 = arith.constant 145 : index
    %117 = vector.load %arg12[%c0_110, %c145_111] : memref<4x512xbf16, #tpu.memory_space<vmem>>, vector<4x324xbf16>
    %c24_112 = arith.constant 24 : index
    %c0_113 = arith.constant 0 : index
    %118 = vector.load %arg13[%c24_112, %c0_113] : memref<36x324xbf16, #tpu.memory_space<vmem>>, vector<4x324xbf16>
    tpu.vector_store %arg13[%c24_112, %c0_113], %117 {strides = array<i32>} : memref<36x324xbf16, #tpu.memory_space<vmem>>, vector<4x324xbf16>,
    %c0_114 = arith.constant 0 : index
    %c146_115 = arith.constant 146 : index
    %119 = vector.load %arg12[%c0_114, %c146_115] : memref<4x512xbf16, #tpu.memory_space<vmem>>, vector<4x324xbf16>
    %c28_116 = arith.constant 28 : index
    %c0_117 = arith.constant 0 : index
    %120 = vector.load %arg13[%c28_116, %c0_117] : memref<36x324xbf16, #tpu.memory_space<vmem>>, vector<4x324xbf16>
    tpu.vector_store %arg13[%c28_116, %c0_117], %119 {strides = array<i32>} : memref<36x324xbf16, #tpu.memory_space<vmem>>, vector<4x324xbf16>,
    %c0_118 = arith.constant 0 : index
    %c147_119 = arith.constant 147 : index
    %121 = vector.load %arg12[%c0_118, %c147_119] : memref<4x512xbf16, #tpu.memory_space<vmem>>, vector<4x324xbf16>
    %c32_120 = arith.constant 32 : index
    %c0_121 = arith.constant 0 : index
    %122 = vector.load %arg13[%c32_120, %c0_121] : memref<36x324xbf16, #tpu.memory_space<vmem>>, vector<4x324xbf16>
    tpu.vector_store %arg13[%c32_120, %c0_121], %121 {strides = array<i32>} : memref<36x324xbf16, #tpu.memory_space<vmem>>, vector<4x324xbf16>,
    %c0_122 = arith.constant 0 : index
    %c0_123 = arith.constant 0 : index
    %123 = vector.load %arg4[%c0_122, %c0_123] : memref<8x36xbf16, #tpu.memory_space<vmem>>, vector<8x36xbf16>
    %c0_124 = arith.constant 0 : index
    %c0_125 = arith.constant 0 : index
    %124 = vector.load %arg13[%c0_124, %c0_125] : memref<36x324xbf16, #tpu.memory_space<vmem>>, vector<36x324xbf16>
    %cst_126 = arith.constant dense<0.000000e+00> : vector<8x324xf32>
    %125 = tpu.matmul %123, %124, %cst_126 {dimension_numbers = #tpu.dot_dimension_numbers<[1], [0], [0], [1], [0, 0, 1, 1], [], []>} : vector<8x36xbf16>, vector<36x324xbf16>, vector<8x324xf32> -> vector<8x324xf32>
    %c0_127 = arith.constant 0 : index
    %c0_128 = arith.constant 0 : index
    %126 = vector.load %arg5[%c0_127, %c0_128] : memref<8x1xf32, #tpu.memory_space<vmem>>, vector<8x1xf32>
    %127 = vector.broadcast %126 : vector<8x1xf32> to vector<8x324xf32>
    %128 = arith.addf %125, %127 : vector<8x324xf32>
    %cst_129 = arith.constant 0.000000e+00 : f32
    %129 = vector.broadcast %cst_129 : f32 to vector<8x324xf32>
    %130 = arith.cmpf ogt, %128, %129 : vector<8x324xf32>
    %cst_130 = arith.constant 2.000000e-01 : f32
    %131 = vector.broadcast %cst_130 : f32 to vector<8x324xf32>
    %132 = arith.mulf %131, %128 : vector<8x324xf32>
    %133 = arith.select %130, %128, %132 : vector<8x324xi1>, vector<8x324xf32>
    %c0_131 = arith.constant 0 : index
    %c0_132 = arith.constant 0 : index
    %134 = vector.load %arg6[%c0_131, %c0_132] : memref<8x4xbf16, #tpu.memory_space<vmem>>, vector<8x4xbf16>
    %c0_133 = arith.constant 0 : index
    %c128_134 = arith.constant 128 : index
    %135 = vector.load %arg11[%c0_133, %c128_134] : memref<4x512xbf16, #tpu.memory_space<vmem>>, vector<4x324xbf16>
    %cst_135 = arith.constant dense<0.000000e+00> : vector<8x324xf32>
    %136 = tpu.matmul %134, %135, %cst_135 {dimension_numbers = #tpu.dot_dimension_numbers<[1], [0], [0], [1], [0, 0, 1, 1], [], []>} : vector<8x4xbf16>, vector<4x324xbf16>, vector<8x324xf32> -> vector<8x324xf32>
    %137 = arith.addf %133, %136 : vector<8x324xf32>
    %138 = vector.extract_strided_slice %137 {offsets = [0, 0], sizes = [8, 306], strides = [1, 1]} : vector<8x324xf32> to vector<8x306xf32>
    %139 = vector.extract_strided_slice %137 {offsets = [0, 18], sizes = [8, 306], strides = [1, 1]} : vector<8x324xf32> to vector<8x306xf32>
    %140 = arith.addf %138, %139 : vector<8x306xf32>
    %c0_136 = arith.constant 0 : index
    %c0_137 = arith.constant 0 : index
    %141 = vector.load %arg9[%c0_136, %c0_137] : memref<16x8xbf16, #tpu.memory_space<vmem>>, vector<16x8xbf16>
    %142 = vector.extract_strided_slice %140 {offsets = [0, 19], sizes = [8, 16], strides = [1, 1]} : vector<8x306xf32> to vector<8x16xf32>
    %143 = arith.truncf %142 : vector<8x16xf32> to vector<8x16xbf16>
    %cst_138 = arith.constant dense<0.000000e+00> : vector<8x8xf32>
    %144 = tpu.matmul %143, %141, %cst_138 {dimension_numbers = #tpu.dot_dimension_numbers<[1], [0], [0], [1], [0, 0, 1, 1], [], []>} : vector<8x16xbf16>, vector<16x8xbf16>, vector<8x8xf32> -> vector<8x8xf32>
    %c0_139 = arith.constant 0 : index
    %c0_140 = arith.constant 0 : index
    %145 = vector.load %arg7[%c0_139, %c0_140] : memref<8x1xf32, #tpu.memory_space<vmem>>, vector<8x1xf32>
    %146 = vector.broadcast %145 : vector<8x1xf32> to vector<8x8xf32>
    %147 = arith.addf %144, %146 : vector<8x8xf32>
    %cst_141 = arith.constant 0.707106769 : f32
    %148 = vector.broadcast %cst_141 : f32 to vector<8x8xf32>
    %149 = arith.mulf %147, %148 : vector<8x8xf32>
    %150 = arith.truncf %149 : vector<8x8xf32> to vector<8x8xbf16>
    %c0_142 = arith.constant 0 : index
    %c0_143 = arith.constant 0 : index
    %c0_144 = arith.constant 0 : index
    %151 = vector.load %arg10[%c0_142, %c0_143, %c0_144] : memref<1x8x64xbf16, #tpu.memory_space<vmem>>, vector<1x8x8xbf16>
    %152 = vector.shape_cast %151 : vector<1x8x8xbf16> to vector<8x8xbf16>
    %153 = vector.shape_cast %150 : vector<8x8xbf16> to vector<1x8x8xbf16>
    tpu.vector_store %arg10[%c0_142, %c0_143, %c0_144], %153 {strides = array<i32>} : memref<1x8x64xbf16, #tpu.memory_space<vmem>>, vector<1x8x8xbf16>,
    %154 = vector.extract_strided_slice %140 {offsets = [0, 55], sizes = [8, 16], strides = [1, 1]} : vector<8x306xf32> to vector<8x16xf32>
    %155 = arith.truncf %154 : vector<8x16xf32> to vector<8x16xbf16>
    %cst_145 = arith.constant dense<0.000000e+00> : vector<8x8xf32>
    %156 = tpu.matmul %155, %141, %cst_145 {dimension_numbers = #tpu.dot_dimension_numbers<[1], [0], [0], [1], [0, 0, 1, 1], [], []>} : vector<8x16xbf16>, vector<16x8xbf16>, vector<8x8xf32> -> vector<8x8xf32>
    %c0_146 = arith.constant 0 : index
    %c0_147 = arith.constant 0 : index
    %157 = vector.load %arg7[%c0_146, %c0_147] : memref<8x1xf32, #tpu.memory_space<vmem>>, vector<8x1xf32>
    %158 = vector.broadcast %157 : vector<8x1xf32> to vector<8x8xf32>
    %159 = arith.addf %156, %158 : vector<8x8xf32>
    %cst_148 = arith.constant 0.707106769 : f32
    %160 = vector.broadcast %cst_148 : f32 to vector<8x8xf32>
    %161 = arith.mulf %159, %160 : vector<8x8xf32>
    %162 = arith.truncf %161 : vector<8x8xf32> to vector<8x8xbf16>
    %c0_149 = arith.constant 0 : index
    %c0_150 = arith.constant 0 : index
    %c8_151 = arith.constant 8 : index
    %163 = vector.load %arg10[%c0_149, %c0_150, %c8_151] : memref<1x8x64xbf16, #tpu.memory_space<vmem>>, vector<1x8x8xbf16>
    %164 = vector.shape_cast %163 : vector<1x8x8xbf16> to vector<8x8xbf16>
    %165 = vector.shape_cast %162 : vector<8x8xbf16> to vector<1x8x8xbf16>
    tpu.vector_store %arg10[%c0_149, %c0_150, %c8_151], %165 {strides = array<i32>} : memref<1x8x64xbf16, #tpu.memory_space<vmem>>, vector<1x8x8xbf16>,
    %166 = vector.extract_strided_slice %140 {offsets = [0, 91], sizes = [8, 16], strides = [1, 1]} : vector<8x306xf32> to vector<8x16xf32>
    %167 = arith.truncf %166 : vector<8x16xf32> to vector<8x16xbf16>
    %cst_152 = arith.constant dense<0.000000e+00> : vector<8x8xf32>
    %168 = tpu.matmul %167, %141, %cst_152 {dimension_numbers = #tpu.dot_dimension_numbers<[1], [0], [0], [1], [0, 0, 1, 1], [], []>} : vector<8x16xbf16>, vector<16x8xbf16>, vector<8x8xf32> -> vector<8x8xf32>
    %c0_153 = arith.constant 0 : index
    %c0_154 = arith.constant 0 : index
    %169 = vector.load %arg7[%c0_153, %c0_154] : memref<8x1xf32, #tpu.memory_space<vmem>>, vector<8x1xf32>
    %170 = vector.broadcast %169 : vector<8x1xf32> to vector<8x8xf32>
    %171 = arith.addf %168, %170 : vector<8x8xf32>
    %cst_155 = arith.constant 0.707106769 : f32
    %172 = vector.broadcast %cst_155 : f32 to vector<8x8xf32>
    %173 = arith.mulf %171, %172 : vector<8x8xf32>
    %174 = arith.truncf %173 : vector<8x8xf32> to vector<8x8xbf16>
    %c0_156 = arith.constant 0 : index
    %c0_157 = arith.constant 0 : index
    %c16_158 = arith.constant 16 : index
    %175 = vector.load %arg10[%c0_156, %c0_157, %c16_158] : memref<1x8x64xbf16, #tpu.memory_space<vmem>>, vector<1x8x8xbf16>
    %176 = vector.shape_cast %175 : vector<1x8x8xbf16> to vector<8x8xbf16>
    %177 = vector.shape_cast %174 : vector<8x8xbf16> to vector<1x8x8xbf16>
    tpu.vector_store %arg10[%c0_156, %c0_157, %c16_158], %177 {strides = array<i32>} : memref<1x8x64xbf16, #tpu.memory_space<vmem>>, vector<1x8x8xbf16>,
    %178 = vector.extract_strided_slice %140 {offsets = [0, 127], sizes = [8, 16], strides = [1, 1]} : vector<8x306xf32> to vector<8x16xf32>
    %179 = arith.truncf %178 : vector<8x16xf32> to vector<8x16xbf16>
    %cst_159 = arith.constant dense<0.000000e+00> : vector<8x8xf32>
    %180 = tpu.matmul %179, %141, %cst_159 {dimension_numbers = #tpu.dot_dimension_numbers<[1], [0], [0], [1], [0, 0, 1, 1], [], []>} : vector<8x16xbf16>, vector<16x8xbf16>, vector<8x8xf32> -> vector<8x8xf32>
    %c0_160 = arith.constant 0 : index
    %c0_161 = arith.constant 0 : index
    %181 = vector.load %arg7[%c0_160, %c0_161] : memref<8x1xf32, #tpu.memory_space<vmem>>, vector<8x1xf32>
    %182 = vector.broadcast %181 : vector<8x1xf32> to vector<8x8xf32>
    %183 = arith.addf %180, %182 : vector<8x8xf32>
    %cst_162 = arith.constant 0.707106769 : f32
    %184 = vector.broadcast %cst_162 : f32 to vector<8x8xf32>
    %185 = arith.mulf %183, %184 : vector<8x8xf32>
    %186 = arith.truncf %185 : vector<8x8xf32> to vector<8x8xbf16>
    %c0_163 = arith.constant 0 : index
    %c0_164 = arith.constant 0 : index
    %c24_165 = arith.constant 24 : index
    %187 = vector.load %arg10[%c0_163, %c0_164, %c24_165] : memref<1x8x64xbf16, #tpu.memory_space<vmem>>, vector<1x8x8xbf16>
    %188 = vector.shape_cast %187 : vector<1x8x8xbf16> to vector<8x8xbf16>
    %189 = vector.shape_cast %186 : vector<8x8xbf16> to vector<1x8x8xbf16>
    tpu.vector_store %arg10[%c0_163, %c0_164, %c24_165], %189 {strides = array<i32>} : memref<1x8x64xbf16, #tpu.memory_space<vmem>>, vector<1x8x8xbf16>,
    %190 = vector.extract_strided_slice %140 {offsets = [0, 163], sizes = [8, 16], strides = [1, 1]} : vector<8x306xf32> to vector<8x16xf32>
    %191 = arith.truncf %190 : vector<8x16xf32> to vector<8x16xbf16>
    %cst_166 = arith.constant dense<0.000000e+00> : vector<8x8xf32>
    %192 = tpu.matmul %191, %141, %cst_166 {dimension_numbers = #tpu.dot_dimension_numbers<[1], [0], [0], [1], [0, 0, 1, 1], [], []>} : vector<8x16xbf16>, vector<16x8xbf16>, vector<8x8xf32> -> vector<8x8xf32>
    %c0_167 = arith.constant 0 : index
    %c0_168 = arith.constant 0 : index
    %193 = vector.load %arg7[%c0_167, %c0_168] : memref<8x1xf32, #tpu.memory_space<vmem>>, vector<8x1xf32>
    %194 = vector.broadcast %193 : vector<8x1xf32> to vector<8x8xf32>
    %195 = arith.addf %192, %194 : vector<8x8xf32>
    %cst_169 = arith.constant 0.707106769 : f32
    %196 = vector.broadcast %cst_169 : f32 to vector<8x8xf32>
    %197 = arith.mulf %195, %196 : vector<8x8xf32>
    %198 = arith.truncf %197 : vector<8x8xf32> to vector<8x8xbf16>
    %c0_170 = arith.constant 0 : index
    %c0_171 = arith.constant 0 : index
    %c32_172 = arith.constant 32 : index
    %199 = vector.load %arg10[%c0_170, %c0_171, %c32_172] : memref<1x8x64xbf16, #tpu.memory_space<vmem>>, vector<1x8x8xbf16>
    %200 = vector.shape_cast %199 : vector<1x8x8xbf16> to vector<8x8xbf16>
    %201 = vector.shape_cast %198 : vector<8x8xbf16> to vector<1x8x8xbf16>
    tpu.vector_store %arg10[%c0_170, %c0_171, %c32_172], %201 {strides = array<i32>} : memref<1x8x64xbf16, #tpu.memory_space<vmem>>, vector<1x8x8xbf16>,
    %202 = vector.extract_strided_slice %140 {offsets = [0, 199], sizes = [8, 16], strides = [1, 1]} : vector<8x306xf32> to vector<8x16xf32>
    %203 = arith.truncf %202 : vector<8x16xf32> to vector<8x16xbf16>
    %cst_173 = arith.constant dense<0.000000e+00> : vector<8x8xf32>
    %204 = tpu.matmul %203, %141, %cst_173 {dimension_numbers = #tpu.dot_dimension_numbers<[1], [0], [0], [1], [0, 0, 1, 1], [], []>} : vector<8x16xbf16>, vector<16x8xbf16>, vector<8x8xf32> -> vector<8x8xf32>
    %c0_174 = arith.constant 0 : index
    %c0_175 = arith.constant 0 : index
    %205 = vector.load %arg7[%c0_174, %c0_175] : memref<8x1xf32, #tpu.memory_space<vmem>>, vector<8x1xf32>
    %206 = vector.broadcast %205 : vector<8x1xf32> to vector<8x8xf32>
    %207 = arith.addf %204, %206 : vector<8x8xf32>
    %cst_176 = arith.constant 0.707106769 : f32
    %208 = vector.broadcast %cst_176 : f32 to vector<8x8xf32>
    %209 = arith.mulf %207, %208 : vector<8x8xf32>
    %210 = arith.truncf %209 : vector<8x8xf32> to vector<8x8xbf16>
    %c0_177 = arith.constant 0 : index
    %c0_178 = arith.constant 0 : index
    %c40 = arith.constant 40 : index
    %211 = vector.load %arg10[%c0_177, %c0_178, %c40] : memref<1x8x64xbf16, #tpu.memory_space<vmem>>, vector<1x8x8xbf16>
    %212 = vector.shape_cast %211 : vector<1x8x8xbf16> to vector<8x8xbf16>
    %213 = vector.shape_cast %210 : vector<8x8xbf16> to vector<1x8x8xbf16>
    tpu.vector_store %arg10[%c0_177, %c0_178, %c40], %213 {strides = array<i32>} : memref<1x8x64xbf16, #tpu.memory_space<vmem>>, vector<1x8x8xbf16>,
    %214 = vector.extract_strided_slice %140 {offsets = [0, 235], sizes = [8, 16], strides = [1, 1]} : vector<8x306xf32> to vector<8x16xf32>
    %215 = arith.truncf %214 : vector<8x16xf32> to vector<8x16xbf16>
    %cst_179 = arith.constant dense<0.000000e+00> : vector<8x8xf32>
    %216 = tpu.matmul %215, %141, %cst_179 {dimension_numbers = #tpu.dot_dimension_numbers<[1], [0], [0], [1], [0, 0, 1, 1], [], []>} : vector<8x16xbf16>, vector<16x8xbf16>, vector<8x8xf32> -> vector<8x8xf32>
    %c0_180 = arith.constant 0 : index
    %c0_181 = arith.constant 0 : index
    %217 = vector.load %arg7[%c0_180, %c0_181] : memref<8x1xf32, #tpu.memory_space<vmem>>, vector<8x1xf32>
    %218 = vector.broadcast %217 : vector<8x1xf32> to vector<8x8xf32>
    %219 = arith.addf %216, %218 : vector<8x8xf32>
    %cst_182 = arith.constant 0.707106769 : f32
    %220 = vector.broadcast %cst_182 : f32 to vector<8x8xf32>
    %221 = arith.mulf %219, %220 : vector<8x8xf32>
    %222 = arith.truncf %221 : vector<8x8xf32> to vector<8x8xbf16>
    %c0_183 = arith.constant 0 : index
    %c0_184 = arith.constant 0 : index
    %c48_185 = arith.constant 48 : index
    %223 = vector.load %arg10[%c0_183, %c0_184, %c48_185] : memref<1x8x64xbf16, #tpu.memory_space<vmem>>, vector<1x8x8xbf16>
    %224 = vector.shape_cast %223 : vector<1x8x8xbf16> to vector<8x8xbf16>
    %225 = vector.shape_cast %222 : vector<8x8xbf16> to vector<1x8x8xbf16>
    tpu.vector_store %arg10[%c0_183, %c0_184, %c48_185], %225 {strides = array<i32>} : memref<1x8x64xbf16, #tpu.memory_space<vmem>>, vector<1x8x8xbf16>,
    %226 = vector.extract_strided_slice %140 {offsets = [0, 271], sizes = [8, 16], strides = [1, 1]} : vector<8x306xf32> to vector<8x16xf32>
    %227 = arith.truncf %226 : vector<8x16xf32> to vector<8x16xbf16>
    %cst_186 = arith.constant dense<0.000000e+00> : vector<8x8xf32>
    %228 = tpu.matmul %227, %141, %cst_186 {dimension_numbers = #tpu.dot_dimension_numbers<[1], [0], [0], [1], [0, 0, 1, 1], [], []>} : vector<8x16xbf16>, vector<16x8xbf16>, vector<8x8xf32> -> vector<8x8xf32>
    %c0_187 = arith.constant 0 : index
    %c0_188 = arith.constant 0 : index
    %229 = vector.load %arg7[%c0_187, %c0_188] : memref<8x1xf32, #tpu.memory_space<vmem>>, vector<8x1xf32>
    %230 = vector.broadcast %229 : vector<8x1xf32> to vector<8x8xf32>
    %231 = arith.addf %228, %230 : vector<8x8xf32>
    %cst_189 = arith.constant 0.707106769 : f32
    %232 = vector.broadcast %cst_189 : f32 to vector<8x8xf32>
    %233 = arith.mulf %231, %232 : vector<8x8xf32>
    %234 = arith.truncf %233 : vector<8x8xf32> to vector<8x8xbf16>
    %c0_190 = arith.constant 0 : index
    %c0_191 = arith.constant 0 : index
    %c56 = arith.constant 56 : index
    %235 = vector.load %arg10[%c0_190, %c0_191, %c56] : memref<1x8x64xbf16, #tpu.memory_space<vmem>>, vector<1x8x8xbf16>
    %236 = vector.shape_cast %235 : vector<1x8x8xbf16> to vector<8x8xbf16>
    %237 = vector.shape_cast %234 : vector<8x8xbf16> to vector<1x8x8xbf16>
    tpu.vector_store %arg10[%c0_190, %c0_191, %c56], %237 {strides = array<i32>} : memref<1x8x64xbf16, #tpu.memory_space<vmem>>, vector<1x8x8xbf16>,
    return
  }
  func.func @transform_0(%arg0: i32) -> (i32, i32, i32) {
    %c0_i32 = arith.constant 0 : i32
    %c0_i32_0 = arith.constant 0 : i32
    %c0_i32_1 = arith.constant 0 : i32
    return %arg0, %c0_i32, %c0_i32_0 : i32, i32, i32
  }
  func.func @transform_1(%arg0: i32) -> (i32, i32) {
    %c0_i32 = arith.constant 0 : i32
    %c0_i32_0 = arith.constant 0 : i32
    %c0_i32_1 = arith.constant 0 : i32
    return %c0_i32, %c0_i32_0 : i32, i32
  }
  func.func @transform_2(%arg0: i32) -> (i32, i32) {
    %c0_i32 = arith.constant 0 : i32
    %c0_i32_0 = arith.constant 0 : i32
    %c0_i32_1 = arith.constant 0 : i32
    return %c0_i32, %c0_i32_0 : i32, i32
  }
  func.func @transform_3(%arg0: i32) -> (i32, i32) {
    %c0_i32 = arith.constant 0 : i32
    %c0_i32_0 = arith.constant 0 : i32
    %c0_i32_1 = arith.constant 0 : i32
    return %c0_i32, %c0_i32_0 : i32, i32
  }
  func.func @transform_4(%arg0: i32) -> (i32, i32) {
    %c0_i32 = arith.constant 0 : i32
    %c0_i32_0 = arith.constant 0 : i32
    %c0_i32_1 = arith.constant 0 : i32
    return %c0_i32, %c0_i32_0 : i32, i32
  }
  func.func @transform_5(%arg0: i32) -> (i32, i32) {
    %c0_i32 = arith.constant 0 : i32
    %c0_i32_0 = arith.constant 0 : i32
    %c0_i32_1 = arith.constant 0 : i32
    return %c0_i32, %c0_i32_0 : i32, i32
  }
  func.func @transform_6(%arg0: i32) -> (i32, i32) {
    %c0_i32 = arith.constant 0 : i32
    %c0_i32_0 = arith.constant 0 : i32
    %c0_i32_1 = arith.constant 0 : i32
    return %c0_i32, %c0_i32_0 : i32, i32
  }
  func.func @transform_7(%arg0: i32) -> (i32, i32) {
    %c0_i32 = arith.constant 0 : i32
    %c0_i32_0 = arith.constant 0 : i32
    %c0_i32_1 = arith.constant 0 : i32
    return %c0_i32, %c0_i32_0 : i32, i32
  }
  func.func @transform_8(%arg0: i32) -> (i32, i32) {
    %c0_i32 = arith.constant 0 : i32
    %c0_i32_0 = arith.constant 0 : i32
    %c0_i32_1 = arith.constant 0 : i32
    return %c0_i32, %c0_i32_0 : i32, i32
  }
  func.func @transform_9(%arg0: i32) -> (i32, i32, i32) {
    %c0_i32 = arith.constant 0 : i32
    %c0_i32_0 = arith.constant 0 : i32
    %c0_i32_1 = arith.constant 0 : i32
    return %arg0, %c0_i32, %c0_i32_0 : i32, i32, i32
  }
}

</mosaic_0001>

<llo_original>
// kernel: tpu_custom_call.1
$region0: #{tpu_custom_call.1}
  #allocation0 [shape = 'u32[]', space=smem, size = 0x4, offset = 0x4, fixed_abs, tag = 'smem constant byte address 0x4 - core index']
  #allocation1 [shape = 'u32[144,128]{1,0:T(1,128)}', space=vmem, size = 0x12000, scoped, tag = 'internal scratch']
  #allocation2 [shape = 'bf16[4,512]{1,0:T(4,128)(2,1)}', space=vmem, size = 0x1000, scoped, tag = 'scratch operand']
  #allocation3 [shape = 'bf16[4,512]{1,0:T(4,128)(2,1)}', space=vmem, size = 0x1000, scoped, tag = 'scratch operand']
  #allocation4 [shape = 'bf16[36,324]{1,0:T(8,128)(2,1)}', space=vmem, size = 0x7800, scoped, tag = 'scratch operand']
  %s0 = inlined_call_operand.vmem [shape: f32[2,4,256], index: 0, kind: input, shape index: {}]
  %s1 = inlined_call_operand.vmem [shape: bf16[4,36], index: 1, kind: input, shape index: {}]
  %s2 = inlined_call_operand.vmem [shape: f32[4,1], index: 2, kind: input, shape index: {}]
  %s3 = inlined_call_operand.vmem [shape: bf16[8,36], index: 3, kind: input, shape index: {}]
  %s4 = inlined_call_operand.vmem [shape: f32[8,1], index: 4, kind: input, shape index: {}]
  %s5 = inlined_call_operand.vmem [shape: bf16[8,4], index: 5, kind: input, shape index: {}]
  %s6 = inlined_call_operand.vmem [shape: f32[8,1], index: 6, kind: input, shape index: {}]
  %s7 = inlined_call_operand.vmem [shape: f32[1,324], index: 7, kind: input, shape index: {}]
  %s8 = inlined_call_operand.vmem [shape: bf16[16,8], index: 8, kind: input, shape index: {}]
  %s9 = inlined_call_operand.hbm [shape: bf16[2,8,64], index: 9, kind: output, shape index: {}]
  %s10 = sld [smem:[#allocation0]]
  $region73: #{tpu_custom_call.1} parent=0
    _
  %s12 = ssub.s32 1, %s10
  %s13 = scalar_select 0, %s12, %s10
  $region1: #{tpu_custom_call.1} parent=0
    #allocation5 [shape = 'u8[4096]{0}', space=vmem, size = 0x1000, scoped, tag = 'output window, operand 0']
    #allocation6 [shape = 's32[2]{0}', space=sflag, size = 0x8, scoped, tag = 'scoped memory for tpu_custom_call.1']
    %14 = vsyncpa [#allocation6], 0
    %s15 = scalar_lea.sflag [#allocation6], 1
    %16 = vsyncpa %s15, 0
    loop: start=0, step=1, limit=4
    $region2: #{tpu_custom_call.1} parent=1 // loop_pre_header
      _
    $region3: #{tpu_custom_call.1} parent=1 // loop_header
      %s18 = sphi 0, %s22
      %p19 = scmp.ge.s32.totalorder %s18, 4
      %s28 = sphi 0, %s30
      %s31 = sphi 0, %s28
      %s32 = sphi 0, %s31
      %s48 = sphi 0, %s32
      %s52 = sphi 0, %s52
      %s54 = sphi 0, %s52
      %s55 = sphi 0, %s54
      %s69 = sphi 0, %s55
      %s73 = sphi 0, %s73
      %s75 = sphi 0, %s73
      %s76 = sphi 0, %s75
      %s90 = sphi 0, %s76
      %s94 = sphi 0, %s94
      %s96 = sphi 0, %s94
      %s97 = sphi 0, %s96
      %s111 = sphi 0, %s97
      %s115 = sphi 0, %s115
      %s117 = sphi 0, %s115
      %s118 = sphi 0, %s117
      %s132 = sphi 0, %s118
      %s136 = sphi 0, %s136
      %s138 = sphi 0, %s136
      %s139 = sphi 0, %s138
      %s153 = sphi 0, %s139
      %s157 = sphi 0, %s157
      %s159 = sphi 0, %s157
      %s160 = sphi 0, %s159
      %s174 = sphi 0, %s160
      %s178 = sphi 0, %s178
      %s180 = sphi 0, %s178
      %s181 = sphi 0, %s180
      %s195 = sphi 0, %s181
      %s199 = sphi 0, %s199
      %s201 = sphi 0, %s199
      %s202 = sphi 0, %s201
      %s216 = sphi 0, %s202
      %s222 = sphi 0, %s224
      %s225 = sphi 0, %s222
      %s226 = sphi 0, %s225
      %s242 = sphi 0, %s226
    $region4: #{tpu_custom_call.1} parent=1 // loop_header_branch
      %21 = sbr.rel (%p19) target = $region8
    $region5: #{tpu_custom_call.1} parent=1 // loop_body
      %s23 = ssub.s32 %s18, 1
      %s24 = ssub.s32 %s18, 2
      %s25 = sadd.s32 %s18, 1
      %s26 = ssub.s32 %s18, %s25
      %p27 = scmp.eq.s32.totalorder %s26, 0
      %s29 = sadd.s32 %s28, 1
      %s30 = scalar_select %p27, %s28, %s29
      %p33 = pneg %p27
      %p34 = scmp.eq.s32.totalorder %s18, 1
      %p35 = por %p33, %p34
      %p36 = scmp.ne.s32.totalorder %s28, %s31
      %p37 = scmp.eq.s32.totalorder %s18, 0
      %p38 = por %p36, %p37
      %p39 = scmp.ne.s32.totalorder %s28, %s31
      %p40 = scmp.eq.s32.totalorder %s23, 1
      %p41 = por %p39, %p40
      %p42 = scmp.ne.s32.totalorder %s31, %s32
      %p43 = scmp.eq.s32.totalorder %s23, 0
      %p44 = por %p42, %p43
      %p45 = scmp.ne.s32.totalorder %s31, %s32
      %p46 = scmp.eq.s32.totalorder %s24, 1
      %p47 = por %p45, %p46
      %p49 = scmp.ne.s32.totalorder %s32, %s48
      %p50 = scmp.eq.s32.totalorder %s24, 0
      %p51 = por %p49, %p50
      %s53 = sadd.s32 %s52, 1
      %p56 = scmp.eq.s32.totalorder %s18, 1
      %p57 = scmp.ne.s32.totalorder %s52, %s54
      %p58 = scmp.eq.s32.totalorder %s18, 0
      %p59 = por %p57, %p58
      %p60 = scmp.ne.s32.totalorder %s52, %s54
      %p61 = scmp.eq.s32.totalorder %s23, 1
      %p62 = por %p60, %p61
      %p63 = scmp.ne.s32.totalorder %s54, %s55
      %p64 = scmp.eq.s32.totalorder %s23, 0
      %p65 = por %p63, %p64
      %p66 = scmp.ne.s32.totalorder %s54, %s55
      %p67 = scmp.eq.s32.totalorder %s24, 1
      %p68 = por %p66, %p67
      %p70 = scmp.ne.s32.totalorder %s55, %s69
      %p71 = scmp.eq.s32.totalorder %s24, 0
      %p72 = por %p70, %p71
      %s74 = sadd.s32 %s73, 1
      %p77 = scmp.eq.s32.totalorder %s18, 1
      %p78 = scmp.ne.s32.totalorder %s73, %s75
      %p79 = scmp.eq.s32.totalorder %s18, 0
      %p80 = por %p78, %p79
      %p81 = scmp.ne.s32.totalorder %s73, %s75
      %p82 = scmp.eq.s32.totalorder %s23, 1
      %p83 = por %p81, %p82
      %p84 = scmp.ne.s32.totalorder %s75, %s76
      %p85 = scmp.eq.s32.totalorder %s23, 0
      %p86 = por %p84, %p85
      %p87 = scmp.ne.s32.totalorder %s75, %s76
      %p88 = scmp.eq.s32.totalorder %s24, 1
      %p89 = por %p87, %p88
      %p91 = scmp.ne.s32.totalorder %s76, %s90
      %p92 = scmp.eq.s32.totalorder %s24, 0
      %p93 = por %p91, %p92
      %s95 = sadd.s32 %s94, 1
      %p98 = scmp.eq.s32.totalorder %s18, 1
      %p99 = scmp.ne.s32.totalorder %s94, %s96
      %p100 = scmp.eq.s32.totalorder %s18, 0
      %p101 = por %p99, %p100
      %p102 = scmp.ne.s32.totalorder %s94, %s96
      %p103 = scmp.eq.s32.totalorder %s23, 1
      %p104 = por %p102, %p103
      %p105 = scmp.ne.s32.totalorder %s96, %s97
      %p106 = scmp.eq.s32.totalorder %s23, 0
      %p107 = por %p105, %p106
      %p108 = scmp.ne.s32.totalorder %s96, %s97
      %p109 = scmp.eq.s32.totalorder %s24, 1
      %p110 = por %p108, %p109
      %p112 = scmp.ne.s32.totalorder %s97, %s111
      %p113 = scmp.eq.s32.totalorder %s24, 0
      %p114 = por %p112, %p113
      %s116 = sadd.s32 %s115, 1
      %p119 = scmp.eq.s32.totalorder %s18, 1
      %p120 = scmp.ne.s32.totalorder %s115, %s117
      %p121 = scmp.eq.s32.totalorder %s18, 0
      %p122 = por %p120, %p121
      %p123 = scmp.ne.s32.totalorder %s115, %s117
      %p124 = scmp.eq.s32.totalorder %s23, 1
      %p125 = por %p123, %p124
      %p126 = scmp.ne.s32.totalorder %s117, %s118
      %p127 = scmp.eq.s32.totalorder %s23, 0
      %p128 = por %p126, %p127
      %p129 = scmp.ne.s32.totalorder %s117, %s118
      %p130 = scmp.eq.s32.totalorder %s24, 1
      %p131 = por %p129, %p130
      %p133 = scmp.ne.s32.totalorder %s118, %s132
      %p134 = scmp.eq.s32.totalorder %s24, 0
      %p135 = por %p133, %p134
      %s137 = sadd.s32 %s136, 1
      %p140 = scmp.eq.s32.totalorder %s18, 1
      %p141 = scmp.ne.s32.totalorder %s136, %s138
      %p142 = scmp.eq.s32.totalorder %s18, 0
      %p143 = por %p141, %p142
      %p144 = scmp.ne.s32.totalorder %s136, %s138
      %p145 = scmp.eq.s32.totalorder %s23, 1
      %p146 = por %p144, %p145
      %p147 = scmp.ne.s32.totalorder %s138, %s139
      %p148 = scmp.eq.s32.totalorder %s23, 0
      %p149 = por %p147, %p148
      %p150 = scmp.ne.s32.totalorder %s138, %s139
      %p151 = scmp.eq.s32.totalorder %s24, 1
      %p152 = por %p150, %p151
      %p154 = scmp.ne.s32.totalorder %s139, %s153
      %p155 = scmp.eq.s32.totalorder %s24, 0
      %p156 = por %p154, %p155
      %s158 = sadd.s32 %s157, 1
      %p161 = scmp.eq.s32.totalorder %s18, 1
      %p162 = scmp.ne.s32.totalorder %s157, %s159
      %p163 = scmp.eq.s32.totalorder %s18, 0
      %p164 = por %p162, %p163
      %p165 = scmp.ne.s32.totalorder %s157, %s159
      %p166 = scmp.eq.s32.totalorder %s23, 1
      %p167 = por %p165, %p166
      %p168 = scmp.ne.s32.totalorder %s159, %s160
      %p169 = scmp.eq.s32.totalorder %s23, 0
      %p170 = por %p168, %p169
      %p171 = scmp.ne.s32.totalorder %s159, %s160
      %p172 = scmp.eq.s32.totalorder %s24, 1
      %p173 = por %p171, %p172
      %p175 = scmp.ne.s32.totalorder %s160, %s174
      %p176 = scmp.eq.s32.totalorder %s24, 0
      %p177 = por %p175, %p176
      %s179 = sadd.s32 %s178, 1
      %p182 = scmp.eq.s32.totalorder %s18, 1
      %p183 = scmp.ne.s32.totalorder %s178, %s180
      %p184 = scmp.eq.s32.totalorder %s18, 0
      %p185 = por %p183, %p184
      %p186 = scmp.ne.s32.totalorder %s178, %s180
      %p187 = scmp.eq.s32.totalorder %s23, 1
      %p188 = por %p186, %p187
      %p189 = scmp.ne.s32.totalorder %s180, %s181
      %p190 = scmp.eq.s32.totalorder %s23, 0
      %p191 = por %p189, %p190
      %p192 = scmp.ne.s32.totalorder %s180, %s181
      %p193 = scmp.eq.s32.totalorder %s24, 1
      %p194 = por %p192, %p193
      %p196 = scmp.ne.s32.totalorder %s181, %s195
      %p197 = scmp.eq.s32.totalorder %s24, 0
      %p198 = por %p196, %p197
      %s200 = sadd.s32 %s199, 1
      %p203 = scmp.eq.s32.totalorder %s18, 1
      %p204 = scmp.ne.s32.totalorder %s199, %s201
      %p205 = scmp.eq.s32.totalorder %s18, 0
      %p206 = por %p204, %p205
      %p207 = scmp.ne.s32.totalorder %s199, %s201
      %p208 = scmp.eq.s32.totalorder %s23, 1
      %p209 = por %p207, %p208
      %p210 = scmp.ne.s32.totalorder %s201, %s202
      %p211 = scmp.eq.s32.totalorder %s23, 0
      %p212 = por %p210, %p211
      %p213 = scmp.ne.s32.totalorder %s201, %s202
      %p214 = scmp.eq.s32.totalorder %s24, 1
      %p215 = por %p213, %p214
      %p217 = scmp.ne.s32.totalorder %s202, %s216
      %p218 = scmp.eq.s32.totalorder %s24, 0
      %p219 = por %p217, %p218
      %s220 = ssub.s32 %s18, %s25
      %p221 = scmp.eq.s32.totalorder %s220, 0
      %s223 = sadd.s32 %s222, 1
      %s224 = scalar_select %p221, %s222, %s223
      %p227 = pneg %p221
      %p228 = scmp.eq.s32.totalorder %s18, 1
      %p229 = por %p227, %p228
      %p230 = scmp.ne.s32.totalorder %s222, %s225
      %p231 = scmp.eq.s32.totalorder %s18, 0
      %p232 = por %p230, %p231
      %p233 = scmp.ne.s32.totalorder %s222, %s225
      %p234 = scmp.eq.s32.totalorder %s23, 1
      %p235 = por %p233, %p234
      %p236 = scmp.ne.s32.totalorder %s225, %s226
      %p237 = scmp.eq.s32.totalorder %s23, 0
      %p238 = por %p236, %p237
      %p239 = scmp.ne.s32.totalorder %s225, %s226
      %p240 = scmp.eq.s32.totalorder %s24, 1
      %p241 = por %p239, %p240
      %p243 = scmp.ne.s32.totalorder %s226, %s242
      %p244 = scmp.eq.s32.totalorder %s24, 0
      %p245 = por %p243, %p244
      %p246 = scmp.le.s32.totalorder 1, %s18
      %p247 = scmp.lt.s32.totalorder %s18, 3
      %p248 = pnand %p246, %p247
      %p249 = pneg %p248
      // Predicated region
      $region9: #{tpu_custom_call.1} parent=5 // pred_check
        _
      $region10: #{tpu_custom_call.1} parent=5 // pred_check_branch
        %251 = sbr.rel (%p248) target = $region12
      $region11: #{tpu_custom_call.1} parent=5 // pred_region
        %s252 = ssub.s32 %s18, 1
        // Predicated region
        $region13: #{tpu_custom_call.1} parent=11 // pred_check
          %p253 = pneg %p65
        $region14: #{tpu_custom_call.1} parent=11 // pred_check_branch
          %255 = sbr.rel (%p253) target = $region16
        $region15: #{tpu_custom_call.1} parent=11 // pred_region
          _
        $region16: #{tpu_custom_call.1} parent=11 // pred_fallthru
          _
        // Predicated region
        $region17: #{tpu_custom_call.1} parent=11 // pred_check
          %p256 = pneg %p86
        $region18: #{tpu_custom_call.1} parent=11 // pred_check_branch
          %258 = sbr.rel (%p256) target = $region20
        $region19: #{tpu_custom_call.1} parent=11 // pred_region
          _
        $region20: #{tpu_custom_call.1} parent=11 // pred_fallthru
          _
        // Predicated region
        $region21: #{tpu_custom_call.1} parent=11 // pred_check
          %p259 = pneg %p107
        $region22: #{tpu_custom_call.1} parent=11 // pred_check_branch
          %261 = sbr.rel (%p259) target = $region24
        $region23: #{tpu_custom_call.1} parent=11 // pred_region
          _
        $region24: #{tpu_custom_call.1} parent=11 // pred_fallthru
          _
        // Predicated region
        $region25: #{tpu_custom_call.1} parent=11 // pred_check
          %p262 = pneg %p128
        $region26: #{tpu_custom_call.1} parent=11 // pred_check_branch
          %264 = sbr.rel (%p262) target = $region28
        $region27: #{tpu_custom_call.1} parent=11 // pred_region
          _
        $region28: #{tpu_custom_call.1} parent=11 // pred_fallthru
          _
        // Predicated region
        $region29: #{tpu_custom_call.1} parent=11 // pred_check
          %p265 = pneg %p149
        $region30: #{tpu_custom_call.1} parent=11 // pred_check_branch
          %267 = sbr.rel (%p265) target = $region32
        $region31: #{tpu_custom_call.1} parent=11 // pred_region
          _
        $region32: #{tpu_custom_call.1} parent=11 // pred_fallthru
          _
        // Predicated region
        $region33: #{tpu_custom_call.1} parent=11 // pred_check
          %p268 = pneg %p170
        $region34: #{tpu_custom_call.1} parent=11 // pred_check_branch
          %270 = sbr.rel (%p268) target = $region36
        $region35: #{tpu_custom_call.1} parent=11 // pred_region
          _
        $region36: #{tpu_custom_call.1} parent=11 // pred_fallthru
          _
        // Predicated region
        $region37: #{tpu_custom_call.1} parent=11 // pred_check
          %p271 = pneg %p191
        $region38: #{tpu_custom_call.1} parent=11 // pred_check_branch
          %273 = sbr.rel (%p271) target = $region40
        $region39: #{tpu_custom_call.1} parent=11 // pred_region
          _
        $region40: #{tpu_custom_call.1} parent=11 // pred_fallthru
          _
        // Predicated region
        $region41: #{tpu_custom_call.1} parent=11 // pred_check
          %p274 = pneg %p212
        $region42: #{tpu_custom_call.1} parent=11 // pred_check_branch
          %276 = sbr.rel (%p274) target = $region44
        $region43: #{tpu_custom_call.1} parent=11 // pred_region
          _
        $region44: #{tpu_custom_call.1} parent=11 // pred_fallthru
          _
      $region12: #{tpu_custom_call.1} parent=5 // pred_fallthru
        _
      %p277 = scmp.lt.s32.totalorder %s18, 2
      // Predicated region
      $region45: #{tpu_custom_call.1} parent=5 // pred_check
        %p278 = pneg %p277
      $region46: #{tpu_custom_call.1} parent=5 // pred_check_branch
        %280 = sbr.rel (%p278) target = $region48
      $region47: #{tpu_custom_call.1} parent=5 // pred_region
        // Predicated region
        $region49: #{tpu_custom_call.1} parent=47 // pred_check
          %p281 = pneg %p38
        $region50: #{tpu_custom_call.1} parent=47 // pred_check_branch
          %283 = sbr.rel (%p281) target = $region52
        $region51: #{tpu_custom_call.1} parent=47 // pred_region
          %p284 = scmp.lt.s32.totalorder %s18, 1
          %s285 = scalar_select %p284, %s18, 1
          %s286 = smul.addr %s285, 2
          %s287 = smul.addr %s286, 4
          %s288 = scalar_lea.vmem %s0, %s287
        $region52: #{tpu_custom_call.1} parent=47 // pred_fallthru
          _
      $region48: #{tpu_custom_call.1} parent=5 // pred_fallthru
        _
      %p289 = scmp.le.s32.totalorder 1, %s18
      %p290 = scmp.lt.s32.totalorder %s18, 3
      %p291 = pnand %p289, %p290
      %p292 = pneg %p291
      // Predicated region
      $region53: #{tpu_custom_call.1} parent=5 // pred_check
        _
      $region54: #{tpu_custom_call.1} parent=5 // pred_check_branch
        %294 = sbr.rel (%p291) target = $region56
      $region55: #{tpu_custom_call.1} parent=5 // pred_region
        %s295 = ssub.s32 %s18, 1
        %p296 = scmp.lt.s32.totalorder %s23, 1
        %s297 = scalar_select %p296, %s23, 1
        %s298 = smul.addr %s297, 2
        %s299 = smul.addr %s298, 4
        %s300 = scalar_lea.vmem %s0, %s299
        %p301 = pneg %p44
        %p302 = pneg %p41
        %p303 = pneg %p65
        %p304 = pneg %p62
        %p305 = pneg %p86
        %p306 = pneg %p83
        %p307 = pneg %p107
        %p308 = pneg %p104
        %p309 = pneg %p128
        %p310 = pneg %p125
        %p311 = pneg %p149
        %p312 = pneg %p146
        %p313 = pneg %p170
        %p314 = pneg %p167
        %p315 = pneg %p191
        %p316 = pneg %p188
        %p317 = pneg %p212
        %p318 = pneg %p209
        %p319 = pneg %p238
        %p320 = pneg %p235
        %s321 = sand.u32 %s225, 1
        %s322 = scalar_lea.sflag [#allocation6], %s321
        %s323 = sand.u32 %s225, 1
        %s324 = smul.addr %s323, 4
        %s325 = scalar_lea.vmem [#allocation5], %s324
        %p326 = scmp.lt.s32.totalorder %s23, 1
        %s327 = scalar_select %p326, %s23, 1
        %s328 = smul.addr %s327, 2
        %s329 = smul.addr %s328, 4
        %s330 = scalar_lea.vmem %s0, %s329
        %p332 = scmp.eq.s32.totalorder %s23, 0
        // Predicated region
        $region57: #{tpu_custom_call.1} parent=55 // pred_check
          %p333 = pneg %p332
        $region58: #{tpu_custom_call.1} parent=55 // pred_check_branch
          %335 = sbr.rel (%p333) target = $region60
        $region59: #{tpu_custom_call.1} parent=55 // pred_region
          %336 = vst [vmem:[#allocation2] sm:$0xff] 0
          %337 = vst [vmem:[#allocation3] sm:$0xff] 0
        $region60: #{tpu_custom_call.1} parent=55 // pred_fallthru
          _
        %v338 = vld [vmem:[%s330] sm:$0xf]
        %v339 = vpack.c.bf16 %v338, %v338
        %v342 = vunpack.c.l.s4 1983009808
        %v343 = vunpack.c.0.s8 %v342
        %v344 = vlaneseq
        %v345 = vshrl.u32 %v344, 7
        %v346 = vsub.s32 %v343, %v345
        %v347 = vrot.slane %v339, %v346
        %348 = vrot.lane.b32.xlu0 %v347, 19
        %v349 = vpop.permute.xlu0 %348
        %vm351 = vcmask 279704
        %352 = vst.msk [vmem:[#allocation2 + $0x2] sm:$0x3] %vm351, %v349
        %v353 = vld [vmem:[%s330] sm:$0xf]
        %v354 = vpack.c.bf16 %v353, %v353
        %v357 = vunpack.c.l.s4 1983009808
        %v358 = vunpack.c.0.s8 %v357
        %v359 = vlaneseq
        %v360 = vshrl.u32 %v359, 7
        %v361 = vsub.s32 %v358, %v360
        %v362 = vrot.slane %v354, %v361
        %363 = vrot.lane.b32.xlu0 %v362, 21
        %v364 = vpop.permute.xlu0 %363
        %vm366 = vcmask 427304
        %367 = vst.msk [vmem:[#allocation2 + $0x2] sm:$0x3] %vm366, %v364
        %v368 = vld [vmem:[%s330] sm:$0xf]
        %v369 = vpack.c.bf16 %v368, %v368
        %v372 = vunpack.c.l.s4 1983009808
        %v373 = vunpack.c.0.s8 %v372
        %v374 = vlaneseq
        %v375 = vshrl.u32 %v374, 7
        %v376 = vsub.s32 %v373, %v375
        %v377 = vrot.slane %v369, %v376
        %378 = vrot.lane.b32.xlu0 %v377, 23
        %v379 = vpop.permute.xlu0 %378
        %vm381 = vcmask 574904
        %382 = vst.msk [vmem:[#allocation2 + $0x2] sm:$0x3] %vm381, %v379
        %v383 = vld [vmem:[%s330] sm:$0xf]
        %v384 = vpack.c.bf16 %v383, %v383
        %v387 = vunpack.c.l.s4 1983009808
        %v388 = vunpack.c.0.s8 %v387
        %v389 = vlaneseq
        %v390 = vshrl.u32 %v389, 7
        %v391 = vsub.s32 %v388, %v390
        %v392 = vrot.slane %v384, %v391
        %393 = vrot.lane.b32.xlu0 %v392, 25
        %v394 = vpop.permute.xlu0 %393
        %vm396 = vcmask 722504
        %397 = vst.msk [vmem:[#allocation2 + $0x2] sm:$0x3] %vm396, %v394
        %v398 = vld [vmem:[%s330] sm:$0xf]
        %v399 = vpack.c.bf16 %v398, %v398
        %v402 = vunpack.c.l.s4 1983009808
        %v403 = vunpack.c.0.s8 %v402
        %v404 = vlaneseq
        %v405 = vshrl.u32 %v404, 7
        %v406 = vsub.s32 %v403, %v405
        %v407 = vrot.slane %v399, %v406
        %408 = vrot.lane.b32.xlu0 %v407, 27
        %v409 = vpop.permute.xlu0 %408
        %vm411 = vcmask 870104
        %412 = vst.msk [vmem:[#allocation2 + $0x2] sm:$0x3] %vm411, %v409
        %v413 = vld [vmem:[%s330] sm:$0xf]
        %v414 = vpack.c.bf16 %v413, %v413
        %v417 = vunpack.c.l.s4 1983009808
        %v418 = vunpack.c.0.s8 %v417
        %v419 = vlaneseq
        %v420 = vshrl.u32 %v419, 7
        %v421 = vsub.s32 %v418, %v420
        %v422 = vrot.slane %v414, %v421
        %423 = vrot.lane.b32.xlu0 %v422, 29
        %v424 = vpop.permute.xlu0 %423
        %vm426 = vcmask 1017704
        %427 = vst.msk [vmem:[#allocation2 + $0x2] sm:$0x3] %vm426, %v424
        %v428 = vld [vmem:[%s330] sm:$0xf]
        %v429 = vpack.c.bf16 %v428, %v428
        %v432 = vunpack.c.l.s4 1983009808
        %v433 = vunpack.c.0.s8 %v432
        %v434 = vlaneseq
        %v435 = vshrl.u32 %v434, 7
        %v436 = vsub.s32 %v433, %v435
        %v437 = vrot.slane %v429, %v436
        %438 = vrot.lane.b32.xlu0 %v437, 31
        %v439 = vpop.permute.xlu0 %438
        %v440 = vrot.slane %v439, 6
        %vm441 = vcmask 252928
        %v442 = vsel %vm441, %v440, %v439
        %vm444 = vcmask 1042424
        %vm445 = vcmask 117762
        %vm446 = vmor %vm445, %vm444
        %447 = vst.msk [vmem:[#allocation2 + $0x2] sm:$0xf] %vm446, %v442
        %v448 = vld [vmem:[%s330] sm:$0xf]
        %v449 = vpack.c.bf16 %v448, %v448
        %v452 = vunpack.c.l.s4 1983009808
        %v453 = vunpack.c.0.s8 %v452
        %v454 = vlaneseq
        %v455 = vshrl.u32 %v454, 7
        %v456 = vsub.s32 %v453, %v455
        %v457 = vrot.slane %v449, %v456
        %458 = vrot.lane.b32.xlu0 %v457, 33
        %v459 = vpop.permute.xlu0 %458
        %vm461 = vcmask 263304
        %462 = vst.msk [vmem:[#allocation2 + $0x4] sm:$0x3] %vm461, %v459
        %v463 = vld [vmem:[%s330 + $0x4] sm:$0xf]
        %v464 = vpack.c.bf16 %v463, %v463
        %v467 = vunpack.c.l.s4 1983009808
        %v468 = vunpack.c.0.s8 %v467
        %v469 = vlaneseq
        %v470 = vshrl.u32 %v469, 7
        %v471 = vsub.s32 %v468, %v470
        %v472 = vrot.slane %v464, %v471
        %473 = vrot.lane.b32.xlu0 %v472, 35
        %v474 = vpop.permute.xlu0 %473
        %vm476 = vcmask 410904
        %477 = vst.msk [vmem:[#allocation2 + $0x4] sm:$0x3] %vm476, %v474
        %v478 = vld [vmem:[%s330 + $0x4] sm:$0xf]
        %v479 = vpack.c.bf16 %v478, %v478
        %v482 = vunpack.c.l.s4 1983009808
        %v483 = vunpack.c.0.s8 %v482
        %v484 = vlaneseq
        %v485 = vshrl.u32 %v484, 7
        %v486 = vsub.s32 %v483, %v485
        %v487 = vrot.slane %v479, %v486
        %488 = vrot.lane.b32.xlu0 %v487, 37
        %v489 = vpop.permute.xlu0 %488
        %vm491 = vcmask 558504
        %492 = vst.msk [vmem:[#allocation2 + $0x4] sm:$0x3] %vm491, %v489
        %v493 = vld [vmem:[%s330 + $0x4] sm:$0xf]
        %v494 = vpack.c.bf16 %v493, %v493
        %v497 = vunpack.c.l.s4 1983009808
        %v498 = vunpack.c.0.s8 %v497
        %v499 = vlaneseq
        %v500 = vshrl.u32 %v499, 7
        %v501 = vsub.s32 %v498, %v500
        %v502 = vrot.slane %v494, %v501
        %503 = vrot.lane.b32.xlu0 %v502, 39
        %v504 = vpop.permute.xlu0 %503
        %vm506 = vcmask 706104
        %507 = vst.msk [vmem:[#allocation2 + $0x4] sm:$0x3] %vm506, %v504
        %v508 = vld [vmem:[%s330 + $0x4] sm:$0xf]
        %v509 = vpack.c.bf16 %v508, %v508
        %v512 = vunpack.c.l.s4 1983009808
        %v513 = vunpack.c.0.s8 %v512
        %v514 = vlaneseq
        %v515 = vshrl.u32 %v514, 7
        %v516 = vsub.s32 %v513, %v515
        %v517 = vrot.slane %v509, %v516
        %518 = vrot.lane.b32.xlu0 %v517, 41
        %v519 = vpop.permute.xlu0 %518
        %vm521 = vcmask 853704
        %522 = vst.msk [vmem:[#allocation2 + $0x4] sm:$0x3] %vm521, %v519
        %v523 = vld [vmem:[%s330 + $0x4] sm:$0xf]
        %v524 = vpack.c.bf16 %v523, %v523
        %v527 = vunpack.c.l.s4 1983009808
        %v528 = vunpack.c.0.s8 %v527
        %v529 = vlaneseq
        %v530 = vshrl.u32 %v529, 7
        %v531 = vsub.s32 %v528, %v530
        %v532 = vrot.slane %v524, %v531
        %533 = vrot.lane.b32.xlu0 %v532, 43
        %v534 = vpop.permute.xlu0 %533
        %vm536 = vcmask 1001304
        %537 = vst.msk [vmem:[#allocation2 + $0x4] sm:$0x3] %vm536, %v534
        %v538 = vld [vmem:[%s330 + $0x4] sm:$0xf]
        %v539 = vpack.c.bf16 %v538, %v538
        %v542 = vunpack.c.l.s4 1983009808
        %v543 = vunpack.c.0.s8 %v542
        %v544 = vlaneseq
        %v545 = vshrl.u32 %v544, 7
        %v546 = vsub.s32 %v543, %v545
        %v547 = vrot.slane %v539, %v546
        %548 = vrot.lane.b32.xlu0 %v547, 45
        %v549 = vpop.permute.xlu0 %548
        %v550 = vrot.slane %v549, 6
        %vm551 = vcmask 367616
        %v552 = vsel %vm551, %v550, %v549
        %vm554 = vcmask 1042408
        %vm555 = vcmask 101378
        %vm556 = vmor %vm555, %vm554
        %557 = vst.msk [vmem:[#allocation2 + $0x4] sm:$0xf] %vm556, %v552
        %v558 = vld [vmem:[%s330 + $0x4] sm:$0xf]
        %v559 = vpack.c.bf16 %v558, %v558
        %v562 = vunpack.c.l.s4 1983009808
        %v563 = vunpack.c.0.s8 %v562
        %v564 = vlaneseq
        %v565 = vshrl.u32 %v564, 7
        %v566 = vsub.s32 %v563, %v565
        %v567 = vrot.slane %v559, %v566
        %568 = vrot.lane.b32.xlu0 %v567, 47
        %v569 = vpop.permute.xlu0 %568
        %vm571 = vcmask 246904
        %572 = vst.msk [vmem:[#allocation2 + $0x6] sm:$0x3] %vm571, %v569
        %v573 = vld [vmem:[%s330 + $0x4] sm:$0xf]
        %v574 = vpack.c.bf16 %v573, %v573
        %v577 = vunpack.c.l.s4 1983009808
        %v578 = vunpack.c.0.s8 %v577
        %v579 = vlaneseq
        %v580 = vshrl.u32 %v579, 7
        %v581 = vsub.s32 %v578, %v580
        %v582 = vrot.slane %v574, %v581
        %583 = vrot.lane.b32.xlu0 %v582, 49
        %v584 = vpop.permute.xlu0 %583
        %vm586 = vcmask 394504
        %587 = vst.msk [vmem:[#allocation2 + $0x6] sm:$0x3] %vm586, %v584
        %v588 = vld [vmem:[%s7] sm:$0x7]
        %vm589 = vcmp.gt.f32.partialorder %v588, 0.0
        %v590 = vld [vmem:[#allocation2] sm:$0xff]
        %v592 = vcombine.high %v590, %v590
        %v594 = vunpack.c.l.s4 1983009808
        %v595 = vunpack.c.0.s8 %v594
        %v596 = vlaneseq
        %v597 = vshrl.u32 %v596, 7
        %v598 = vsub.s32 %v595, %v597
        %v599 = vrot.slane %v590, %v598
        %v601 = vunpack.c.l.s4 1983009808
        %v602 = vunpack.c.0.s8 %v601
        %v603 = vlaneseq
        %v604 = vshrl.u32 %v603, 7
        %v605 = vsub.s32 %v602, %v604
        %v606 = vrot.slane %v592, %v605
        %607 = vrot.lane.b32.xlu0 %v599, 19
        %v608 = vpop.permute.xlu0 %607
        %609 = vrot.lane.b32.xlu0 %v606, 19
        %v610 = vpop.permute.xlu0 %609
        %v611 = vrot.slane %v608, 4
        %v612 = vrot.slane %v610, 4
        %vm613 = vcmask 1043456
        %v614 = vsel %vm613, %v611, %v612
        %vm615 = vcmask 154624
        %v616 = vsel %vm615, %v608, %v614
        %v617 = vsel %vm615, %v610, %v612
        %620 = vst [vmem:[#allocation4] sm:$0x33] %v616
        %vm621 = vcmask 549888
        %622 = vst.msk [vmem:[#allocation4 + $0x8] sm:$0x3] %vm621, %v617
        %v623 = vld [vmem:[#allocation2] sm:$0xff]
        %v625 = vcombine.low %v623, %v623
        %v627 = vunpack.c.l.s4 1983009808
        %v628 = vunpack.c.0.s8 %v627
        %v629 = vlaneseq
        %v630 = vshrl.u32 %v629, 7
        %v631 = vsub.s32 %v628, %v630
        %v632 = vrot.slane %v625, %v631
        %v634 = vunpack.c.l.s4 1983009808
        %v635 = vunpack.c.0.s8 %v634
        %v636 = vlaneseq
        %v637 = vshrl.u32 %v636, 7
        %v638 = vsub.s32 %v635, %v637
        %v639 = vrot.slane %v623, %v638
        %640 = vrot.lane.b32.xlu0 %v632, 18
        %v641 = vpop.permute.xlu0 %640
        %642 = vrot.lane.b32.xlu0 %v639, 18
        %v643 = vpop.permute.xlu0 %642
        %v644 = vrot.slane %v641, 4
        %v645 = vrot.slane %v643, 4
        %v646 = vsel %vm613, %v644, %v645
        %vm647 = vcmask 146432
        %v648 = vsel %vm647, %v641, %v646
        %v649 = vsel %vm647, %v643, %v645
        %652 = vst [vmem:[#allocation4] sm:$0xcc] %v648
        %vm653 = vcmask 551938
        %654 = vst.msk [vmem:[#allocation4 + $0x8] sm:$0xc] %vm653, %v649
        %v655 = vld [vmem:[#allocation2] sm:$0xff]
        %v657 = vcombine.high %v655, %v655
        %v659 = vunpack.c.l.s4 1983009808
        %v660 = vunpack.c.0.s8 %v659
        %v661 = vlaneseq
        %v662 = vshrl.u32 %v661, 7
        %v663 = vsub.s32 %v660, %v662
        %v664 = vrot.slane %v655, %v663
        %v666 = vunpack.c.l.s4 1983009808
        %v667 = vunpack.c.0.s8 %v666
        %v668 = vlaneseq
        %v669 = vshrl.u32 %v668, 7
        %v670 = vsub.s32 %v667, %v669
        %v671 = vrot.slane %v657, %v670
        %672 = vrot.lane.b32.xlu0 %v664, 17
        %v673 = vpop.permute.xlu0 %672
        %674 = vrot.lane.b32.xlu0 %v671, 17
        %v675 = vpop.permute.xlu0 %674
        %v676 = vrot.slane %v673, 4
        %v677 = vrot.slane %v675, 4
        %v678 = vsel %vm613, %v676, %v677
        %vm679 = vcmask 138240
        %v680 = vsel %vm679, %v673, %v678
        %v681 = vsel %vm679, %v675, %v677
        %684 = vst [vmem:[#allocation4 + $0xc] sm:$0x33] %v680
        %685 = vst.msk [vmem:[#allocation4 + $0x14] sm:$0x3] %vm621, %v681
        %v686 = vld [vmem:[#allocation2] sm:$0xff]
        %v688 = vcombine.low %v686, %v686
        %v690 = vunpack.c.l.s4 1983009808
        %v691 = vunpack.c.0.s8 %v690
        %v692 = vlaneseq
        %v693 = vshrl.u32 %v692, 7
        %v694 = vsub.s32 %v691, %v693
        %v695 = vrot.slane %v688, %v694
        %v697 = vunpack.c.l.s4 1983009808
        %v698 = vunpack.c.0.s8 %v697
        %v699 = vlaneseq
        %v700 = vshrl.u32 %v699, 7
        %v701 = vsub.s32 %v698, %v700
        %v702 = vrot.slane %v686, %v701
        %703 = vrot.lane.b32.xlu0 %v695, 1
        %v704 = vpop.permute.xlu0 %703
        %705 = vrot.lane.b32.xlu0 %v702, 1
        %v706 = vpop.permute.xlu0 %705
        %v707 = vrot.slane %v704, 4
        %v708 = vrot.slane %v706, 4
        %v709 = vsel %vm613, %v707, %v708
        %vm710 = vcmask 7168
        %v711 = vsel %vm710, %v704, %v709
        %v712 = vsel %vm710, %v706, %v708
        %715 = vst [vmem:[#allocation4 + $0xc] sm:$0xcc] %v711
        %716 = vst.msk [vmem:[#allocation4 + $0x14] sm:$0xc] %vm653, %v712
        %v717 = vld [vmem:[#allocation2 + $0x2] sm:$0x3f]
        %v719 = vcombine.high %v717, %v717
        %v721 = vunpack.c.l.s4 1983009808
        %v722 = vunpack.c.0.s8 %v721
        %v723 = vlaneseq
        %v724 = vshrl.u32 %v723, 7
        %v725 = vsub.s32 %v722, %v724
        %v726 = vrot.slane %v717, %v725
        %v728 = vunpack.c.l.s4 1983009808
        %v729 = vunpack.c.0.s8 %v728
        %v730 = vlaneseq
        %v731 = vshrl.u32 %v730, 7
        %v732 = vsub.s32 %v729, %v731
        %v733 = vrot.slane %v719, %v732
        %736 = vst [vmem:[#allocation4 + $0x18] sm:$0x33] %v726
        %737 = vst.msk [vmem:[#allocation4 + $0x20] sm:$0x3] %vm621, %v733
        %v738 = vld [vmem:[#allocation2 + $0x2] sm:$0x3f]
        %v740 = vcombine.low %v738, %v738
        %v742 = vunpack.c.l.s4 1983009808
        %v743 = vunpack.c.0.s8 %v742
        %v744 = vlaneseq
        %v745 = vshrl.u32 %v744, 7
        %v746 = vsub.s32 %v743, %v745
        %v747 = vrot.slane %v740, %v746
        %v749 = vunpack.c.l.s4 1983009808
        %v750 = vunpack.c.0.s8 %v749
        %v751 = vlaneseq
        %v752 = vshrl.u32 %v751, 7
        %v753 = vsub.s32 %v750, %v752
        %v754 = vrot.slane %v738, %v753
        %755 = vrot.lane.b32.xlu0 %v747, 127
        %v756 = vpop.permute.xlu0 %755
        %757 = vrot.lane.b32.xlu0 %v754, 127
        %v758 = vpop.permute.xlu0 %757
        %v759 = vrot.slane %v756, 4
        %v760 = vrot.slane %v758, 4
        %v761 = vsel %vm613, %v759, %v760
        %vm762 = vcmask 1039360
        %v763 = vsel %vm762, %v756, %v761
        %766 = vst [vmem:[#allocation4 + $0x18] sm:$0xcc] %v763
        %767 = vst.msk [vmem:[#allocation4 + $0x20] sm:$0xc] %vm653, %v758
        %v768 = vld [vmem:[#allocation2 + $0x2] sm:$0x3f]
        %v770 = vcombine.high %v768, %v768
        %v772 = vunpack.c.l.s4 1983009808
        %v773 = vunpack.c.0.s8 %v772
        %v774 = vlaneseq
        %v775 = vshrl.u32 %v774, 7
        %v776 = vsub.s32 %v773, %v775
        %v777 = vrot.slane %v768, %v776
        %v779 = vunpack.c.l.s4 1983009808
        %v780 = vunpack.c.0.s8 %v779
        %v781 = vlaneseq
        %v782 = vshrl.u32 %v781, 7
        %v783 = vsub.s32 %v780, %v782
        %v784 = vrot.slane %v770, %v783
        %785 = vrot.lane.b32.xlu0 %v777, 111
        %v786 = vpop.permute.xlu0 %785
        %787 = vrot.lane.b32.xlu0 %v784, 111
        %v788 = vpop.permute.xlu0 %787
        %v789 = vrot.slane %v786, 4
        %v790 = vrot.slane %v788, 4
        %v791 = vsel %vm613, %v789, %v790
        %vm792 = vcmask 908288
        %v793 = vsel %vm792, %v786, %v791
        %796 = vst [vmem:[#allocation4 + $0x24] sm:$0x33] %v793
        %797 = vst.msk [vmem:[#allocation4 + $0x2c] sm:$0x3] %vm621, %v788
        %v798 = vld [vmem:[#allocation2 + $0x2] sm:$0x3f]
        %v800 = vcombine.low %v798, %v798
        %v802 = vunpack.c.l.s4 1983009808
        %v803 = vunpack.c.0.s8 %v802
        %v804 = vlaneseq
        %v805 = vshrl.u32 %v804, 7
        %v806 = vsub.s32 %v803, %v805
        %v807 = vrot.slane %v800, %v806
        %v809 = vunpack.c.l.s4 1983009808
        %v810 = vunpack.c.0.s8 %v809
        %v811 = vlaneseq
        %v812 = vshrl.u32 %v811, 7
        %v813 = vsub.s32 %v810, %v812
        %v814 = vrot.slane %v798, %v813
        %815 = vrot.lane.b32.xlu0 %v807, 110
        %v816 = vpop.permute.xlu0 %815
        %817 = vrot.lane.b32.xlu0 %v814, 110
        %v818 = vpop.permute.xlu0 %817
        %v819 = vrot.slane %v816, 4
        %v820 = vrot.slane %v818, 4
        %v821 = vsel %vm613, %v819, %v820
        %vm822 = vcmask 900096
        %v823 = vsel %vm822, %v816, %v821
        %826 = vst [vmem:[#allocation4 + $0x24] sm:$0xcc] %v823
        %827 = vst.msk [vmem:[#allocation4 + $0x2c] sm:$0xc] %vm653, %v818
        %v828 = vld [vmem:[#allocation2 + $0x2] sm:$0x3f]
        %v830 = vcombine.high %v828, %v828
        %v832 = vunpack.c.l.s4 1983009808
        %v833 = vunpack.c.0.s8 %v832
        %v834 = vlaneseq
        %v835 = vshrl.u32 %v834, 7
        %v836 = vsub.s32 %v833, %v835
        %v837 = vrot.slane %v828, %v836
        %v839 = vunpack.c.l.s4 1983009808
        %v840 = vunpack.c.0.s8 %v839
        %v841 = vlaneseq
        %v842 = vshrl.u32 %v841, 7
        %v843 = vsub.s32 %v840, %v842
        %v844 = vrot.slane %v830, %v843
        %845 = vrot.lane.b32.xlu0 %v837, 109
        %v846 = vpop.permute.xlu0 %845
        %847 = vrot.lane.b32.xlu0 %v844, 109
        %v848 = vpop.permute.xlu0 %847
        %v849 = vrot.slane %v846, 4
        %v850 = vrot.slane %v848, 4
        %v851 = vsel %vm613, %v849, %v850
        %vm852 = vcmask 891904
        %v853 = vsel %vm852, %v846, %v851
        %856 = vst [vmem:[#allocation4 + $0x30] sm:$0x33] %v853
        %857 = vst.msk [vmem:[#allocation4 + $0x38] sm:$0x3] %vm621, %v848
        %v858 = vld [vmem:[%s1] sm:$0x3]
        %v859 = vld [vmem:[#allocation4] sm:$0xff]
        %v860 = vld [vmem:[#allocation4 + $0x8] sm:$0xf]
        %v861 = vld [vmem:[#allocation4 + $0xc] sm:$0xff]
        %v862 = vld [vmem:[#allocation4 + $0x14] sm:$0xf]
        %v863 = vld [vmem:[#allocation4 + $0x18] sm:$0xff]
        %v864 = vld [vmem:[#allocation4 + $0x20] sm:$0xf]
        %v865 = vld [vmem:[#allocation4 + $0x24] sm:$0xff]
        %v866 = vld [vmem:[#allocation4 + $0x2c] sm:$0xf]
        %v867 = vld [vmem:[#allocation4 + $0x30] sm:$0x33]
        %v868 = vld [vmem:[#allocation4 + $0x38] sm:$0x3]
        %v869 = vld [vmem:[%s2] sm:$0xf]
        %871 = vset.pattern.permute.xlu0 0
        %872 = vperm.xlu0 %871, %v869
        %v873 = vpop.permute.xlu0 %872
        %v885 = vunpack.c.l.b16 %v859
        %v886 = vunpack.c.h.b16 %v859
        %v887 = vunpack.c.l.b16 %v860
        %v888 = vunpack.c.l.b16 %v861
        %v889 = vunpack.c.h.b16 %v861
        %v890 = vunpack.c.l.b16 %v862
        %v891 = vunpack.c.l.b16 %v863
        %v892 = vunpack.c.h.b16 %v863
        %v893 = vunpack.c.l.b16 %v864
        %v894 = vunpack.c.l.b16 %v865
        %v895 = vunpack.c.h.b16 %v865
        %v896 = vunpack.c.l.b16 %v866
        %v897 = vunpack.c.l.b16 %v867
        %v898 = vunpack.c.h.b16 %v867
        %v899 = vunpack.c.l.b16 %v868
        %v900 = vpack.c.b16 %v888, %v885
        %v901 = vpack.c.b16 %v889, %v886
        %v902 = vpack.c.b16 %v890, %v887
        %v903 = vpack.c.b16 %v894, %v891
        %v904 = vpack.c.b16 %v895, %v892
        %v905 = vpack.c.b16 %v896, %v893
        %v906 = vpack.c.b16 %v897, %v897
        %v907 = vpack.c.b16 %v898, %v898
        %v908 = vpack.c.b16 %v899, %v899
        %vm915 = vcmask 293888
        %v917 = vsel %vm915, %v858, 0
        %vm919 = vcmask 1041408
        %v921 = vsel %vm919, %v906, 0
        %v924 = vsel %vm919, %v907, 0
        %v927 = vsel %vm919, %v908, 0
        %929 = vmatprep.subr.bf16.mxu0 0
        %930 = vmatpush1.bf16.msra.mxu0 0
        %931 = vmatprep.subr.bf16.mxu0 0
        %932 = vmatpush1.bf16.msra.mxu0 0
        %933 = vmatprep.subr.bf16.mxu0 0
        %934 = vmatpush1.bf16.msra.mxu0 0
        %935 = vmatprep.subr.bf16.mxu0 0
        %936 = vmatpush1.bf16.msra.mxu0 0
        %937 = vmatprep.subr.bf16.mxu0 0
        %938 = vmatpush1.bf16.msra.mxu0 0
        %939 = vmatprep.subr.bf16.mxu0 %v924
        %940 = vmatpush1.bf16.msra.mxu0 %v921
        %941 = vmatprep.subr.bf16.mxu0 %v904
        %942 = vmatpush1.bf16.msra.mxu0 %v903
        %943 = vmatprep.subr.bf16.mxu0 %v901
        %944 = vmatpush1.bf16.msra.mxu0 %v900
        %945 = vmatprep.subr.bf16.mxu0 0
        %946 = vmatpush2.bf16.msra.mxu0 0
        %947 = vmatprep.subr.bf16.mxu0 0
        %948 = vmatpush2.bf16.msra.mxu0 0
        %949 = vmatprep.subr.bf16.mxu0 0
        %950 = vmatpush2.bf16.msra.mxu0 0
        %951 = vmatprep.subr.bf16.mxu0 0
        %952 = vmatpush2.bf16.msra.mxu0 0
        %953 = vmatprep.subr.bf16.mxu0 0
        %954 = vmatpush2.bf16.msra.mxu0 0
        %955 = vmatprep.subr.bf16.mxu0 0
        %956 = vmatpush2.bf16.msra.mxu0 0
        %957 = vmatprep.subr.bf16.mxu0 0
        %958 = vmatpush2.bf16.msra.mxu0 0
        %959 = vmatprep.subr.bf16.mxu0 0
        %960 = vmatpush2.bf16.msra.mxu0 0
        %961 = vmatprep.mubr.bf16.mxu0 0
        %962 = vmatmul.mubr.bf16.gmra.mxu0 %v917
        %v963 = vpop.f32.mrf.mxu0
        %v964 = vadd.f32 %v873, %v963
        %v965 = vpop.f32.mrf.mxu0
        %v966 = vadd.f32 %v873, %v965
        %v967 = vpop.f32.mrf.mxu0
        %v968 = vpop.f32.mrf.mxu0
        %969 = vdwg.mxu0
        %970 = vmatprep.subr.bf16.mxu0 0
        %971 = vmatpush1.bf16.msra.mxu0 0
        %972 = vmatprep.subr.bf16.mxu0 0
        %973 = vmatpush1.bf16.msra.mxu0 0
        %974 = vmatprep.subr.bf16.mxu0 0
        %975 = vmatpush1.bf16.msra.mxu0 0
        %976 = vmatprep.subr.bf16.mxu0 0
        %977 = vmatpush1.bf16.msra.mxu0 0
        %978 = vmatprep.subr.bf16.mxu0 0
        %979 = vmatpush1.bf16.msra.mxu0 0
        %980 = vmatprep.subr.bf16.mxu0 0
        %981 = vmatpush1.bf16.msra.mxu0 %v927
        %982 = vmatprep.subr.bf16.mxu0 0
        %983 = vmatpush1.bf16.msra.mxu0 %v905
        %984 = vmatprep.subr.bf16.mxu0 0
        %985 = vmatpush1.bf16.msra.mxu0 %v902
        %986 = vmatprep.subr.bf16.mxu0 0
        %987 = vmatpush2.bf16.msra.mxu0 0
        %988 = vmatprep.subr.bf16.mxu0 0
        %989 = vmatpush2.bf16.msra.mxu0 0
        %990 = vmatprep.subr.bf16.mxu0 0
        %991 = vmatpush2.bf16.msra.mxu0 0
        %992 = vmatprep.subr.bf16.mxu0 0
        %993 = vmatpush2.bf16.msra.mxu0 0
        %994 = vmatprep.subr.bf16.mxu0 0
        %995 = vmatpush2.bf16.msra.mxu0 0
        %996 = vmatprep.subr.bf16.mxu0 0
        %997 = vmatpush2.bf16.msra.mxu0 0
        %998 = vmatprep.subr.bf16.mxu0 0
        %999 = vmatpush2.bf16.msra.mxu0 0
        %1000 = vmatprep.subr.bf16.mxu0 0
        %1001 = vmatpush2.bf16.msra.mxu0 0
        %1002 = vmatprep.mubr.bf16.mxu0 0
        %1003 = vmatmul.mubr.bf16.gmra.mxu0 %v917
        %v1004 = vpop.f32.mrf.mxu0
        %v1005 = vadd.f32 %v873, %v1004
        %v1006 = vpop.f32.mrf.mxu0
        %v1007 = vpop.f32.mrf.mxu0
        %v1008 = vpop.f32.mrf.mxu0
        %1009 = vdwg.mxu0
        %vm1010 = vcmp.gt.f32.partialorder %v964, 0.0
        %vm1011 = vcmp.gt.f32.partialorder %v966, 0.0
        %vm1012 = vcmp.gt.f32.partialorder %v1005, 0.0
        %v1013 = vmul.f32 %v964, 0.2
        %v1014 = vmul.f32 %v966, 0.2
        %v1015 = vmul.f32 %v1005, 0.2
        %v1016 = vsel %vm1010, %v964, %v1013
        %v1017 = vsel %vm1011, %v966, %v1014
        %v1018 = vsel %vm1012, %v1005, %v1015
        %v1019 = vsel %vm589, 1, 0
        %v1020 = vlaneseq
        %v1021 = vshrl.u32 %v1020, 7
        %v1022 = vsub.s32 0, %v1021
        %v1023 = vrot.slane %v1019, %v1022
        %v1024 = vlaneseq
        %v1025 = vshrl.u32 %v1024, 7
        %v1026 = vsub.s32 1, %v1025
        %v1027 = vrot.slane %v1019, %v1026
        %v1028 = vlaneseq
        %v1029 = vshrl.u32 %v1028, 7
        %v1030 = vsub.s32 2, %v1029
        %v1031 = vrot.slane %v1019, %v1030
        %vm1032 = vcmp.eq.s32.totalorder %v1023, 1
        %vm1033 = vcmp.eq.s32.totalorder %v1027, 1
        %vm1034 = vcmp.eq.s32.totalorder %v1031, 1
        %v1035 = vsel %vm1032, %v1016, 0.0
        %v1036 = vsel %vm1033, %v1017, 0.0
        %v1037 = vsel %vm1034, %v1018, 0.0
        %v1038 = vpack.c.bf16 %v1035, %v1035
        %v1039 = vpack.c.bf16 %v1036, %v1036
        %v1040 = vpack.c.bf16 %v1037, %v1037
        %v1044 = vcombine.low %v1038, %v1039
        %v1046 = vunpack.c.l.s4 1983009808
        %v1047 = vunpack.c.0.s8 %v1046
        %v1048 = vlaneseq
        %v1049 = vshrl.u32 %v1048, 7
        %v1050 = vsub.s32 %v1047, %v1049
        %v1051 = vrot.slane %v1044, %v1050
        %v1053 = vunpack.c.l.s4 1983009808
        %v1054 = vunpack.c.0.s8 %v1053
        %v1055 = vlaneseq
        %v1056 = vshrl.u32 %v1055, 7
        %v1057 = vsub.s32 %v1054, %v1056
        %v1058 = vrot.slane %v1040, %v1057
        %v1059 = vcombine.low %v1051, %v1058
        %vm1061 = vcmask 1043458
        %vm1062 = vmor %vm1061, %vm919
        %vm1063 = vcmask 553988
        %vm1064 = vmor %vm1063, %vm1062
        %1065 = vst.msk [vmem:[#allocation3 + $0x2] sm:$0x3f] %vm1064, %v1059
        %v1066 = vld [vmem:[#allocation3] sm:$0xff]
        %v1068 = vcombine.high %v1066, %v1066
        %v1070 = vunpack.c.l.s4 1983009808
        %v1071 = vunpack.c.0.s8 %v1070
        %v1072 = vlaneseq
        %v1073 = vshrl.u32 %v1072, 7
        %v1074 = vsub.s32 %v1071, %v1073
        %v1075 = vrot.slane %v1066, %v1074
        %v1077 = vunpack.c.l.s4 1983009808
        %v1078 = vunpack.c.0.s8 %v1077
        %v1079 = vlaneseq
        %v1080 = vshrl.u32 %v1079, 7
        %v1081 = vsub.s32 %v1078, %v1080
        %v1082 = vrot.slane %v1068, %v1081
        %1083 = vrot.lane.b32.xlu0 %v1075, 19
        %v1084 = vpop.permute.xlu0 %1083
        %1085 = vrot.lane.b32.xlu0 %v1082, 19
        %v1086 = vpop.permute.xlu0 %1085
        %v1087 = vrot.slane %v1084, 4
        %v1088 = vrot.slane %v1086, 4
        %v1089 = vsel %vm613, %v1087, %v1088
        %v1090 = vsel %vm615, %v1084, %v1089
        %v1091 = vsel %vm615, %v1086, %v1088
        %1094 = vst [vmem:[#allocation4] sm:$0x33] %v1090
        %1095 = vst.msk [vmem:[#allocation4 + $0x8] sm:$0x3] %vm621, %v1091
        %v1096 = vld [vmem:[#allocation3] sm:$0xff]
        %v1098 = vcombine.low %v1096, %v1096
        %v1100 = vunpack.c.l.s4 1983009808
        %v1101 = vunpack.c.0.s8 %v1100
        %v1102 = vlaneseq
        %v1103 = vshrl.u32 %v1102, 7
        %v1104 = vsub.s32 %v1101, %v1103
        %v1105 = vrot.slane %v1098, %v1104
        %v1107 = vunpack.c.l.s4 1983009808
        %v1108 = vunpack.c.0.s8 %v1107
        %v1109 = vlaneseq
        %v1110 = vshrl.u32 %v1109, 7
        %v1111 = vsub.s32 %v1108, %v1110
        %v1112 = vrot.slane %v1096, %v1111
        %1113 = vrot.lane.b32.xlu0 %v1105, 18
        %v1114 = vpop.permute.xlu0 %1113
        %1115 = vrot.lane.b32.xlu0 %v1112, 18
        %v1116 = vpop.permute.xlu0 %1115
        %v1117 = vrot.slane %v1114, 4
        %v1118 = vrot.slane %v1116, 4
        %v1119 = vsel %vm613, %v1117, %v1118
        %v1120 = vsel %vm647, %v1114, %v1119
        %v1121 = vsel %vm647, %v1116, %v1118
        %1124 = vst [vmem:[#allocation4] sm:$0xcc] %v1120
        %1125 = vst.msk [vmem:[#allocation4 + $0x8] sm:$0xc] %vm653, %v1121
        %v1126 = vld [vmem:[#allocation3] sm:$0xff]
        %v1128 = vcombine.high %v1126, %v1126
        %v1130 = vunpack.c.l.s4 1983009808
        %v1131 = vunpack.c.0.s8 %v1130
        %v1132 = vlaneseq
        %v1133 = vshrl.u32 %v1132, 7
        %v1134 = vsub.s32 %v1131, %v1133
        %v1135 = vrot.slane %v1126, %v1134
        %v1137 = vunpack.c.l.s4 1983009808
        %v1138 = vunpack.c.0.s8 %v1137
        %v1139 = vlaneseq
        %v1140 = vshrl.u32 %v1139, 7
        %v1141 = vsub.s32 %v1138, %v1140
        %v1142 = vrot.slane %v1128, %v1141
        %1143 = vrot.lane.b32.xlu0 %v1135, 17
        %v1144 = vpop.permute.xlu0 %1143
        %1145 = vrot.lane.b32.xlu0 %v1142, 17
        %v1146 = vpop.permute.xlu0 %1145
        %v1147 = vrot.slane %v1144, 4
        %v1148 = vrot.slane %v1146, 4
        %v1149 = vsel %vm613, %v1147, %v1148
        %v1150 = vsel %vm679, %v1144, %v1149
        %v1151 = vsel %vm679, %v1146, %v1148
        %1154 = vst [vmem:[#allocation4 + $0xc] sm:$0x33] %v1150
        %1155 = vst.msk [vmem:[#allocation4 + $0x14] sm:$0x3] %vm621, %v1151
        %v1156 = vld [vmem:[#allocation3] sm:$0xff]
        %v1158 = vcombine.low %v1156, %v1156
        %v1160 = vunpack.c.l.s4 1983009808
        %v1161 = vunpack.c.0.s8 %v1160
        %v1162 = vlaneseq
        %v1163 = vshrl.u32 %v1162, 7
        %v1164 = vsub.s32 %v1161, %v1163
        %v1165 = vrot.slane %v1158, %v1164
        %v1167 = vunpack.c.l.s4 1983009808
        %v1168 = vunpack.c.0.s8 %v1167
        %v1169 = vlaneseq
        %v1170 = vshrl.u32 %v1169, 7
        %v1171 = vsub.s32 %v1168, %v1170
        %v1172 = vrot.slane %v1156, %v1171
        %1173 = vrot.lane.b32.xlu0 %v1165, 1
        %v1174 = vpop.permute.xlu0 %1173
        %1175 = vrot.lane.b32.xlu0 %v1172, 1
        %v1176 = vpop.permute.xlu0 %1175
        %v1177 = vrot.slane %v1174, 4
        %v1178 = vrot.slane %v1176, 4
        %v1179 = vsel %vm613, %v1177, %v1178
        %v1180 = vsel %vm710, %v1174, %v1179
        %v1181 = vsel %vm710, %v1176, %v1178
        %1184 = vst [vmem:[#allocation4 + $0xc] sm:$0xcc] %v1180
        %1185 = vst.msk [vmem:[#allocation4 + $0x14] sm:$0xc] %vm653, %v1181
        %v1186 = vld [vmem:[#allocation3 + $0x2] sm:$0x3f]
        %v1188 = vcombine.high %v1186, %v1186
        %v1190 = vunpack.c.l.s4 1983009808
        %v1191 = vunpack.c.0.s8 %v1190
        %v1192 = vlaneseq
        %v1193 = vshrl.u32 %v1192, 7
        %v1194 = vsub.s32 %v1191, %v1193
        %v1195 = vrot.slane %v1186, %v1194
        %v1197 = vunpack.c.l.s4 1983009808
        %v1198 = vunpack.c.0.s8 %v1197
        %v1199 = vlaneseq
        %v1200 = vshrl.u32 %v1199, 7
        %v1201 = vsub.s32 %v1198, %v1200
        %v1202 = vrot.slane %v1188, %v1201
        %1205 = vst [vmem:[#allocation4 + $0x18] sm:$0x33] %v1195
        %1206 = vst.msk [vmem:[#allocation4 + $0x20] sm:$0x3] %vm621, %v1202
        %v1207 = vld [vmem:[#allocation3 + $0x2] sm:$0x3f]
        %v1209 = vcombine.low %v1207, %v1207
        %v1211 = vunpack.c.l.s4 1983009808
        %v1212 = vunpack.c.0.s8 %v1211
        %v1213 = vlaneseq
        %v1214 = vshrl.u32 %v1213, 7
        %v1215 = vsub.s32 %v1212, %v1214
        %v1216 = vrot.slane %v1209, %v1215
        %v1218 = vunpack.c.l.s4 1983009808
        %v1219 = vunpack.c.0.s8 %v1218
        %v1220 = vlaneseq
        %v1221 = vshrl.u32 %v1220, 7
        %v1222 = vsub.s32 %v1219, %v1221
        %v1223 = vrot.slane %v1207, %v1222
        %1224 = vrot.lane.b32.xlu0 %v1216, 127
        %v1225 = vpop.permute.xlu0 %1224
        %1226 = vrot.lane.b32.xlu0 %v1223, 127
        %v1227 = vpop.permute.xlu0 %1226
        %v1228 = vrot.slane %v1225, 4
        %v1229 = vrot.slane %v1227, 4
        %v1230 = vsel %vm613, %v1228, %v1229
        %v1231 = vsel %vm762, %v1225, %v1230
        %1234 = vst [vmem:[#allocation4 + $0x18] sm:$0xcc] %v1231
        %1235 = vst.msk [vmem:[#allocation4 + $0x20] sm:$0xc] %vm653, %v1227
        %v1236 = vld [vmem:[#allocation3 + $0x2] sm:$0x3f]
        %v1238 = vcombine.high %v1236, %v1236
        %v1240 = vunpack.c.l.s4 1983009808
        %v1241 = vunpack.c.0.s8 %v1240
        %v1242 = vlaneseq
        %v1243 = vshrl.u32 %v1242, 7
        %v1244 = vsub.s32 %v1241, %v1243
        %v1245 = vrot.slane %v1236, %v1244
        %v1247 = vunpack.c.l.s4 1983009808
        %v1248 = vunpack.c.0.s8 %v1247
        %v1249 = vlaneseq
        %v1250 = vshrl.u32 %v1249, 7
        %v1251 = vsub.s32 %v1248, %v1250
        %v1252 = vrot.slane %v1238, %v1251
        %1253 = vrot.lane.b32.xlu0 %v1245, 111
        %v1254 = vpop.permute.xlu0 %1253
        %1255 = vrot.lane.b32.xlu0 %v1252, 111
        %v1256 = vpop.permute.xlu0 %1255
        %v1257 = vrot.slane %v1254, 4
        %v1258 = vrot.slane %v1256, 4
        %v1259 = vsel %vm613, %v1257, %v1258
        %v1260 = vsel %vm792, %v1254, %v1259
        %1263 = vst [vmem:[#allocation4 + $0x24] sm:$0x33] %v1260
        %1264 = vst.msk [vmem:[#allocation4 + $0x2c] sm:$0x3] %vm621, %v1256
        %v1265 = vld [vmem:[#allocation3 + $0x2] sm:$0x3f]
        %v1267 = vcombine.low %v1265, %v1265
        %v1269 = vunpack.c.l.s4 1983009808
        %v1270 = vunpack.c.0.s8 %v1269
        %v1271 = vlaneseq
        %v1272 = vshrl.u32 %v1271, 7
        %v1273 = vsub.s32 %v1270, %v1272
        %v1274 = vrot.slane %v1267, %v1273
        %v1276 = vunpack.c.l.s4 1983009808
        %v1277 = vunpack.c.0.s8 %v1276
        %v1278 = vlaneseq
        %v1279 = vshrl.u32 %v1278, 7
        %v1280 = vsub.s32 %v1277, %v1279
        %v1281 = vrot.slane %v1265, %v1280
        %1282 = vrot.lane.b32.xlu0 %v1274, 110
        %v1283 = vpop.permute.xlu0 %1282
        %1284 = vrot.lane.b32.xlu0 %v1281, 110
        %v1285 = vpop.permute.xlu0 %1284
        %v1286 = vrot.slane %v1283, 4
        %v1287 = vrot.slane %v1285, 4
        %v1288 = vsel %vm613, %v1286, %v1287
        %v1289 = vsel %vm822, %v1283, %v1288
        %1292 = vst [vmem:[#allocation4 + $0x24] sm:$0xcc] %v1289
        %1293 = vst.msk [vmem:[#allocation4 + $0x2c] sm:$0xc] %vm653, %v1285
        %v1294 = vld [vmem:[#allocation3 + $0x2] sm:$0x3f]
        %v1296 = vcombine.high %v1294, %v1294
        %v1298 = vunpack.c.l.s4 1983009808
        %v1299 = vunpack.c.0.s8 %v1298
        %v1300 = vlaneseq
        %v1301 = vshrl.u32 %v1300, 7
        %v1302 = vsub.s32 %v1299, %v1301
        %v1303 = vrot.slane %v1294, %v1302
        %v1305 = vunpack.c.l.s4 1983009808
        %v1306 = vunpack.c.0.s8 %v1305
        %v1307 = vlaneseq
        %v1308 = vshrl.u32 %v1307, 7
        %v1309 = vsub.s32 %v1306, %v1308
        %v1310 = vrot.slane %v1296, %v1309
        %1311 = vrot.lane.b32.xlu0 %v1303, 109
        %v1312 = vpop.permute.xlu0 %1311
        %1313 = vrot.lane.b32.xlu0 %v1310, 109
        %v1314 = vpop.permute.xlu0 %1313
        %v1315 = vrot.slane %v1312, 4
        %v1316 = vrot.slane %v1314, 4
        %v1317 = vsel %vm613, %v1315, %v1316
        %v1318 = vsel %vm852, %v1312, %v1317
        %1321 = vst [vmem:[#allocation4 + $0x30] sm:$0x33] %v1318
        %1322 = vst.msk [vmem:[#allocation4 + $0x38] sm:$0x3] %vm621, %v1314
        %v1323 = vld [vmem:[%s3] sm:$0xf]
        %v1324 = vld [vmem:[#allocation4] sm:$0xff]
        %v1325 = vld [vmem:[#allocation4 + $0x8] sm:$0xf]
        %v1326 = vld [vmem:[#allocation4 + $0xc] sm:$0xff]
        %v1327 = vld [vmem:[#allocation4 + $0x14] sm:$0xf]
        %v1328 = vld [vmem:[#allocation4 + $0x18] sm:$0xff]
        %v1329 = vld [vmem:[#allocation4 + $0x20] sm:$0xf]
        %v1330 = vld [vmem:[#allocation4 + $0x24] sm:$0xff]
        %v1331 = vld [vmem:[#allocation4 + $0x2c] sm:$0xf]
        %v1332 = vld [vmem:[#allocation4 + $0x30] sm:$0x33]
        %v1333 = vld [vmem:[#allocation4 + $0x38] sm:$0x3]
        %v1334 = vld [vmem:[%s4] sm:$0xff]
        %1336 = vset.pattern.permute.xlu0 0
        %1337 = vperm.xlu0 %1336, %v1334
        %v1338 = vpop.permute.xlu0 %1337
        %v1350 = vunpack.c.l.b16 %v1324
        %v1351 = vunpack.c.h.b16 %v1324
        %v1352 = vunpack.c.l.b16 %v1325
        %v1353 = vunpack.c.l.b16 %v1326
        %v1354 = vunpack.c.h.b16 %v1326
        %v1355 = vunpack.c.l.b16 %v1327
        %v1356 = vunpack.c.l.b16 %v1328
        %v1357 = vunpack.c.h.b16 %v1328
        %v1358 = vunpack.c.l.b16 %v1329
        %v1359 = vunpack.c.l.b16 %v1330
        %v1360 = vunpack.c.h.b16 %v1330
        %v1361 = vunpack.c.l.b16 %v1331
        %v1362 = vunpack.c.l.b16 %v1332
        %v1363 = vunpack.c.h.b16 %v1332
        %v1364 = vunpack.c.l.b16 %v1333
        %v1365 = vpack.c.b16 %v1353, %v1350
        %v1366 = vpack.c.b16 %v1354, %v1351
        %v1367 = vpack.c.b16 %v1355, %v1352
        %v1368 = vpack.c.b16 %v1359, %v1356
        %v1369 = vpack.c.b16 %v1360, %v1357
        %v1370 = vpack.c.b16 %v1361, %v1358
        %v1371 = vpack.c.b16 %v1362, %v1362
        %v1372 = vpack.c.b16 %v1363, %v1363
        %v1373 = vpack.c.b16 %v1364, %v1364
        %v1381 = vsel %vm915, %v1323, 0
        %v1384 = vsel %vm919, %v1371, 0
        %v1387 = vsel %vm919, %v1372, 0
        %v1390 = vsel %vm919, %v1373, 0
        %1392 = vmatprep.subr.bf16.mxu0 0
        %1393 = vmatpush1.bf16.msra.mxu0 0
        %1394 = vmatprep.subr.bf16.mxu0 0
        %1395 = vmatpush1.bf16.msra.mxu0 0
        %1396 = vmatprep.subr.bf16.mxu0 0
        %1397 = vmatpush1.bf16.msra.mxu0 0
        %1398 = vmatprep.subr.bf16.mxu0 0
        %1399 = vmatpush1.bf16.msra.mxu0 0
        %1400 = vmatprep.subr.bf16.mxu0 0
        %1401 = vmatpush1.bf16.msra.mxu0 0
        %1402 = vmatprep.subr.bf16.mxu0 %v1387
        %1403 = vmatpush1.bf16.msra.mxu0 %v1384
        %1404 = vmatprep.subr.bf16.mxu0 %v1369
        %1405 = vmatpush1.bf16.msra.mxu0 %v1368
        %1406 = vmatprep.subr.bf16.mxu0 %v1366
        %1407 = vmatpush1.bf16.msra.mxu0 %v1365
        %1408 = vmatprep.subr.bf16.mxu0 0
        %1409 = vmatpush2.bf16.msra.mxu0 0
        %1410 = vmatprep.subr.bf16.mxu0 0
        %1411 = vmatpush2.bf16.msra.mxu0 0
        %1412 = vmatprep.subr.bf16.mxu0 0
        %1413 = vmatpush2.bf16.msra.mxu0 0
        %1414 = vmatprep.subr.bf16.mxu0 0
        %1415 = vmatpush2.bf16.msra.mxu0 0
        %1416 = vmatprep.subr.bf16.mxu0 0
        %1417 = vmatpush2.bf16.msra.mxu0 0
        %1418 = vmatprep.subr.bf16.mxu0 0
        %1419 = vmatpush2.bf16.msra.mxu0 0
        %1420 = vmatprep.subr.bf16.mxu0 0
        %1421 = vmatpush2.bf16.msra.mxu0 0
        %1422 = vmatprep.subr.bf16.mxu0 0
        %1423 = vmatpush2.bf16.msra.mxu0 0
        %1424 = vmatprep.mubr.bf16.mxu0 0
        %1425 = vmatmul.mubr.bf16.gmra.mxu0 %v1381
        %v1426 = vpop.f32.mrf.mxu0
        %v1427 = vadd.f32 %v1338, %v1426
        %v1428 = vpop.f32.mrf.mxu0
        %v1429 = vadd.f32 %v1338, %v1428
        %v1430 = vpop.f32.mrf.mxu0
        %v1431 = vpop.f32.mrf.mxu0
        %1432 = vdwg.mxu0
        %1433 = vmatprep.subr.bf16.mxu0 0
        %1434 = vmatpush1.bf16.msra.mxu0 0
        %1435 = vmatprep.subr.bf16.mxu0 0
        %1436 = vmatpush1.bf16.msra.mxu0 0
        %1437 = vmatprep.subr.bf16.mxu0 0
        %1438 = vmatpush1.bf16.msra.mxu0 0
        %1439 = vmatprep.subr.bf16.mxu0 0
        %1440 = vmatpush1.bf16.msra.mxu0 0
        %1441 = vmatprep.subr.bf16.mxu0 0
        %1442 = vmatpush1.bf16.msra.mxu0 0
        %1443 = vmatprep.subr.bf16.mxu0 0
        %1444 = vmatpush1.bf16.msra.mxu0 %v1390
        %1445 = vmatprep.subr.bf16.mxu0 0
        %1446 = vmatpush1.bf16.msra.mxu0 %v1370
        %1447 = vmatprep.subr.bf16.mxu0 0
        %1448 = vmatpush1.bf16.msra.mxu0 %v1367
        %1449 = vmatprep.subr.bf16.mxu0 0
        %1450 = vmatpush2.bf16.msra.mxu0 0
        %1451 = vmatprep.subr.bf16.mxu0 0
        %1452 = vmatpush2.bf16.msra.mxu0 0
        %1453 = vmatprep.subr.bf16.mxu0 0
        %1454 = vmatpush2.bf16.msra.mxu0 0
        %1455 = vmatprep.subr.bf16.mxu0 0
        %1456 = vmatpush2.bf16.msra.mxu0 0
        %1457 = vmatprep.subr.bf16.mxu0 0
        %1458 = vmatpush2.bf16.msra.mxu0 0
        %1459 = vmatprep.subr.bf16.mxu0 0
        %1460 = vmatpush2.bf16.msra.mxu0 0
        %1461 = vmatprep.subr.bf16.mxu0 0
        %1462 = vmatpush2.bf16.msra.mxu0 0
        %1463 = vmatprep.subr.bf16.mxu0 0
        %1464 = vmatpush2.bf16.msra.mxu0 0
        %1465 = vmatprep.mubr.bf16.mxu0 0
        %1466 = vmatmul.mubr.bf16.gmra.mxu0 %v1381
        %v1467 = vpop.f32.mrf.mxu0
        %v1468 = vadd.f32 %v1338, %v1467
        %v1469 = vpop.f32.mrf.mxu0
        %v1470 = vpop.f32.mrf.mxu0
        %v1471 = vpop.f32.mrf.mxu0
        %1472 = vdwg.mxu0
        %vm1473 = vcmp.gt.f32.partialorder %v1427, 0.0
        %vm1474 = vcmp.gt.f32.partialorder %v1429, 0.0
        %vm1475 = vcmp.gt.f32.partialorder %v1468, 0.0
        %v1476 = vmul.f32 %v1427, 0.2
        %v1477 = vmul.f32 %v1429, 0.2
        %v1478 = vmul.f32 %v1468, 0.2
        %v1479 = vsel %vm1473, %v1427, %v1476
        %v1480 = vsel %vm1474, %v1429, %v1477
        %v1481 = vsel %vm1475, %v1468, %v1478
        %v1482 = vld [vmem:[%s5] sm:$0xf]
        %v1483 = vld [vmem:[#allocation2 + $0x2] sm:$0x3f]
        %v1485 = vcombine.high %v1483, %v1483
        %v1487 = vunpack.c.l.s4 1983009808
        %v1488 = vunpack.c.0.s8 %v1487
        %v1489 = vlaneseq
        %v1490 = vshrl.u32 %v1489, 7
        %v1491 = vsub.s32 %v1488, %v1490
        %v1492 = vrot.slane %v1483, %v1491
        %v1494 = vunpack.c.l.s4 1983009808
        %v1495 = vunpack.c.0.s8 %v1494
        %v1496 = vlaneseq
        %v1497 = vshrl.u32 %v1496, 7
        %v1498 = vsub.s32 %v1495, %v1497
        %v1499 = vrot.slane %v1485, %v1498
        %v1500 = vcombine.high %v1492, %v1492
        %vm1501 = vcmask 31744
        %v1503 = vsel %vm1501, %v1482, 0
        %v1506 = vsel %vm919, %v1492, 0
        %v1509 = vsel %vm919, %v1500, 0
        %v1512 = vsel %vm919, %v1499, 0
        %1514 = vmatprep.subr.bf16.mxu0 0
        %1515 = vmatpush1.bf16.msra.mxu0 0
        %1516 = vmatprep.subr.bf16.mxu0 0
        %1517 = vmatpush1.bf16.msra.mxu0 0
        %1518 = vmatprep.subr.bf16.mxu0 0
        %1519 = vmatpush1.bf16.msra.mxu0 0
        %1520 = vmatprep.subr.bf16.mxu0 0
        %1521 = vmatpush1.bf16.msra.mxu0 0
        %1522 = vmatprep.subr.bf16.mxu0 0
        %1523 = vmatpush1.bf16.msra.mxu0 0
        %1524 = vmatprep.subr.bf16.mxu0 0
        %1525 = vmatpush1.bf16.msra.mxu0 0
        %1526 = vmatprep.subr.bf16.mxu0 0
        %1527 = vmatpush1.bf16.msra.mxu0 0
        %1528 = vmatprep.subr.bf16.mxu0 %v1509
        %1529 = vmatpush1.bf16.msra.mxu0 %v1506
        %1530 = vmatprep.subr.bf16.mxu0 0
        %1531 = vmatpush2.bf16.msra.mxu0 0
        %1532 = vmatprep.subr.bf16.mxu0 0
        %1533 = vmatpush2.bf16.msra.mxu0 0
        %1534 = vmatprep.subr.bf16.mxu0 0
        %1535 = vmatpush2.bf16.msra.mxu0 0
        %1536 = vmatprep.subr.bf16.mxu0 0
        %1537 = vmatpush2.bf16.msra.mxu0 0
        %1538 = vmatprep.subr.bf16.mxu0 0
        %1539 = vmatpush2.bf16.msra.mxu0 0
        %1540 = vmatprep.subr.bf16.mxu0 0
        %1541 = vmatpush2.bf16.msra.mxu0 0
        %1542 = vmatprep.subr.bf16.mxu0 0
        %1543 = vmatpush2.bf16.msra.mxu0 0
        %1544 = vmatprep.subr.bf16.mxu0 0
        %1545 = vmatpush2.bf16.msra.mxu0 0
        %1546 = vmatprep.mubr.bf16.mxu0 0
        %1547 = vmatmul.mubr.bf16.gmra.mxu0 %v1503
        %v1548 = vpop.f32.mrf.mxu0
        %v1549 = vadd.f32 0.0, %v1548
        %v1550 = vpop.f32.mrf.mxu0
        %v1551 = vadd.f32 0.0, %v1550
        %v1552 = vpop.f32.mrf.mxu0
        %v1553 = vpop.f32.mrf.mxu0
        %1554 = vdwg.mxu0
        %1555 = vmatprep.subr.bf16.mxu0 0
        %1556 = vmatpush1.bf16.msra.mxu0 0
        %1557 = vmatprep.subr.bf16.mxu0 0
        %1558 = vmatpush1.bf16.msra.mxu0 0
        %1559 = vmatprep.subr.bf16.mxu0 0
        %1560 = vmatpush1.bf16.msra.mxu0 0
        %1561 = vmatprep.subr.bf16.mxu0 0
        %1562 = vmatpush1.bf16.msra.mxu0 0
        %1563 = vmatprep.subr.bf16.mxu0 0
        %1564 = vmatpush1.bf16.msra.mxu0 0
        %1565 = vmatprep.subr.bf16.mxu0 0
        %1566 = vmatpush1.bf16.msra.mxu0 0
        %1567 = vmatprep.subr.bf16.mxu0 0
        %1568 = vmatpush1.bf16.msra.mxu0 0
        %1569 = vmatprep.subr.bf16.mxu0 0
        %1570 = vmatpush1.bf16.msra.mxu0 %v1512
        %1571 = vmatprep.subr.bf16.mxu0 0
        %1572 = vmatpush2.bf16.msra.mxu0 0
        %1573 = vmatprep.subr.bf16.mxu0 0
        %1574 = vmatpush2.bf16.msra.mxu0 0
        %1575 = vmatprep.subr.bf16.mxu0 0
        %1576 = vmatpush2.bf16.msra.mxu0 0
        %1577 = vmatprep.subr.bf16.mxu0 0
        %1578 = vmatpush2.bf16.msra.mxu0 0
        %1579 = vmatprep.subr.bf16.mxu0 0
        %1580 = vmatpush2.bf16.msra.mxu0 0
        %1581 = vmatprep.subr.bf16.mxu0 0
        %1582 = vmatpush2.bf16.msra.mxu0 0
        %1583 = vmatprep.subr.bf16.mxu0 0
        %1584 = vmatpush2.bf16.msra.mxu0 0
        %1585 = vmatprep.subr.bf16.mxu0 0
        %1586 = vmatpush2.bf16.msra.mxu0 0
        %1587 = vmatprep.mubr.bf16.mxu0 0
        %1588 = vmatmul.mubr.bf16.gmra.mxu0 %v1503
        %v1589 = vpop.f32.mrf.mxu0
        %v1590 = vadd.f32 0.0, %v1589
        %v1591 = vpop.f32.mrf.mxu0
        %v1592 = vpop.f32.mrf.mxu0
        %v1593 = vpop.f32.mrf.mxu0
        %1594 = vdwg.mxu0
        %v1595 = vadd.f32 %v1479, %v1549
        %v1596 = vadd.f32 %v1480, %v1551
        %v1597 = vadd.f32 %v1481, %v1590
        %1601 = vrot.lane.b32.xlu0 %v1595, 110
        %v1602 = vpop.permute.xlu0 %1601
        %1603 = vrot.lane.b32.xlu0 %v1596, 110
        %v1604 = vpop.permute.xlu0 %1603
        %1605 = vrot.lane.b32.xlu0 %v1597, 110
        %v1606 = vpop.permute.xlu0 %1605
        %vm1607 = vcmask 900096
        %v1608 = vsel %vm1607, %v1602, %v1604
        %v1609 = vsel %vm1607, %v1604, %v1606
        %v1613 = vadd.f32 %v1595, %v1608
        %v1614 = vadd.f32 %v1596, %v1609
        %v1615 = vadd.f32 %v1597, %v1606
        %v1616 = vld [vmem:[%s8] sm:$0xf]
        %v1617 = vld [vmem:[%s8 + $0x4] sm:$0xf]
        %v1618 = vpack.c.bf16 %v1613, %v1613
        %v1619 = vld [vmem:[%s6] sm:$0xff]
        %1621 = vset.pattern.permute.xlu0 0
        %1622 = vperm.xlu0 %1621, %v1619
        %v1623 = vpop.permute.xlu0 %1622
        %1626 = vrot.lane.b32.xlu0 %v1618, 109
        %v1627 = vpop.permute.xlu0 %1626
        %v1630 = vunpack.c.l.b16 %v1616
        %v1631 = vunpack.c.l.b16 %v1617
        %v1632 = vpack.c.b16 %v1631, %v1630
        %vm1634 = vcmask 130048
        %v1636 = vsel %vm1634, %v1627, 0
        %1638 = vmatprep.subr.bf16.mxu0 0
        %1639 = vmatpush1.bf16.msra.mxu0 0
        %1640 = vmatprep.subr.bf16.mxu0 0
        %1641 = vmatpush1.bf16.msra.mxu0 0
        %1642 = vmatprep.subr.bf16.mxu0 0
        %1643 = vmatpush1.bf16.msra.mxu0 0
        %1644 = vmatprep.subr.bf16.mxu0 0
        %1645 = vmatpush1.bf16.msra.mxu0 0
        %1646 = vmatprep.subr.bf16.mxu0 0
        %1647 = vmatpush1.bf16.msra.mxu0 0
        %1648 = vmatprep.subr.bf16.mxu0 0
        %1649 = vmatpush1.bf16.msra.mxu0 0
        %1650 = vmatprep.subr.bf16.mxu0 0
        %1651 = vmatpush1.bf16.msra.mxu0 0
        %1652 = vmatprep.subr.bf16.mxu0 0
        %1653 = vmatpush1.bf16.msra.mxu0 %v1632
        %1654 = vmatprep.subr.bf16.mxu0 0
        %1655 = vmatpush2.bf16.msra.mxu0 0
        %1656 = vmatprep.subr.bf16.mxu0 0
        %1657 = vmatpush2.bf16.msra.mxu0 0
        %1658 = vmatprep.subr.bf16.mxu0 0
        %1659 = vmatpush2.bf16.msra.mxu0 0
        %1660 = vmatprep.subr.bf16.mxu0 0
        %1661 = vmatpush2.bf16.msra.mxu0 0
        %1662 = vmatprep.subr.bf16.mxu0 0
        %1663 = vmatpush2.bf16.msra.mxu0 0
        %1664 = vmatprep.subr.bf16.mxu0 0
        %1665 = vmatpush2.bf16.msra.mxu0 0
        %1666 = vmatprep.subr.bf16.mxu0 0
        %1667 = vmatpush2.bf16.msra.mxu0 0
        %1668 = vmatprep.subr.bf16.mxu0 0
        %1669 = vmatpush2.bf16.msra.mxu0 0
        %1670 = vmatprep.mubr.bf16.mxu0 0
        %1671 = vmatmul.mubr.bf16.gmra.mxu0 %v1636
        %v1672 = vpop.f32.mrf.mxu0
        %v1673 = vadd.f32 %v1623, %v1672
        %v1674 = vpop.f32.mrf.mxu0
        %v1675 = vpop.f32.mrf.mxu0
        %v1676 = vpop.f32.mrf.mxu0
        %1677 = vdwg.mxu0
        %v1678 = vmul.f32 %v1673, 0.70710677
        %v1679 = vpack.c.bf16 %v1678, %v1678
        %vm1680 = vcmask 60416
        %1681 = vst.msk [vmem:[%s325] sm:$0xf] %vm1680, %v1679
        %v1682 = vld [vmem:[%s6] sm:$0xff]
        %1684 = vset.pattern.permute.xlu0 0
        %1685 = vperm.xlu0 %1684, %v1682
        %v1686 = vpop.permute.xlu0 %1685
        %1688 = vrot.lane.b32.xlu0 %v1618, 73
        %v1689 = vpop.permute.xlu0 %1688
        %v1691 = vsel %vm1634, %v1689, 0
        %1693 = vmatprep.subr.bf16.mxu0 0
        %1694 = vmatpush1.bf16.msra.mxu0 0
        %1695 = vmatprep.subr.bf16.mxu0 0
        %1696 = vmatpush1.bf16.msra.mxu0 0
        %1697 = vmatprep.subr.bf16.mxu0 0
        %1698 = vmatpush1.bf16.msra.mxu0 0
        %1699 = vmatprep.subr.bf16.mxu0 0
        %1700 = vmatpush1.bf16.msra.mxu0 0
        %1701 = vmatprep.subr.bf16.mxu0 0
        %1702 = vmatpush1.bf16.msra.mxu0 0
        %1703 = vmatprep.subr.bf16.mxu0 0
        %1704 = vmatpush1.bf16.msra.mxu0 0
        %1705 = vmatprep.subr.bf16.mxu0 0
        %1706 = vmatpush1.bf16.msra.mxu0 0
        %1707 = vmatprep.subr.bf16.mxu0 0
        %1708 = vmatpush1.bf16.msra.mxu0 %v1632
        %1709 = vmatprep.subr.bf16.mxu0 0
        %1710 = vmatpush2.bf16.msra.mxu0 0
        %1711 = vmatprep.subr.bf16.mxu0 0
        %1712 = vmatpush2.bf16.msra.mxu0 0
        %1713 = vmatprep.subr.bf16.mxu0 0
        %1714 = vmatpush2.bf16.msra.mxu0 0
        %1715 = vmatprep.subr.bf16.mxu0 0
        %1716 = vmatpush2.bf16.msra.mxu0 0
        %1717 = vmatprep.subr.bf16.mxu0 0
        %1718 = vmatpush2.bf16.msra.mxu0 0
        %1719 = vmatprep.subr.bf16.mxu0 0
        %1720 = vmatpush2.bf16.msra.mxu0 0
        %1721 = vmatprep.subr.bf16.mxu0 0
        %1722 = vmatpush2.bf16.msra.mxu0 0
        %1723 = vmatprep.subr.bf16.mxu0 0
        %1724 = vmatpush2.bf16.msra.mxu0 0
        %1725 = vmatprep.mubr.bf16.mxu0 0
        %1726 = vmatmul.mubr.bf16.gmra.mxu0 %v1691
        %v1727 = vpop.f32.mrf.mxu0
        %v1728 = vadd.f32 %v1686, %v1727
        %v1729 = vpop.f32.mrf.mxu0
        %v1730 = vpop.f32.mrf.mxu0
        %v1731 = vpop.f32.mrf.mxu0
        %1732 = vdwg.mxu0
        %v1733 = vmul.f32 %v1728, 0.70710677
        %v1734 = vpack.c.bf16 %v1733, %v1733
        %v1736 = vunpack.c.l.b16 %v1734
        %v1737 = vpack.c.b16 %v1736, %v1736
        %1738 = vrot.lane.b32.xlu0 %v1737, 8
        %v1739 = vpop.permute.xlu0 %1738
        %vm1741 = vcmask 126016
        %1742 = vst.msk [vmem:[%s325] sm:$0xf] %vm1741, %v1739
        %v1743 = vld [vmem:[%s6] sm:$0xff]
        %1745 = vset.pattern.permute.xlu0 0
        %1746 = vperm.xlu0 %1745, %v1743
        %v1747 = vpop.permute.xlu0 %1746
        %1749 = vrot.lane.b32.xlu0 %v1618, 37
        %v1750 = vpop.permute.xlu0 %1749
        %v1752 = vsel %vm1634, %v1750, 0
        %1754 = vmatprep.subr.bf16.mxu0 0
        %1755 = vmatpush1.bf16.msra.mxu0 0
        %1756 = vmatprep.subr.bf16.mxu0 0
        %1757 = vmatpush1.bf16.msra.mxu0 0
        %1758 = vmatprep.subr.bf16.mxu0 0
        %1759 = vmatpush1.bf16.msra.mxu0 0
        %1760 = vmatprep.subr.bf16.mxu0 0
        %1761 = vmatpush1.bf16.msra.mxu0 0
        %1762 = vmatprep.subr.bf16.mxu0 0
        %1763 = vmatpush1.bf16.msra.mxu0 0
        %1764 = vmatprep.subr.bf16.mxu0 0
        %1765 = vmatpush1.bf16.msra.mxu0 0
        %1766 = vmatprep.subr.bf16.mxu0 0
        %1767 = vmatpush1.bf16.msra.mxu0 0
        %1768 = vmatprep.subr.bf16.mxu0 0
        %1769 = vmatpush1.bf16.msra.mxu0 %v1632
        %1770 = vmatprep.subr.bf16.mxu0 0
        %1771 = vmatpush2.bf16.msra.mxu0 0
        %1772 = vmatprep.subr.bf16.mxu0 0
        %1773 = vmatpush2.bf16.msra.mxu0 0
        %1774 = vmatprep.subr.bf16.mxu0 0
        %1775 = vmatpush2.bf16.msra.mxu0 0
        %1776 = vmatprep.subr.bf16.mxu0 0
        %1777 = vmatpush2.bf16.msra.mxu0 0
        %1778 = vmatprep.subr.bf16.mxu0 0
        %1779 = vmatpush2.bf16.msra.mxu0 0
        %1780 = vmatprep.subr.bf16.mxu0 0
        %1781 = vmatpush2.bf16.msra.mxu0 0
        %1782 = vmatprep.subr.bf16.mxu0 0
        %1783 = vmatpush2.bf16.msra.mxu0 0
        %1784 = vmatprep.subr.bf16.mxu0 0
        %1785 = vmatpush2.bf16.msra.mxu0 0
        %1786 = vmatprep.mubr.bf16.mxu0 0
        %1787 = vmatmul.mubr.bf16.gmra.mxu0 %v1752
        %v1788 = vpop.f32.mrf.mxu0
        %v1789 = vadd.f32 %v1747, %v1788
        %v1790 = vpop.f32.mrf.mxu0
        %v1791 = vpop.f32.mrf.mxu0
        %v1792 = vpop.f32.mrf.mxu0
        %1793 = vdwg.mxu0
        %v1794 = vmul.f32 %v1789, 0.70710677
        %v1795 = vpack.c.bf16 %v1794, %v1794
        %v1797 = vunpack.c.l.b16 %v1795
        %v1798 = vpack.c.b16 %v1797, %v1797
        %1799 = vrot.lane.b32.xlu0 %v1798, 16
        %v1800 = vpop.permute.xlu0 %1799
        %vm1802 = vcmask 191616
        %1803 = vst.msk [vmem:[%s325] sm:$0xf] %vm1802, %v1800
        %v1804 = vpack.c.bf16 %v1614, %v1614
        %v1805 = vld [vmem:[%s6] sm:$0xff]
        %1807 = vset.pattern.permute.xlu0 0
        %1808 = vperm.xlu0 %1807, %v1805
        %v1809 = vpop.permute.xlu0 %1808
        %1812 = vrot.lane.b32.xlu0 %v1618, 1
        %v1813 = vpop.permute.xlu0 %1812
        %1814 = vrot.lane.b32.xlu0 %v1804, 1
        %v1815 = vpop.permute.xlu0 %1814
        %v1816 = vsel %vm710, %v1813, %v1815
        %v1818 = vsel %vm1634, %v1816, 0
        %1820 = vmatprep.subr.bf16.mxu0 0
        %1821 = vmatpush1.bf16.msra.mxu0 0
        %1822 = vmatprep.subr.bf16.mxu0 0
        %1823 = vmatpush1.bf16.msra.mxu0 0
        %1824 = vmatprep.subr.bf16.mxu0 0
        %1825 = vmatpush1.bf16.msra.mxu0 0
        %1826 = vmatprep.subr.bf16.mxu0 0
        %1827 = vmatpush1.bf16.msra.mxu0 0
        %1828 = vmatprep.subr.bf16.mxu0 0
        %1829 = vmatpush1.bf16.msra.mxu0 0
        %1830 = vmatprep.subr.bf16.mxu0 0
        %1831 = vmatpush1.bf16.msra.mxu0 0
        %1832 = vmatprep.subr.bf16.mxu0 0
        %1833 = vmatpush1.bf16.msra.mxu0 0
        %1834 = vmatprep.subr.bf16.mxu0 0
        %1835 = vmatpush1.bf16.msra.mxu0 %v1632
        %1836 = vmatprep.subr.bf16.mxu0 0
        %1837 = vmatpush2.bf16.msra.mxu0 0
        %1838 = vmatprep.subr.bf16.mxu0 0
        %1839 = vmatpush2.bf16.msra.mxu0 0
        %1840 = vmatprep.subr.bf16.mxu0 0
        %1841 = vmatpush2.bf16.msra.mxu0 0
        %1842 = vmatprep.subr.bf16.mxu0 0
        %1843 = vmatpush2.bf16.msra.mxu0 0
        %1844 = vmatprep.subr.bf16.mxu0 0
        %1845 = vmatpush2.bf16.msra.mxu0 0
        %1846 = vmatprep.subr.bf16.mxu0 0
        %1847 = vmatpush2.bf16.msra.mxu0 0
        %1848 = vmatprep.subr.bf16.mxu0 0
        %1849 = vmatpush2.bf16.msra.mxu0 0
        %1850 = vmatprep.subr.bf16.mxu0 0
        %1851 = vmatpush2.bf16.msra.mxu0 0
        %1852 = vmatprep.mubr.bf16.mxu0 0
        %1853 = vmatmul.mubr.bf16.gmra.mxu0 %v1818
        %v1854 = vpop.f32.mrf.mxu0
        %v1855 = vadd.f32 %v1809, %v1854
        %v1856 = vpop.f32.mrf.mxu0
        %v1857 = vpop.f32.mrf.mxu0
        %v1858 = vpop.f32.mrf.mxu0
        %1859 = vdwg.mxu0
        %v1860 = vmul.f32 %v1855, 0.70710677
        %v1861 = vpack.c.bf16 %v1860, %v1860
        %v1863 = vunpack.c.l.b16 %v1861
        %v1864 = vpack.c.b16 %v1863, %v1863
        %1865 = vrot.lane.b32.xlu0 %v1864, 24
        %v1866 = vpop.permute.xlu0 %1865
        %vm1868 = vcmask 257216
        %1869 = vst.msk [vmem:[%s325] sm:$0xf] %vm1868, %v1866
        %v1870 = vld [vmem:[%s6] sm:$0xff]
        %1872 = vset.pattern.permute.xlu0 0
        %1873 = vperm.xlu0 %1872, %v1870
        %v1874 = vpop.permute.xlu0 %1873
        %1876 = vrot.lane.b32.xlu0 %v1804, 93
        %v1877 = vpop.permute.xlu0 %1876
        %v1879 = vsel %vm1634, %v1877, 0
        %1881 = vmatprep.subr.bf16.mxu0 0
        %1882 = vmatpush1.bf16.msra.mxu0 0
        %1883 = vmatprep.subr.bf16.mxu0 0
        %1884 = vmatpush1.bf16.msra.mxu0 0
        %1885 = vmatprep.subr.bf16.mxu0 0
        %1886 = vmatpush1.bf16.msra.mxu0 0
        %1887 = vmatprep.subr.bf16.mxu0 0
        %1888 = vmatpush1.bf16.msra.mxu0 0
        %1889 = vmatprep.subr.bf16.mxu0 0
        %1890 = vmatpush1.bf16.msra.mxu0 0
        %1891 = vmatprep.subr.bf16.mxu0 0
        %1892 = vmatpush1.bf16.msra.mxu0 0
        %1893 = vmatprep.subr.bf16.mxu0 0
        %1894 = vmatpush1.bf16.msra.mxu0 0
        %1895 = vmatprep.subr.bf16.mxu0 0
        %1896 = vmatpush1.bf16.msra.mxu0 %v1632
        %1897 = vmatprep.subr.bf16.mxu0 0
        %1898 = vmatpush2.bf16.msra.mxu0 0
        %1899 = vmatprep.subr.bf16.mxu0 0
        %1900 = vmatpush2.bf16.msra.mxu0 0
        %1901 = vmatprep.subr.bf16.mxu0 0
        %1902 = vmatpush2.bf16.msra.mxu0 0
        %1903 = vmatprep.subr.bf16.mxu0 0
        %1904 = vmatpush2.bf16.msra.mxu0 0
        %1905 = vmatprep.subr.bf16.mxu0 0
        %1906 = vmatpush2.bf16.msra.mxu0 0
        %1907 = vmatprep.subr.bf16.mxu0 0
        %1908 = vmatpush2.bf16.msra.mxu0 0
        %1909 = vmatprep.subr.bf16.mxu0 0
        %1910 = vmatpush2.bf16.msra.mxu0 0
        %1911 = vmatprep.subr.bf16.mxu0 0
        %1912 = vmatpush2.bf16.msra.mxu0 0
        %1913 = vmatprep.mubr.bf16.mxu0 0
        %1914 = vmatmul.mubr.bf16.gmra.mxu0 %v1879
        %v1915 = vpop.f32.mrf.mxu0
        %v1916 = vadd.f32 %v1874, %v1915
        %v1917 = vpop.f32.mrf.mxu0
        %v1918 = vpop.f32.mrf.mxu0
        %v1919 = vpop.f32.mrf.mxu0
        %1920 = vdwg.mxu0
        %v1921 = vmul.f32 %v1916, 0.70710677
        %v1922 = vpack.c.bf16 %v1921, %v1921
        %v1924 = vunpack.c.l.b16 %v1922
        %v1925 = vpack.c.b16 %v1924, %v1924
        %1926 = vrot.lane.b32.xlu0 %v1925, 32
        %v1927 = vpop.permute.xlu0 %1926
        %vm1929 = vcmask 322816
        %1930 = vst.msk [vmem:[%s325] sm:$0xf] %vm1929, %v1927
        %v1931 = vld [vmem:[%s6] sm:$0xff]
        %1933 = vset.pattern.permute.xlu0 0
        %1934 = vperm.xlu0 %1933, %v1931
        %v1935 = vpop.permute.xlu0 %1934
        %1937 = vrot.lane.b32.xlu0 %v1804, 57
        %v1938 = vpop.permute.xlu0 %1937
        %v1940 = vsel %vm1634, %v1938, 0
        %1942 = vmatprep.subr.bf16.mxu0 0
        %1943 = vmatpush1.bf16.msra.mxu0 0
        %1944 = vmatprep.subr.bf16.mxu0 0
        %1945 = vmatpush1.bf16.msra.mxu0 0
        %1946 = vmatprep.subr.bf16.mxu0 0
        %1947 = vmatpush1.bf16.msra.mxu0 0
        %1948 = vmatprep.subr.bf16.mxu0 0
        %1949 = vmatpush1.bf16.msra.mxu0 0
        %1950 = vmatprep.subr.bf16.mxu0 0
        %1951 = vmatpush1.bf16.msra.mxu0 0
        %1952 = vmatprep.subr.bf16.mxu0 0
        %1953 = vmatpush1.bf16.msra.mxu0 0
        %1954 = vmatprep.subr.bf16.mxu0 0
        %1955 = vmatpush1.bf16.msra.mxu0 0
        %1956 = vmatprep.subr.bf16.mxu0 0
        %1957 = vmatpush1.bf16.msra.mxu0 %v1632
        %1958 = vmatprep.subr.bf16.mxu0 0
        %1959 = vmatpush2.bf16.msra.mxu0 0
        %1960 = vmatprep.subr.bf16.mxu0 0
        %1961 = vmatpush2.bf16.msra.mxu0 0
        %1962 = vmatprep.subr.bf16.mxu0 0
        %1963 = vmatpush2.bf16.msra.mxu0 0
        %1964 = vmatprep.subr.bf16.mxu0 0
        %1965 = vmatpush2.bf16.msra.mxu0 0
        %1966 = vmatprep.subr.bf16.mxu0 0
        %1967 = vmatpush2.bf16.msra.mxu0 0
        %1968 = vmatprep.subr.bf16.mxu0 0
        %1969 = vmatpush2.bf16.msra.mxu0 0
        %1970 = vmatprep.subr.bf16.mxu0 0
        %1971 = vmatpush2.bf16.msra.mxu0 0
        %1972 = vmatprep.subr.bf16.mxu0 0
        %1973 = vmatpush2.bf16.msra.mxu0 0
        %1974 = vmatprep.mubr.bf16.mxu0 0
        %1975 = vmatmul.mubr.bf16.gmra.mxu0 %v1940
        %v1976 = vpop.f32.mrf.mxu0
        %v1977 = vadd.f32 %v1935, %v1976
        %v1978 = vpop.f32.mrf.mxu0
        %v1979 = vpop.f32.mrf.mxu0
        %v1980 = vpop.f32.mrf.mxu0
        %1981 = vdwg.mxu0
        %v1982 = vmul.f32 %v1977, 0.70710677
        %v1983 = vpack.c.bf16 %v1982, %v1982
        %v1985 = vunpack.c.l.b16 %v1983
        %v1986 = vpack.c.b16 %v1985, %v1985
        %1987 = vrot.lane.b32.xlu0 %v1986, 40
        %v1988 = vpop.permute.xlu0 %1987
        %vm1990 = vcmask 388416
        %1991 = vst.msk [vmem:[%s325] sm:$0xf] %vm1990, %v1988
        %v1992 = vld [vmem:[%s6] sm:$0xff]
        %1994 = vset.pattern.permute.xlu0 0
        %1995 = vperm.xlu0 %1994, %v1992
        %v1996 = vpop.permute.xlu0 %1995
        %1998 = vrot.lane.b32.xlu0 %v1804, 21
        %v1999 = vpop.permute.xlu0 %1998
        %v2001 = vsel %vm1634, %v1999, 0
        %2003 = vmatprep.subr.bf16.mxu0 0
        %2004 = vmatpush1.bf16.msra.mxu0 0
        %2005 = vmatprep.subr.bf16.mxu0 0
        %2006 = vmatpush1.bf16.msra.mxu0 0
        %2007 = vmatprep.subr.bf16.mxu0 0
        %2008 = vmatpush1.bf16.msra.mxu0 0
        %2009 = vmatprep.subr.bf16.mxu0 0
        %2010 = vmatpush1.bf16.msra.mxu0 0
        %2011 = vmatprep.subr.bf16.mxu0 0
        %2012 = vmatpush1.bf16.msra.mxu0 0
        %2013 = vmatprep.subr.bf16.mxu0 0
        %2014 = vmatpush1.bf16.msra.mxu0 0
        %2015 = vmatprep.subr.bf16.mxu0 0
        %2016 = vmatpush1.bf16.msra.mxu0 0
        %2017 = vmatprep.subr.bf16.mxu0 0
        %2018 = vmatpush1.bf16.msra.mxu0 %v1632
        %2019 = vmatprep.subr.bf16.mxu0 0
        %2020 = vmatpush2.bf16.msra.mxu0 0
        %2021 = vmatprep.subr.bf16.mxu0 0
        %2022 = vmatpush2.bf16.msra.mxu0 0
        %2023 = vmatprep.subr.bf16.mxu0 0
        %2024 = vmatpush2.bf16.msra.mxu0 0
        %2025 = vmatprep.subr.bf16.mxu0 0
        %2026 = vmatpush2.bf16.msra.mxu0 0
        %2027 = vmatprep.subr.bf16.mxu0 0
        %2028 = vmatpush2.bf16.msra.mxu0 0
        %2029 = vmatprep.subr.bf16.mxu0 0
        %2030 = vmatpush2.bf16.msra.mxu0 0
        %2031 = vmatprep.subr.bf16.mxu0 0
        %2032 = vmatpush2.bf16.msra.mxu0 0
        %2033 = vmatprep.subr.bf16.mxu0 0
        %2034 = vmatpush2.bf16.msra.mxu0 0
        %2035 = vmatprep.mubr.bf16.mxu0 0
        %2036 = vmatmul.mubr.bf16.gmra.mxu0 %v2001
        %v2037 = vpop.f32.mrf.mxu0
        %v2038 = vadd.f32 %v1996, %v2037
        %v2039 = vpop.f32.mrf.mxu0
        %v2040 = vpop.f32.mrf.mxu0
        %v2041 = vpop.f32.mrf.mxu0
        %2042 = vdwg.mxu0
        %v2043 = vmul.f32 %v2038, 0.70710677
        %v2044 = vpack.c.bf16 %v2043, %v2043
        %v2046 = vunpack.c.l.b16 %v2044
        %v2047 = vpack.c.b16 %v2046, %v2046
        %2048 = vrot.lane.b32.xlu0 %v2047, 48
        %v2049 = vpop.permute.xlu0 %2048
        %vm2051 = vcmask 454016
        %2052 = vst.msk [vmem:[%s325] sm:$0xf] %vm2051, %v2049
        %v2053 = vpack.c.bf16 %v1615, %v1615
        %v2054 = vld [vmem:[%s6] sm:$0xff]
        %2056 = vset.pattern.permute.xlu0 0
        %2057 = vperm.xlu0 %2056, %v2054
        %v2058 = vpop.permute.xlu0 %2057
        %2061 = vrot.lane.b32.xlu0 %v2053, 113
        %v2062 = vpop.permute.xlu0 %2061
        %v2064 = vsel %vm1634, %v2062, 0
        %2066 = vmatprep.subr.bf16.mxu0 0
        %2067 = vmatpush1.bf16.msra.mxu0 0
        %2068 = vmatprep.subr.bf16.mxu0 0
        %2069 = vmatpush1.bf16.msra.mxu0 0
        %2070 = vmatprep.subr.bf16.mxu0 0
        %2071 = vmatpush1.bf16.msra.mxu0 0
        %2072 = vmatprep.subr.bf16.mxu0 0
        %2073 = vmatpush1.bf16.msra.mxu0 0
        %2074 = vmatprep.subr.bf16.mxu0 0
        %2075 = vmatpush1.bf16.msra.mxu0 0
        %2076 = vmatprep.subr.bf16.mxu0 0
        %2077 = vmatpush1.bf16.msra.mxu0 0
        %2078 = vmatprep.subr.bf16.mxu0 0
        %2079 = vmatpush1.bf16.msra.mxu0 0
        %2080 = vmatprep.subr.bf16.mxu0 0
        %2081 = vmatpush1.bf16.msra.mxu0 %v1632
        %2082 = vmatprep.subr.bf16.mxu0 0
        %2083 = vmatpush2.bf16.msra.mxu0 0
        %2084 = vmatprep.subr.bf16.mxu0 0
        %2085 = vmatpush2.bf16.msra.mxu0 0
        %2086 = vmatprep.subr.bf16.mxu0 0
        %2087 = vmatpush2.bf16.msra.mxu0 0
        %2088 = vmatprep.subr.bf16.mxu0 0
        %2089 = vmatpush2.bf16.msra.mxu0 0
        %2090 = vmatprep.subr.bf16.mxu0 0
        %2091 = vmatpush2.bf16.msra.mxu0 0
        %2092 = vmatprep.subr.bf16.mxu0 0
        %2093 = vmatpush2.bf16.msra.mxu0 0
        %2094 = vmatprep.subr.bf16.mxu0 0
        %2095 = vmatpush2.bf16.msra.mxu0 0
        %2096 = vmatprep.subr.bf16.mxu0 0
        %2097 = vmatpush2.bf16.msra.mxu0 0
        %2098 = vmatprep.mubr.bf16.mxu0 0
        %2099 = vmatmul.mubr.bf16.gmra.mxu0 %v2064
        %v2100 = vpop.f32.mrf.mxu0
        %v2101 = vadd.f32 %v2058, %v2100
        %v2102 = vpop.f32.mrf.mxu0
        %v2103 = vpop.f32.mrf.mxu0
        %v2104 = vpop.f32.mrf.mxu0
        %2105 = vdwg.mxu0
        %v2106 = vmul.f32 %v2101, 0.70710677
        %v2107 = vpack.c.bf16 %v2106, %v2106
        %v2109 = vunpack.c.l.b16 %v2107
        %v2110 = vpack.c.b16 %v2109, %v2109
        %2111 = vrot.lane.b32.xlu0 %v2110, 56
        %v2112 = vpop.permute.xlu0 %2111
        %vm2114 = vcmask 519616
        %2115 = vst.msk [vmem:[%s325] sm:$0xf] %vm2114, %v2112
        %s2116 = sand.u32 %s225, 1
        %s2117 = scalar_lea.sflag [#allocation6], %s2116
        %s2118 = sand.u32 %s225, 1
        %s2119 = smul.addr %s2118, 4
        %s2120 = scalar_lea.vmem [#allocation5], %s2119
        // Predicated region
        $region61: #{tpu_custom_call.1} parent=55 // pred_check
          %p2121 = pneg %p235
        $region62: #{tpu_custom_call.1} parent=55 // pred_check_branch
          %2123 = sbr.rel (%p2121) target = $region64
        $region63: #{tpu_custom_call.1} parent=55 // pred_region
          %s2125 = ssub.s32 64, 64
          %2126 = vsyncadd %s2117, %s2125
          %s2127 = smul.addr %s23, 64
          %s2128 = scalar_lea.hbm %s9, %s2127
          %s2130 = sshll.u32 %s2120, 4
          %s2131 = int_to_ptr.vmem [resolvable:$true] %s2130
          %2133 = dma.vmem_to_hbm [thread:$0]  %s2131, 64, %s2128, %s2117
        $region64: #{tpu_custom_call.1} parent=55 // pred_fallthru
          _
      $region56: #{tpu_custom_call.1} parent=5 // pred_fallthru
        _
      %p2134 = scmp.le.s32.totalorder 2, %s18
      // Predicated region
      $region65: #{tpu_custom_call.1} parent=5 // pred_check
        %p2135 = pneg %p2134
      $region66: #{tpu_custom_call.1} parent=5 // pred_check_branch
        %2137 = sbr.rel (%p2135) target = $region68
      $region67: #{tpu_custom_call.1} parent=5 // pred_region
        %s2138 = ssub.s32 %s18, 2
        // Predicated region
        $region69: #{tpu_custom_call.1} parent=67 // pred_check
          %p2139 = pneg %p241
        $region70: #{tpu_custom_call.1} parent=67 // pred_check_branch
          %2141 = sbr.rel (%p2139) target = $region72
        $region71: #{tpu_custom_call.1} parent=67 // pred_region
          %s2142 = sand.u32 %s226, 1
          %s2143 = scalar_lea.sflag [#allocation6], %s2142
          %s2144 = sand.u32 %s226, 1
          %s2145 = smul.addr %s2144, 4
          %s2146 = scalar_lea.vmem [#allocation5], %s2145
          %2147 = dma.done %s2143, 64
        $region72: #{tpu_custom_call.1} parent=67 // pred_fallthru
          _
      $region68: #{tpu_custom_call.1} parent=5 // pred_fallthru
        _
    $region6: #{tpu_custom_call.1} parent=1 // loop_footer
      %s22 = sadd.s32 1, %s18
    $region7: #{tpu_custom_call.1} parent=1 // loop_footer_branch
      %17 = sbr.rel target = $region3
    $region8: #{tpu_custom_call.1} parent=1 // loop_exit
      _
    %2148 = vsyncpa [#allocation6], 1
    %s2149 = scalar_lea.sflag [#allocation6], 1
    %2150 = vsyncpa %s2149, 1

// kernel: tpu_custom_call.1
$region0: #{tpu_custom_call.1}
  #allocation0 [shape = 'u32[]', space=smem, size = 0x4, offset = 0x4, fixed_abs, tag = 'smem constant byte address 0x4 - core index']
  #allocation1 [shape = 'u32[144,128]{1,0:T(1,128)}', space=vmem, size = 0x12000, scoped, tag = 'internal scratch']
  #allocation2 [shape = 'bf16[4,512]{1,0:T(4,128)(2,1)}', space=vmem, size = 0x1000, scoped, tag = 'scratch operand']
  #allocation3 [shape = 'bf16[4,512]{1,0:T(4,128)(2,1)}', space=vmem, size = 0x1000, scoped, tag = 'scratch operand']
  #allocation4 [shape = 'bf16[36,324]{1,0:T(8,128)(2,1)}', space=vmem, size = 0x7800, scoped, tag = 'scratch operand']
  %s0 = inlined_call_operand.vmem [shape: f32[2,4,256], index: 0, kind: input, shape index: {}]
  %s1 = inlined_call_operand.vmem [shape: bf16[4,36], index: 1, kind: input, shape index: {}]
  %s2 = inlined_call_operand.vmem [shape: f32[4,1], index: 2, kind: input, shape index: {}]
  %s3 = inlined_call_operand.vmem [shape: bf16[8,36], index: 3, kind: input, shape index: {}]
  %s4 = inlined_call_operand.vmem [shape: f32[8,1], index: 4, kind: input, shape index: {}]
  %s5 = inlined_call_operand.vmem [shape: bf16[8,4], index: 5, kind: input, shape index: {}]
  %s6 = inlined_call_operand.vmem [shape: f32[8,1], index: 6, kind: input, shape index: {}]
  %s7 = inlined_call_operand.vmem [shape: f32[1,324], index: 7, kind: input, shape index: {}]
  %s8 = inlined_call_operand.vmem [shape: bf16[16,8], index: 8, kind: input, shape index: {}]
  %s9 = inlined_call_operand.hbm [shape: bf16[2,8,64], index: 9, kind: output, shape index: {}]
  %s10 = sld [smem:[#allocation0]]
  $region73: #{tpu_custom_call.1} parent=0
    _
  %s12 = ssub.s32 1, %s10
  %s13 = scalar_select 0, %s12, %s10
  $region1: #{tpu_custom_call.1} parent=0
    #allocation5 [shape = 'u8[4096]{0}', space=vmem, size = 0x1000, scoped, tag = 'output window, operand 0']
    #allocation6 [shape = 's32[2]{0}', space=sflag, size = 0x8, scoped, tag = 'scoped memory for tpu_custom_call.1']
    %14 = vsyncpa [#allocation6], 0
    %s15 = scalar_lea.sflag [#allocation6], 1
    %16 = vsyncpa %s15, 0
    loop: start=0, step=1, limit=4
    $region2: #{tpu_custom_call.1} parent=1 // loop_pre_header
      _
    $region3: #{tpu_custom_call.1} parent=1 // loop_header
      %s18 = sphi 0, %s22
      %p19 = scmp.ge.s32.totalorder %s18, 4
      %s28 = sphi 0, %s30
      %s31 = sphi 0, %s28
      %s32 = sphi 0, %s31
      %s48 = sphi 0, %s32
      %s52 = sphi 0, %s52
      %s54 = sphi 0, %s52
      %s55 = sphi 0, %s54
      %s69 = sphi 0, %s55
      %s73 = sphi 0, %s73
      %s75 = sphi 0, %s73
      %s76 = sphi 0, %s75
      %s90 = sphi 0, %s76
      %s94 = sphi 0, %s94
      %s96 = sphi 0, %s94
      %s97 = sphi 0, %s96
      %s111 = sphi 0, %s97
      %s115 = sphi 0, %s115
      %s117 = sphi 0, %s115
      %s118 = sphi 0, %s117
      %s132 = sphi 0, %s118
      %s136 = sphi 0, %s136
      %s138 = sphi 0, %s136
      %s139 = sphi 0, %s138
      %s153 = sphi 0, %s139
      %s157 = sphi 0, %s157
      %s159 = sphi 0, %s157
      %s160 = sphi 0, %s159
      %s174 = sphi 0, %s160
      %s178 = sphi 0, %s178
      %s180 = sphi 0, %s178
      %s181 = sphi 0, %s180
      %s195 = sphi 0, %s181
      %s199 = sphi 0, %s199
      %s201 = sphi 0, %s199
      %s202 = sphi 0, %s201
      %s216 = sphi 0, %s202
      %s222 = sphi 0, %s224
      %s225 = sphi 0, %s222
      %s226 = sphi 0, %s225
      %s242 = sphi 0, %s226
    $region4: #{tpu_custom_call.1} parent=1 // loop_header_branch
      %21 = sbr.rel (%p19) target = $region8
    $region5: #{tpu_custom_call.1} parent=1 // loop_body
      %s23 = ssub.s32 %s18, 1
      %s24 = ssub.s32 %s18, 2
      %s25 = sadd.s32 %s18, 1
      %s26 = ssub.s32 %s18, %s25
      %p27 = scmp.eq.s32.totalorder %s26, 0
      %s29 = sadd.s32 %s28, 1
      %s30 = scalar_select %p27, %s28, %s29
      %p33 = pneg %p27
      %p34 = scmp.eq.s32.totalorder %s18, 1
      %p35 = por %p33, %p34
      %p36 = scmp.ne.s32.totalorder %s28, %s31
      %p37 = scmp.eq.s32.totalorder %s18, 0
      %p38 = por %p36, %p37
      %p39 = scmp.ne.s32.totalorder %s28, %s31
      %p40 = scmp.eq.s32.totalorder %s23, 1
      %p41 = por %p39, %p40
      %p42 = scmp.ne.s32.totalorder %s31, %s32
      %p43 = scmp.eq.s32.totalorder %s23, 0
      %p44 = por %p42, %p43
      %p45 = scmp.ne.s32.totalorder %s31, %s32
      %p46 = scmp.eq.s32.totalorder %s24, 1
      %p47 = por %p45, %p46
      %p49 = scmp.ne.s32.totalorder %s32, %s48
      %p50 = scmp.eq.s32.totalorder %s24, 0
      %p51 = por %p49, %p50
      %s53 = sadd.s32 %s52, 1
      %p56 = scmp.eq.s32.totalorder %s18, 1
      %p57 = scmp.ne.s32.totalorder %s52, %s54
      %p58 = scmp.eq.s32.totalorder %s18, 0
      %p59 = por %p57, %p58
      %p60 = scmp.ne.s32.totalorder %s52, %s54
      %p61 = scmp.eq.s32.totalorder %s23, 1
      %p62 = por %p60, %p61
      %p63 = scmp.ne.s32.totalorder %s54, %s55
      %p64 = scmp.eq.s32.totalorder %s23, 0
      %p65 = por %p63, %p64
      %p66 = scmp.ne.s32.totalorder %s54, %s55
      %p67 = scmp.eq.s32.totalorder %s24, 1
      %p68 = por %p66, %p67
      %p70 = scmp.ne.s32.totalorder %s55, %s69
      %p71 = scmp.eq.s32.totalorder %s24, 0
      %p72 = por %p70, %p71
      %s74 = sadd.s32 %s73, 1
      %p77 = scmp.eq.s32.totalorder %s18, 1
      %p78 = scmp.ne.s32.totalorder %s73, %s75
      %p79 = scmp.eq.s32.totalorder %s18, 0
      %p80 = por %p78, %p79
      %p81 = scmp.ne.s32.totalorder %s73, %s75
      %p82 = scmp.eq.s32.totalorder %s23, 1
      %p83 = por %p81, %p82
      %p84 = scmp.ne.s32.totalorder %s75, %s76
      %p85 = scmp.eq.s32.totalorder %s23, 0
      %p86 = por %p84, %p85
      %p87 = scmp.ne.s32.totalorder %s75, %s76
      %p88 = scmp.eq.s32.totalorder %s24, 1
      %p89 = por %p87, %p88
      %p91 = scmp.ne.s32.totalorder %s76, %s90
      %p92 = scmp.eq.s32.totalorder %s24, 0
      %p93 = por %p91, %p92
      %s95 = sadd.s32 %s94, 1
      %p98 = scmp.eq.s32.totalorder %s18, 1
      %p99 = scmp.ne.s32.totalorder %s94, %s96
      %p100 = scmp.eq.s32.totalorder %s18, 0
      %p101 = por %p99, %p100
      %p102 = scmp.ne.s32.totalorder %s94, %s96
      %p103 = scmp.eq.s32.totalorder %s23, 1
      %p104 = por %p102, %p103
      %p105 = scmp.ne.s32.totalorder %s96, %s97
      %p106 = scmp.eq.s32.totalorder %s23, 0
      %p107 = por %p105, %p106
      %p108 = scmp.ne.s32.totalorder %s96, %s97
      %p109 = scmp.eq.s32.totalorder %s24, 1
      %p110 = por %p108, %p109
      %p112 = scmp.ne.s32.totalorder %s97, %s111
      %p113 = scmp.eq.s32.totalorder %s24, 0
      %p114 = por %p112, %p113
      %s116 = sadd.s32 %s115, 1
      %p119 = scmp.eq.s32.totalorder %s18, 1
      %p120 = scmp.ne.s32.totalorder %s115, %s117
      %p121 = scmp.eq.s32.totalorder %s18, 0
      %p122 = por %p120, %p121
      %p123 = scmp.ne.s32.totalorder %s115, %s117
      %p124 = scmp.eq.s32.totalorder %s23, 1
      %p125 = por %p123, %p124
      %p126 = scmp.ne.s32.totalorder %s117, %s118
      %p127 = scmp.eq.s32.totalorder %s23, 0
      %p128 = por %p126, %p127
      %p129 = scmp.ne.s32.totalorder %s117, %s118
      %p130 = scmp.eq.s32.totalorder %s24, 1
      %p131 = por %p129, %p130
      %p133 = scmp.ne.s32.totalorder %s118, %s132
      %p134 = scmp.eq.s32.totalorder %s24, 0
      %p135 = por %p133, %p134
      %s137 = sadd.s32 %s136, 1
      %p140 = scmp.eq.s32.totalorder %s18, 1
      %p141 = scmp.ne.s32.totalorder %s136, %s138
      %p142 = scmp.eq.s32.totalorder %s18, 0
      %p143 = por %p141, %p142
      %p144 = scmp.ne.s32.totalorder %s136, %s138
      %p145 = scmp.eq.s32.totalorder %s23, 1
      %p146 = por %p144, %p145
      %p147 = scmp.ne.s32.totalorder %s138, %s139
      %p148 = scmp.eq.s32.totalorder %s23, 0
      %p149 = por %p147, %p148
      %p150 = scmp.ne.s32.totalorder %s138, %s139
      %p151 = scmp.eq.s32.totalorder %s24, 1
      %p152 = por %p150, %p151
      %p154 = scmp.ne.s32.totalorder %s139, %s153
      %p155 = scmp.eq.s32.totalorder %s24, 0
      %p156 = por %p154, %p155
      %s158 = sadd.s32 %s157, 1
      %p161 = scmp.eq.s32.totalorder %s18, 1
      %p162 = scmp.ne.s32.totalorder %s157, %s159
      %p163 = scmp.eq.s32.totalorder %s18, 0
      %p164 = por %p162, %p163
      %p165 = scmp.ne.s32.totalorder %s157, %s159
      %p166 = scmp.eq.s32.totalorder %s23, 1
      %p167 = por %p165, %p166
      %p168 = scmp.ne.s32.totalorder %s159, %s160
      %p169 = scmp.eq.s32.totalorder %s23, 0
      %p170 = por %p168, %p169
      %p171 = scmp.ne.s32.totalorder %s159, %s160
      %p172 = scmp.eq.s32.totalorder %s24, 1
      %p173 = por %p171, %p172
      %p175 = scmp.ne.s32.totalorder %s160, %s174
      %p176 = scmp.eq.s32.totalorder %s24, 0
      %p177 = por %p175, %p176
      %s179 = sadd.s32 %s178, 1
      %p182 = scmp.eq.s32.totalorder %s18, 1
      %p183 = scmp.ne.s32.totalorder %s178, %s180
      %p184 = scmp.eq.s32.totalorder %s18, 0
      %p185 = por %p183, %p184
      %p186 = scmp.ne.s32.totalorder %s178, %s180
      %p187 = scmp.eq.s32.totalorder %s23, 1
      %p188 = por %p186, %p187
      %p189 = scmp.ne.s32.totalorder %s180, %s181
      %p190 = scmp.eq.s32.totalorder %s23, 0
      %p191 = por %p189, %p190
      %p192 = scmp.ne.s32.totalorder %s180, %s181
      %p193 = scmp.eq.s32.totalorder %s24, 1
      %p194 = por %p192, %p193
      %p196 = scmp.ne.s32.totalorder %s181, %s195
      %p197 = scmp.eq.s32.totalorder %s24, 0
      %p198 = por %p196, %p197
      %s200 = sadd.s32 %s199, 1
      %p203 = scmp.eq.s32.totalorder %s18, 1
      %p204 = scmp.ne.s32.totalorder %s199, %s201
      %p205 = scmp.eq.s32.totalorder %s18, 0
      %p206 = por %p204, %p205
      %p207 = scmp.ne.s32.totalorder %s199, %s201
      %p208 = scmp.eq.s32.totalorder %s23, 1
      %p209 = por %p207, %p208
      %p210 = scmp.ne.s32.totalorder %s201, %s202
      %p211 = scmp.eq.s32.totalorder %s23, 0
      %p212 = por %p210, %p211
      %p213 = scmp.ne.s32.totalorder %s201, %s202
      %p214 = scmp.eq.s32.totalorder %s24, 1
      %p215 = por %p213, %p214
      %p217 = scmp.ne.s32.totalorder %s202, %s216
      %p218 = scmp.eq.s32.totalorder %s24, 0
      %p219 = por %p217, %p218
      %s220 = ssub.s32 %s18, %s25
      %p221 = scmp.eq.s32.totalorder %s220, 0
      %s223 = sadd.s32 %s222, 1
      %s224 = scalar_select %p221, %s222, %s223
      %p227 = pneg %p221
      %p228 = scmp.eq.s32.totalorder %s18, 1
      %p229 = por %p227, %p228
      %p230 = scmp.ne.s32.totalorder %s222, %s225
      %p231 = scmp.eq.s32.totalorder %s18, 0
      %p232 = por %p230, %p231
      %p233 = scmp.ne.s32.totalorder %s222, %s225
      %p234 = scmp.eq.s32.totalorder %s23, 1
      %p235 = por %p233, %p234
      %p236 = scmp.ne.s32.totalorder %s225, %s226
      %p237 = scmp.eq.s32.totalorder %s23, 0
      %p238 = por %p236, %p237
      %p239 = scmp.ne.s32.totalorder %s225, %s226
      %p240 = scmp.eq.s32.totalorder %s24, 1
      %p241 = por %p239, %p240
      %p243 = scmp.ne.s32.totalorder %s226, %s242
      %p244 = scmp.eq.s32.totalorder %s24, 0
      %p245 = por %p243, %p244
      %p246 = scmp.le.s32.totalorder 1, %s18
      %p247 = scmp.lt.s32.totalorder %s18, 3
      %p248 = pnand %p246, %p247
      %p249 = pneg %p248
      // Predicated region
      $region9: #{tpu_custom_call.1} parent=5 // pred_check
        _
      $region10: #{tpu_custom_call.1} parent=5 // pred_check_branch
        %251 = sbr.rel (%p248) target = $region12
      $region11: #{tpu_custom_call.1} parent=5 // pred_region
        %s252 = ssub.s32 %s18, 1
        // Predicated region
        $region13: #{tpu_custom_call.1} parent=11 // pred_check
          %p253 = pneg %p65
        $region14: #{tpu_custom_call.1} parent=11 // pred_check_branch
          %255 = sbr.rel (%p253) target = $region16
        $region15: #{tpu_custom_call.1} parent=11 // pred_region
          _
        $region16: #{tpu_custom_call.1} parent=11 // pred_fallthru
          _
        // Predicated region
        $region17: #{tpu_custom_call.1} parent=11 // pred_check
          %p256 = pneg %p86
        $region18: #{tpu_custom_call.1} parent=11 // pred_check_branch
          %258 = sbr.rel (%p256) target = $region20
        $region19: #{tpu_custom_call.1} parent=11 // pred_region
          _
        $region20: #{tpu_custom_call.1} parent=11 // pred_fallthru
          _
        // Predicated region
        $region21: #{tpu_custom_call.1} parent=11 // pred_check
          %p259 = pneg %p107
        $region22: #{tpu_custom_call.1} parent=11 // pred_check_branch
          %261 = sbr.rel (%p259) target = $region24
        $region23: #{tpu_custom_call.1} parent=11 // pred_region
          _
        $region24: #{tpu_custom_call.1} parent=11 // pred_fallthru
          _
        // Predicated region
        $region25: #{tpu_custom_call.1} parent=11 // pred_check
          %p262 = pneg %p128
        $region26: #{tpu_custom_call.1} parent=11 // pred_check_branch
          %264 = sbr.rel (%p262) target = $region28
        $region27: #{tpu_custom_call.1} parent=11 // pred_region
          _
        $region28: #{tpu_custom_call.1} parent=11 // pred_fallthru
          _
        // Predicated region
        $region29: #{tpu_custom_call.1} parent=11 // pred_check
          %p265 = pneg %p149
        $region30: #{tpu_custom_call.1} parent=11 // pred_check_branch
          %267 = sbr.rel (%p265) target = $region32
        $region31: #{tpu_custom_call.1} parent=11 // pred_region
          _
        $region32: #{tpu_custom_call.1} parent=11 // pred_fallthru
          _
        // Predicated region
        $region33: #{tpu_custom_call.1} parent=11 // pred_check
          %p268 = pneg %p170
        $region34: #{tpu_custom_call.1} parent=11 // pred_check_branch
          %270 = sbr.rel (%p268) target = $region36
        $region35: #{tpu_custom_call.1} parent=11 // pred_region
          _
        $region36: #{tpu_custom_call.1} parent=11 // pred_fallthru
          _
        // Predicated region
        $region37: #{tpu_custom_call.1} parent=11 // pred_check
          %p271 = pneg %p191
        $region38: #{tpu_custom_call.1} parent=11 // pred_check_branch
          %273 = sbr.rel (%p271) target = $region40
        $region39: #{tpu_custom_call.1} parent=11 // pred_region
          _
        $region40: #{tpu_custom_call.1} parent=11 // pred_fallthru
          _
        // Predicated region
        $region41: #{tpu_custom_call.1} parent=11 // pred_check
          %p274 = pneg %p212
        $region42: #{tpu_custom_call.1} parent=11 // pred_check_branch
          %276 = sbr.rel (%p274) target = $region44
        $region43: #{tpu_custom_call.1} parent=11 // pred_region
          _
        $region44: #{tpu_custom_call.1} parent=11 // pred_fallthru
          _
      $region12: #{tpu_custom_call.1} parent=5 // pred_fallthru
        _
      %p277 = scmp.lt.s32.totalorder %s18, 2
      // Predicated region
      $region45: #{tpu_custom_call.1} parent=5 // pred_check
        %p278 = pneg %p277
      $region46: #{tpu_custom_call.1} parent=5 // pred_check_branch
        %280 = sbr.rel (%p278) target = $region48
      $region47: #{tpu_custom_call.1} parent=5 // pred_region
        // Predicated region
        $region49: #{tpu_custom_call.1} parent=47 // pred_check
          %p281 = pneg %p38
        $region50: #{tpu_custom_call.1} parent=47 // pred_check_branch
          %283 = sbr.rel (%p281) target = $region52
        $region51: #{tpu_custom_call.1} parent=47 // pred_region
          %p284 = scmp.lt.s32.totalorder %s18, 1
          %s285 = scalar_select %p284, %s18, 1
          %s286 = smul.addr %s285, 2
          %s287 = smul.addr %s286, 4
          %s288 = scalar_lea.vmem %s0, %s287
        $region52: #{tpu_custom_call.1} parent=47 // pred_fallthru
          _
      $region48: #{tpu_custom_call.1} parent=5 // pred_fallthru
        _
      %p289 = scmp.le.s32.totalorder 1, %s18
      %p290 = scmp.lt.s32.totalorder %s18, 3
      %p291 = pnand %p289, %p290
      %p292 = pneg %p291
      // Predicated region
      $region53: #{tpu_custom_call.1} parent=5 // pred_check
        _
      $region54: #{tpu_custom_call.1} parent=5 // pred_check_branch
        %294 = sbr.rel (%p291) target = $region56
      $region55: #{tpu_custom_call.1} parent=5 // pred_region
        %s295 = ssub.s32 %s18, 1
        %p296 = scmp.lt.s32.totalorder %s23, 1
        %s297 = scalar_select %p296, %s23, 1
        %s298 = smul.addr %s297, 2
        %s299 = smul.addr %s298, 4
        %s300 = scalar_lea.vmem %s0, %s299
        %p301 = pneg %p44
        %p302 = pneg %p41
        %p303 = pneg %p65
        %p304 = pneg %p62
        %p305 = pneg %p86
        %p306 = pneg %p83
        %p307 = pneg %p107
        %p308 = pneg %p104
        %p309 = pneg %p128
        %p310 = pneg %p125
        %p311 = pneg %p149
        %p312 = pneg %p146
        %p313 = pneg %p170
        %p314 = pneg %p167
        %p315 = pneg %p191
        %p316 = pneg %p188
        %p317 = pneg %p212
        %p318 = pneg %p209
        %p319 = pneg %p238
        %p320 = pneg %p235
        %s321 = sand.u32 %s225, 1
        %s322 = scalar_lea.sflag [#allocation6], %s321
        %s323 = sand.u32 %s225, 1
        %s324 = smul.addr %s323, 4
        %s325 = scalar_lea.vmem [#allocation5], %s324
        %p326 = scmp.lt.s32.totalorder %s23, 1
        %s327 = scalar_select %p326, %s23, 1
        %s328 = smul.addr %s327, 2
        %s329 = smul.addr %s328, 4
        %s330 = scalar_lea.vmem %s0, %s329
        %p332 = scmp.eq.s32.totalorder %s23, 0
        // Predicated region
        $region57: #{tpu_custom_call.1} parent=55 // pred_check
          %p333 = pneg %p332
        $region58: #{tpu_custom_call.1} parent=55 // pred_check_branch
          %335 = sbr.rel (%p333) target = $region60
        $region59: #{tpu_custom_call.1} parent=55 // pred_region
          %336 = vst [vmem:[#allocation2] sm:$0xff] 0
          %337 = vst [vmem:[#allocation3] sm:$0xff] 0
        $region60: #{tpu_custom_call.1} parent=55 // pred_fallthru
          _
        %v338 = vld [vmem:[%s330] sm:$0xf]
        %v339 = vpack.c.bf16 %v338, %v338
        %v342 = vunpack.c.l.s4 1983009808
        %v343 = vunpack.c.0.s8 %v342
        %v344 = vlaneseq
        %v345 = vshrl.u32 %v344, 7
        %v346 = vsub.s32 %v343, %v345
        %v347 = vrot.slane %v339, %v346
        %348 = vrot.lane.b32.xlu0 %v347, 19
        %v349 = vpop.permute.xlu0 %348
        %vm351 = vcmask 279704
        %352 = vst.msk [vmem:[#allocation2 + $0x2] sm:$0x3] %vm351, %v349
        %v353 = vld [vmem:[%s330] sm:$0xf]
        %v354 = vpack.c.bf16 %v353, %v353
        %v357 = vunpack.c.l.s4 1983009808
        %v358 = vunpack.c.0.s8 %v357
        %v359 = vlaneseq
        %v360 = vshrl.u32 %v359, 7
        %v361 = vsub.s32 %v358, %v360
        %v362 = vrot.slane %v354, %v361
        %363 = vrot.lane.b32.xlu0 %v362, 21
        %v364 = vpop.permute.xlu0 %363
        %vm366 = vcmask 427304
        %367 = vst.msk [vmem:[#allocation2 + $0x2] sm:$0x3] %vm366, %v364
        %v368 = vld [vmem:[%s330] sm:$0xf]
        %v369 = vpack.c.bf16 %v368, %v368
        %v372 = vunpack.c.l.s4 1983009808
        %v373 = vunpack.c.0.s8 %v372
        %v374 = vlaneseq
        %v375 = vshrl.u32 %v374, 7
        %v376 = vsub.s32 %v373, %v375
        %v377 = vrot.slane %v369, %v376
        %378 = vrot.lane.b32.xlu0 %v377, 23
        %v379 = vpop.permute.xlu0 %378
        %vm381 = vcmask 574904
        %382 = vst.msk [vmem:[#allocation2 + $0x2] sm:$0x3] %vm381, %v379
        %v383 = vld [vmem:[%s330] sm:$0xf]
        %v384 = vpack.c.bf16 %v383, %v383
        %v387 = vunpack.c.l.s4 1983009808
        %v388 = vunpack.c.0.s8 %v387
        %v389 = vlaneseq
        %v390 = vshrl.u32 %v389, 7
        %v391 = vsub.s32 %v388, %v390
        %v392 = vrot.slane %v384, %v391
        %393 = vrot.lane.b32.xlu0 %v392, 25
        %v394 = vpop.permute.xlu0 %393
        %vm396 = vcmask 722504
        %397 = vst.msk [vmem:[#allocation2 + $0x2] sm:$0x3] %vm396, %v394
        %v398 = vld [vmem:[%s330] sm:$0xf]
        %v399 = vpack.c.bf16 %v398, %v398
        %v402 = vunpack.c.l.s4 1983009808
        %v403 = vunpack.c.0.s8 %v402
        %v404 = vlaneseq
        %v405 = vshrl.u32 %v404, 7
        %v406 = vsub.s32 %v403, %v405
        %v407 = vrot.slane %v399, %v406
        %408 = vrot.lane.b32.xlu0 %v407, 27
        %v409 = vpop.permute.xlu0 %408
        %vm411 = vcmask 870104
        %412 = vst.msk [vmem:[#allocation2 + $0x2] sm:$0x3] %vm411, %v409
        %v413 = vld [vmem:[%s330] sm:$0xf]
        %v414 = vpack.c.bf16 %v413, %v413
        %v417 = vunpack.c.l.s4 1983009808
        %v418 = vunpack.c.0.s8 %v417
        %v419 = vlaneseq
        %v420 = vshrl.u32 %v419, 7
        %v421 = vsub.s32 %v418, %v420
        %v422 = vrot.slane %v414, %v421
        %423 = vrot.lane.b32.xlu0 %v422, 29
        %v424 = vpop.permute.xlu0 %423
        %vm426 = vcmask 1017704
        %427 = vst.msk [vmem:[#allocation2 + $0x2] sm:$0x3] %vm426, %v424
        %v428 = vld [vmem:[%s330] sm:$0xf]
        %v429 = vpack.c.bf16 %v428, %v428
        %v432 = vunpack.c.l.s4 1983009808
        %v433 = vunpack.c.0.s8 %v432
        %v434 = vlaneseq
        %v435 = vshrl.u32 %v434, 7
        %v436 = vsub.s32 %v433, %v435
        %v437 = vrot.slane %v429, %v436
        %438 = vrot.lane.b32.xlu0 %v437, 31
        %v439 = vpop.permute.xlu0 %438
        %v440 = vrot.slane %v439, 6
        %vm441 = vcmask 252928
        %v442 = vsel %vm441, %v440, %v439
        %vm444 = vcmask 1042424
        %vm445 = vcmask 117762
        %vm446 = vmor %vm445, %vm444
        %447 = vst.msk [vmem:[#allocation2 + $0x2] sm:$0xf] %vm446, %v442
        %v448 = vld [vmem:[%s330] sm:$0xf]
        %v449 = vpack.c.bf16 %v448, %v448
        %v452 = vunpack.c.l.s4 1983009808
        %v453 = vunpack.c.0.s8 %v452
        %v454 = vlaneseq
        %v455 = vshrl.u32 %v454, 7
        %v456 = vsub.s32 %v453, %v455
        %v457 = vrot.slane %v449, %v456
        %458 = vrot.lane.b32.xlu0 %v457, 33
        %v459 = vpop.permute.xlu0 %458
        %vm461 = vcmask 263304
        %462 = vst.msk [vmem:[#allocation2 + $0x4] sm:$0x3] %vm461, %v459
        %v463 = vld [vmem:[%s330 + $0x4] sm:$0xf]
        %v464 = vpack.c.bf16 %v463, %v463
        %v467 = vunpack.c.l.s4 1983009808
        %v468 = vunpack.c.0.s8 %v467
        %v469 = vlaneseq
        %v470 = vshrl.u32 %v469, 7
        %v471 = vsub.s32 %v468, %v470
        %v472 = vrot.slane %v464, %v471
        %473 = vrot.lane.b32.xlu0 %v472, 35
        %v474 = vpop.permute.xlu0 %473
        %vm476 = vcmask 410904
        %477 = vst.msk [vmem:[#allocation2 + $0x4] sm:$0x3] %vm476, %v474
        %v478 = vld [vmem:[%s330 + $0x4] sm:$0xf]
        %v479 = vpack.c.bf16 %v478, %v478
        %v482 = vunpack.c.l.s4 1983009808
        %v483 = vunpack.c.0.s8 %v482
        %v484 = vlaneseq
        %v485 = vshrl.u32 %v484, 7
        %v486 = vsub.s32 %v483, %v485
        %v487 = vrot.slane %v479, %v486
        %488 = vrot.lane.b32.xlu0 %v487, 37
        %v489 = vpop.permute.xlu0 %488
        %vm491 = vcmask 558504
        %492 = vst.msk [vmem:[#allocation2 + $0x4] sm:$0x3] %vm491, %v489
        %v493 = vld [vmem:[%s330 + $0x4] sm:$0xf]
        %v494 = vpack.c.bf16 %v493, %v493
        %v497 = vunpack.c.l.s4 1983009808
        %v498 = vunpack.c.0.s8 %v497
        %v499 = vlaneseq
        %v500 = vshrl.u32 %v499, 7
        %v501 = vsub.s32 %v498, %v500
        %v502 = vrot.slane %v494, %v501
        %503 = vrot.lane.b32.xlu0 %v502, 39
        %v504 = vpop.permute.xlu0 %503
        %vm506 = vcmask 706104
        %507 = vst.msk [vmem:[#allocation2 + $0x4] sm:$0x3] %vm506, %v504
        %v508 = vld [vmem:[%s330 + $0x4] sm:$0xf]
        %v509 = vpack.c.bf16 %v508, %v508
        %v512 = vunpack.c.l.s4 1983009808
        %v513 = vunpack.c.0.s8 %v512
        %v514 = vlaneseq
        %v515 = vshrl.u32 %v514, 7
        %v516 = vsub.s32 %v513, %v515
        %v517 = vrot.slane %v509, %v516
        %518 = vrot.lane.b32.xlu0 %v517, 41
        %v519 = vpop.permute.xlu0 %518
        %vm521 = vcmask 853704
        %522 = vst.msk [vmem:[#allocation2 + $0x4] sm:$0x3] %vm521, %v519
        %v523 = vld [vmem:[%s330 + $0x4] sm:$0xf]
        %v524 = vpack.c.bf16 %v523, %v523
        %v527 = vunpack.c.l.s4 1983009808
        %v528 = vunpack.c.0.s8 %v527
        %v529 = vlaneseq
        %v530 = vshrl.u32 %v529, 7
        %v531 = vsub.s32 %v528, %v530
        %v532 = vrot.slane %v524, %v531
        %533 = vrot.lane.b32.xlu0 %v532, 43
        %v534 = vpop.permute.xlu0 %533
        %vm536 = vcmask 1001304
        %537 = vst.msk [vmem:[#allocation2 + $0x4] sm:$0x3] %vm536, %v534
        %v538 = vld [vmem:[%s330 + $0x4] sm:$0xf]
        %v539 = vpack.c.bf16 %v538, %v538
        %v542 = vunpack.c.l.s4 1983009808
        %v543 = vunpack.c.0.s8 %v542
        %v544 = vlaneseq
        %v545 = vshrl.u32 %v544, 7
        %v546 = vsub.s32 %v543, %v545
        %v547 = vrot.slane %v539, %v546
        %548 = vrot.lane.b32.xlu0 %v547, 45
        %v549 = vpop.permute.xlu0 %548
        %v550 = vrot.slane %v549, 6
        %vm551 = vcmask 367616
        %v552 = vsel %vm551, %v550, %v549
        %vm554 = vcmask 1042408
        %vm555 = vcmask 101378
        %vm556 = vmor %vm555, %vm554
        %557 = vst.msk [vmem:[#allocation2 + $0x4] sm:$0xf] %vm556, %v552
        %v558 = vld [vmem:[%s330 + $0x4] sm:$0xf]
        %v559 = vpack.c.bf16 %v558, %v558
        %v562 = vunpack.c.l.s4 1983009808
        %v563 = vunpack.c.0.s8 %v562
        %v564 = vlaneseq
        %v565 = vshrl.u32 %v564, 7
        %v566 = vsub.s32 %v563, %v565
        %v567 = vrot.slane %v559, %v566
        %568 = vrot.lane.b32.xlu0 %v567, 47
        %v569 = vpop.permute.xlu0 %568
        %vm571 = vcmask 246904
        %572 = vst.msk [vmem:[#allocation2 + $0x6] sm:$0x3] %vm571, %v569
        %v573 = vld [vmem:[%s330 + $0x4] sm:$0xf]
        %v574 = vpack.c.bf16 %v573, %v573
        %v577 = vunpack.c.l.s4 1983009808
        %v578 = vunpack.c.0.s8 %v577
        %v579 = vlaneseq
        %v580 = vshrl.u32 %v579, 7
        %v581 = vsub.s32 %v578, %v580
        %v582 = vrot.slane %v574, %v581
        %583 = vrot.lane.b32.xlu0 %v582, 49
        %v584 = vpop.permute.xlu0 %583
        %vm586 = vcmask 394504
        %587 = vst.msk [vmem:[#allocation2 + $0x6] sm:$0x3] %vm586, %v584
        %v588 = vld [vmem:[%s7] sm:$0x7]
        %vm589 = vcmp.gt.f32.partialorder %v588, 0.0
        %v590 = vld [vmem:[#allocation2] sm:$0xff]
        %v592 = vcombine.high %v590, %v590
        %v594 = vunpack.c.l.s4 1983009808
        %v595 = vunpack.c.0.s8 %v594
        %v596 = vlaneseq
        %v597 = vshrl.u32 %v596, 7
        %v598 = vsub.s32 %v595, %v597
        %v599 = vrot.slane %v590, %v598
        %v601 = vunpack.c.l.s4 1983009808
        %v602 = vunpack.c.0.s8 %v601
        %v603 = vlaneseq
        %v604 = vshrl.u32 %v603, 7
        %v605 = vsub.s32 %v602, %v604
        %v606 = vrot.slane %v592, %v605
        %607 = vrot.lane.b32.xlu0 %v599, 19
        %v608 = vpop.permute.xlu0 %607
        %609 = vrot.lane.b32.xlu0 %v606, 19
        %v610 = vpop.permute.xlu0 %609
        %v611 = vrot.slane %v608, 4
        %v612 = vrot.slane %v610, 4
        %vm613 = vcmask 1043456
        %v614 = vsel %vm613, %v611, %v612
        %vm615 = vcmask 154624
        %v616 = vsel %vm615, %v608, %v614
        %v617 = vsel %vm615, %v610, %v612
        %620 = vst [vmem:[#allocation4] sm:$0x33] %v616
        %vm621 = vcmask 549888
        %622 = vst.msk [vmem:[#allocation4 + $0x8] sm:$0x3] %vm621, %v617
        %v623 = vld [vmem:[#allocation2] sm:$0xff]
        %v625 = vcombine.low %v623, %v623
        %v627 = vunpack.c.l.s4 1983009808
        %v628 = vunpack.c.0.s8 %v627
        %v629 = vlaneseq
        %v630 = vshrl.u32 %v629, 7
        %v631 = vsub.s32 %v628, %v630
        %v632 = vrot.slane %v625, %v631
        %v634 = vunpack.c.l.s4 1983009808
        %v635 = vunpack.c.0.s8 %v634
        %v636 = vlaneseq
        %v637 = vshrl.u32 %v636, 7
        %v638 = vsub.s32 %v635, %v637
        %v639 = vrot.slane %v623, %v638
        %640 = vrot.lane.b32.xlu0 %v632, 18
        %v641 = vpop.permute.xlu0 %640
        %642 = vrot.lane.b32.xlu0 %v639, 18
        %v643 = vpop.permute.xlu0 %642
        %v644 = vrot.slane %v641, 4
        %v645 = vrot.slane %v643, 4
        %v646 = vsel %vm613, %v644, %v645
        %vm647 = vcmask 146432
        %v648 = vsel %vm647, %v641, %v646
        %v649 = vsel %vm647, %v643, %v645
        %652 = vst [vmem:[#allocation4] sm:$0xcc] %v648
        %vm653 = vcmask 551938
        %654 = vst.msk [vmem:[#allocation4 + $0x8] sm:$0xc] %vm653, %v649
        %v655 = vld [vmem:[#allocation2] sm:$0xff]
        %v657 = vcombine.high %v655, %v655
        %v659 = vunpack.c.l.s4 1983009808
        %v660 = vunpack.c.0.s8 %v659
        %v661 = vlaneseq
        %v662 = vshrl.u32 %v661, 7
        %v663 = vsub.s32 %v660, %v662
        %v664 = vrot.slane %v655, %v663
        %v666 = vunpack.c.l.s4 1983009808
        %v667 = vunpack.c.0.s8 %v666
        %v668 = vlaneseq
        %v669 = vshrl.u32 %v668, 7
        %v670 = vsub.s32 %v667, %v669
        %v671 = vrot.slane %v657, %v670
        %672 = vrot.lane.b32.xlu0 %v664, 17
        %v673 = vpop.permute.xlu0 %672
        %674 = vrot.lane.b32.xlu0 %v671, 17
        %v675 = vpop.permute.xlu0 %674
        %v676 = vrot.slane %v673, 4
        %v677 = vrot.slane %v675, 4
        %v678 = vsel %vm613, %v676, %v677
        %vm679 = vcmask 138240
        %v680 = vsel %vm679, %v673, %v678
        %v681 = vsel %vm679, %v675, %v677
        %684 = vst [vmem:[#allocation4 + $0xc] sm:$0x33] %v680
        %685 = vst.msk [vmem:[#allocation4 + $0x14] sm:$0x3] %vm621, %v681
        %v686 = vld [vmem:[#allocation2] sm:$0xff]
        %v688 = vcombine.low %v686, %v686
        %v690 = vunpack.c.l.s4 1983009808
        %v691 = vunpack.c.0.s8 %v690
        %v692 = vlaneseq
        %v693 = vshrl.u32 %v692, 7
        %v694 = vsub.s32 %v691, %v693
        %v695 = vrot.slane %v688, %v694
        %v697 = vunpack.c.l.s4 1983009808
        %v698 = vunpack.c.0.s8 %v697
        %v699 = vlaneseq
        %v700 = vshrl.u32 %v699, 7
        %v701 = vsub.s32 %v698, %v700
        %v702 = vrot.slane %v686, %v701
        %703 = vrot.lane.b32.xlu0 %v695, 1
        %v704 = vpop.permute.xlu0 %703
        %705 = vrot.lane.b32.xlu0 %v702, 1
        %v706 = vpop.permute.xlu0 %705
        %v707 = vrot.slane %v704, 4
        %v708 = vrot.slane %v706, 4
        %v709 = vsel %vm613, %v707, %v708
        %vm710 = vcmask 7168
        %v711 = vsel %vm710, %v704, %v709
        %v712 = vsel %vm710, %v706, %v708
        %715 = vst [vmem:[#allocation4 + $0xc] sm:$0xcc] %v711
        %716 = vst.msk [vmem:[#allocation4 + $0x14] sm:$0xc] %vm653, %v712
        %v717 = vld [vmem:[#allocation2 + $0x2] sm:$0x3f]
        %v719 = vcombine.high %v717, %v717
        %v721 = vunpack.c.l.s4 1983009808
        %v722 = vunpack.c.0.s8 %v721
        %v723 = vlaneseq
        %v724 = vshrl.u32 %v723, 7
        %v725 = vsub.s32 %v722, %v724
        %v726 = vrot.slane %v717, %v725
        %v728 = vunpack.c.l.s4 1983009808
        %v729 = vunpack.c.0.s8 %v728
        %v730 = vlaneseq
        %v731 = vshrl.u32 %v730, 7
        %v732 = vsub.s32 %v729, %v731
        %v733 = vrot.slane %v719, %v732
        %736 = vst [vmem:[#allocation4 + $0x18] sm:$0x33] %v726
        %737 = vst.msk [vmem:[#allocation4 + $0x20] sm:$0x3] %vm621, %v733
        %v738 = vld [vmem:[#allocation2 + $0x2] sm:$0x3f]
        %v740 = vcombine.low %v738, %v738
        %v742 = vunpack.c.l.s4 1983009808
        %v743 = vunpack.c.0.s8 %v742
        %v744 = vlaneseq
        %v745 = vshrl.u32 %v744, 7
        %v746 = vsub.s32 %v743, %v745
        %v747 = vrot.slane %v740, %v746
        %v749 = vunpack.c.l.s4 1983009808
        %v750 = vunpack.c.0.s8 %v749
        %v751 = vlaneseq
        %v752 = vshrl.u32 %v751, 7
        %v753 = vsub.s32 %v750, %v752
        %v754 = vrot.slane %v738, %v753
        %755 = vrot.lane.b32.xlu0 %v747, 127
        %v756 = vpop.permute.xlu0 %755
        %757 = vrot.lane.b32.xlu0 %v754, 127
        %v758 = vpop.permute.xlu0 %757
        %v759 = vrot.slane %v756, 4
        %v760 = vrot.slane %v758, 4
        %v761 = vsel %vm613, %v759, %v760
        %vm762 = vcmask 1039360
        %v763 = vsel %vm762, %v756, %v761
        %766 = vst [vmem:[#allocation4 + $0x18] sm:$0xcc] %v763
        %767 = vst.msk [vmem:[#allocation4 + $0x20] sm:$0xc] %vm653, %v758
        %v768 = vld [vmem:[#allocation2 + $0x2] sm:$0x3f]
        %v770 = vcombine.high %v768, %v768
        %v772 = vunpack.c.l.s4 1983009808
        %v773 = vunpack.c.0.s8 %v772
        %v774 = vlaneseq
        %v775 = vshrl.u32 %v774, 7
        %v776 = vsub.s32 %v773, %v775
        %v777 = vrot.slane %v768, %v776
        %v779 = vunpack.c.l.s4 1983009808
        %v780 = vunpack.c.0.s8 %v779
        %v781 = vlaneseq
        %v782 = vshrl.u32 %v781, 7
        %v783 = vsub.s32 %v780, %v782
        %v784 = vrot.slane %v770, %v783
        %785 = vrot.lane.b32.xlu0 %v777, 111
        %v786 = vpop.permute.xlu0 %785
        %787 = vrot.lane.b32.xlu0 %v784, 111
        %v788 = vpop.permute.xlu0 %787
        %v789 = vrot.slane %v786, 4
        %v790 = vrot.slane %v788, 4
        %v791 = vsel %vm613, %v789, %v790
        %vm792 = vcmask 908288
        %v793 = vsel %vm792, %v786, %v791
        %796 = vst [vmem:[#allocation4 + $0x24] sm:$0x33] %v793
        %797 = vst.msk [vmem:[#allocation4 + $0x2c] sm:$0x3] %vm621, %v788
        %v798 = vld [vmem:[#allocation2 + $0x2] sm:$0x3f]
        %v800 = vcombine.low %v798, %v798
        %v802 = vunpack.c.l.s4 1983009808
        %v803 = vunpack.c.0.s8 %v802
        %v804 = vlaneseq
        %v805 = vshrl.u32 %v804, 7
        %v806 = vsub.s32 %v803, %v805
        %v807 = vrot.slane %v800, %v806
        %v809 = vunpack.c.l.s4 1983009808
        %v810 = vunpack.c.0.s8 %v809
        %v811 = vlaneseq
        %v812 = vshrl.u32 %v811, 7
        %v813 = vsub.s32 %v810, %v812
        %v814 = vrot.slane %v798, %v813
        %815 = vrot.lane.b32.xlu0 %v807, 110
        %v816 = vpop.permute.xlu0 %815
        %817 = vrot.lane.b32.xlu0 %v814, 110
        %v818 = vpop.permute.xlu0 %817
        %v819 = vrot.slane %v816, 4
        %v820 = vrot.slane %v818, 4
        %v821 = vsel %vm613, %v819, %v820
        %vm822 = vcmask 900096
        %v823 = vsel %vm822, %v816, %v821
        %826 = vst [vmem:[#allocation4 + $0x24] sm:$0xcc] %v823
        %827 = vst.msk [vmem:[#allocation4 + $0x2c] sm:$0xc] %vm653, %v818
        %v828 = vld [vmem:[#allocation2 + $0x2] sm:$0x3f]
        %v830 = vcombine.high %v828, %v828
        %v832 = vunpack.c.l.s4 1983009808
        %v833 = vunpack.c.0.s8 %v832
        %v834 = vlaneseq
        %v835 = vshrl.u32 %v834, 7
        %v836 = vsub.s32 %v833, %v835
        %v837 = vrot.slane %v828, %v836
        %v839 = vunpack.c.l.s4 1983009808
        %v840 = vunpack.c.0.s8 %v839
        %v841 = vlaneseq
        %v842 = vshrl.u32 %v841, 7
        %v843 = vsub.s32 %v840, %v842
        %v844 = vrot.slane %v830, %v843
        %845 = vrot.lane.b32.xlu0 %v837, 109
        %v846 = vpop.permute.xlu0 %845
        %847 = vrot.lane.b32.xlu0 %v844, 109
        %v848 = vpop.permute.xlu0 %847
        %v849 = vrot.slane %v846, 4
        %v850 = vrot.slane %v848, 4
        %v851 = vsel %vm613, %v849, %v850
        %vm852 = vcmask 891904
        %v853 = vsel %vm852, %v846, %v851
        %856 = vst [vmem:[#allocation4 + $0x30] sm:$0x33] %v853
        %857 = vst.msk [vmem:[#allocation4 + $0x38] sm:$0x3] %vm621, %v848
        %v858 = vld [vmem:[%s1] sm:$0x3]
        %v859 = vld [vmem:[#allocation4] sm:$0xff]
        %v860 = vld [vmem:[#allocation4 + $0x8] sm:$0xf]
        %v861 = vld [vmem:[#allocation4 + $0xc] sm:$0xff]
        %v862 = vld [vmem:[#allocation4 + $0x14] sm:$0xf]
        %v863 = vld [vmem:[#allocation4 + $0x18] sm:$0xff]
        %v864 = vld [vmem:[#allocation4 + $0x20] sm:$0xf]
        %v865 = vld [vmem:[#allocation4 + $0x24] sm:$0xff]
        %v866 = vld [vmem:[#allocation4 + $0x2c] sm:$0xf]
        %v867 = vld [vmem:[#allocation4 + $0x30] sm:$0x33]
        %v868 = vld [vmem:[#allocation4 + $0x38] sm:$0x3]
        %v869 = vld [vmem:[%s2] sm:$0xf]
        %871 = vset.pattern.permute.xlu0 0
        %872 = vperm.xlu0 %871, %v869
        %v873 = vpop.permute.xlu0 %872
        %v885 = vunpack.c.l.b16 %v859
        %v886 = vunpack.c.h.b16 %v859
        %v887 = vunpack.c.l.b16 %v860
        %v888 = vunpack.c.l.b16 %v861
        %v889 = vunpack.c.h.b16 %v861
        %v890 = vunpack.c.l.b16 %v862
        %v891 = vunpack.c.l.b16 %v863
        %v892 = vunpack.c.h.b16 %v863
        %v893 = vunpack.c.l.b16 %v864
        %v894 = vunpack.c.l.b16 %v865
        %v895 = vunpack.c.h.b16 %v865
        %v896 = vunpack.c.l.b16 %v866
        %v897 = vunpack.c.l.b16 %v867
        %v898 = vunpack.c.h.b16 %v867
        %v899 = vunpack.c.l.b16 %v868
        %v900 = vpack.c.b16 %v888, %v885
        %v901 = vpack.c.b16 %v889, %v886
        %v902 = vpack.c.b16 %v890, %v887
        %v903 = vpack.c.b16 %v894, %v891
        %v904 = vpack.c.b16 %v895, %v892
        %v905 = vpack.c.b16 %v896, %v893
        %v906 = vpack.c.b16 %v897, %v897
        %v907 = vpack.c.b16 %v898, %v898
        %v908 = vpack.c.b16 %v899, %v899
        %vm915 = vcmask 293888
        %v917 = vsel %vm915, %v858, 0
        %vm919 = vcmask 1041408
        %v921 = vsel %vm919, %v906, 0
        %v924 = vsel %vm919, %v907, 0
        %v927 = vsel %vm919, %v908, 0
        %929 = vmatprep.subr.bf16.mxu0 0
        %930 = vmatpush1.bf16.msra.mxu0 0
        %931 = vmatprep.subr.bf16.mxu0 0
        %932 = vmatpush1.bf16.msra.mxu0 0
        %933 = vmatprep.subr.bf16.mxu0 0
        %934 = vmatpush1.bf16.msra.mxu0 0
        %935 = vmatprep.subr.bf16.mxu0 0
        %936 = vmatpush1.bf16.msra.mxu0 0
        %937 = vmatprep.subr.bf16.mxu0 0
        %938 = vmatpush1.bf16.msra.mxu0 0
        %939 = vmatprep.subr.bf16.mxu0 %v924
        %940 = vmatpush1.bf16.msra.mxu0 %v921
        %941 = vmatprep.subr.bf16.mxu0 %v904
        %942 = vmatpush1.bf16.msra.mxu0 %v903
        %943 = vmatprep.subr.bf16.mxu0 %v901
        %944 = vmatpush1.bf16.msra.mxu0 %v900
        %945 = vmatprep.subr.bf16.mxu0 0
        %946 = vmatpush2.bf16.msra.mxu0 0
        %947 = vmatprep.subr.bf16.mxu0 0
        %948 = vmatpush2.bf16.msra.mxu0 0
        %949 = vmatprep.subr.bf16.mxu0 0
        %950 = vmatpush2.bf16.msra.mxu0 0
        %951 = vmatprep.subr.bf16.mxu0 0
        %952 = vmatpush2.bf16.msra.mxu0 0
        %953 = vmatprep.subr.bf16.mxu0 0
        %954 = vmatpush2.bf16.msra.mxu0 0
        %955 = vmatprep.subr.bf16.mxu0 0
        %956 = vmatpush2.bf16.msra.mxu0 0
        %957 = vmatprep.subr.bf16.mxu0 0
        %958 = vmatpush2.bf16.msra.mxu0 0
        %959 = vmatprep.subr.bf16.mxu0 0
        %960 = vmatpush2.bf16.msra.mxu0 0
        %961 = vmatprep.mubr.bf16.mxu0 0
        %962 = vmatmul.mubr.bf16.gmra.mxu0 %v917
        %v963 = vpop.f32.mrf.mxu0
        %v964 = vadd.f32 %v873, %v963
        %v965 = vpop.f32.mrf.mxu0
        %v966 = vadd.f32 %v873, %v965
        %v967 = vpop.f32.mrf.mxu0
        %v968 = vpop.f32.mrf.mxu0
        %969 = vdwg.mxu0
        %970 = vmatprep.subr.bf16.mxu0 0
        %971 = vmatpush1.bf16.msra.mxu0 0
        %972 = vmatprep.subr.bf16.mxu0 0
        %973 = vmatpush1.bf16.msra.mxu0 0
        %974 = vmatprep.subr.bf16.mxu0 0
        %975 = vmatpush1.bf16.msra.mxu0 0
        %976 = vmatprep.subr.bf16.mxu0 0
        %977 = vmatpush1.bf16.msra.mxu0 0
        %978 = vmatprep.subr.bf16.mxu0 0
        %979 = vmatpush1.bf16.msra.mxu0 0
        %980 = vmatprep.subr.bf16.mxu0 0
        %981 = vmatpush1.bf16.msra.mxu0 %v927
        %982 = vmatprep.subr.bf16.mxu0 0
        %983 = vmatpush1.bf16.msra.mxu0 %v905
        %984 = vmatprep.subr.bf16.mxu0 0
        %985 = vmatpush1.bf16.msra.mxu0 %v902
        %986 = vmatprep.subr.bf16.mxu0 0
        %987 = vmatpush2.bf16.msra.mxu0 0
        %988 = vmatprep.subr.bf16.mxu0 0
        %989 = vmatpush2.bf16.msra.mxu0 0
        %990 = vmatprep.subr.bf16.mxu0 0
        %991 = vmatpush2.bf16.msra.mxu0 0
        %992 = vmatprep.subr.bf16.mxu0 0
        %993 = vmatpush2.bf16.msra.mxu0 0
        %994 = vmatprep.subr.bf16.mxu0 0
        %995 = vmatpush2.bf16.msra.mxu0 0
        %996 = vmatprep.subr.bf16.mxu0 0
        %997 = vmatpush2.bf16.msra.mxu0 0
        %998 = vmatprep.subr.bf16.mxu0 0
        %999 = vmatpush2.bf16.msra.mxu0 0
        %1000 = vmatprep.subr.bf16.mxu0 0
        %1001 = vmatpush2.bf16.msra.mxu0 0
        %1002 = vmatprep.mubr.bf16.mxu0 0
        %1003 = vmatmul.mubr.bf16.gmra.mxu0 %v917
        %v1004 = vpop.f32.mrf.mxu0
        %v1005 = vadd.f32 %v873, %v1004
        %v1006 = vpop.f32.mrf.mxu0
        %v1007 = vpop.f32.mrf.mxu0
        %v1008 = vpop.f32.mrf.mxu0
        %1009 = vdwg.mxu0
        %vm1010 = vcmp.gt.f32.partialorder %v964, 0.0
        %vm1011 = vcmp.gt.f32.partialorder %v966, 0.0
        %vm1012 = vcmp.gt.f32.partialorder %v1005, 0.0
        %v1013 = vmul.f32 %v964, 0.2
        %v1014 = vmul.f32 %v966, 0.2
        %v1015 = vmul.f32 %v1005, 0.2
        %v1016 = vsel %vm1010, %v964, %v1013
        %v1017 = vsel %vm1011, %v966, %v1014
        %v1018 = vsel %vm1012, %v1005, %v1015
        %v1019 = vsel %vm589, 1, 0
        %v1020 = vlaneseq
        %v1021 = vshrl.u32 %v1020, 7
        %v1022 = vsub.s32 0, %v1021
        %v1023 = vrot.slane %v1019, %v1022
        %v1024 = vlaneseq
        %v1025 = vshrl.u32 %v1024, 7
        %v1026 = vsub.s32 1, %v1025
        %v1027 = vrot.slane %v1019, %v1026
        %v1028 = vlaneseq
        %v1029 = vshrl.u32 %v1028, 7
        %v1030 = vsub.s32 2, %v1029
        %v1031 = vrot.slane %v1019, %v1030
        %vm1032 = vcmp.eq.s32.totalorder %v1023, 1
        %vm1033 = vcmp.eq.s32.totalorder %v1027, 1
        %vm1034 = vcmp.eq.s32.totalorder %v1031, 1
        %v1035 = vsel %vm1032, %v1016, 0.0
        %v1036 = vsel %vm1033, %v1017, 0.0
        %v1037 = vsel %vm1034, %v1018, 0.0
        %v1038 = vpack.c.bf16 %v1035, %v1035
        %v1039 = vpack.c.bf16 %v1036, %v1036
        %v1040 = vpack.c.bf16 %v1037, %v1037
        %v1044 = vcombine.low %v1038, %v1039
        %v1046 = vunpack.c.l.s4 1983009808
        %v1047 = vunpack.c.0.s8 %v1046
        %v1048 = vlaneseq
        %v1049 = vshrl.u32 %v1048, 7
        %v1050 = vsub.s32 %v1047, %v1049
        %v1051 = vrot.slane %v1044, %v1050
        %v1053 = vunpack.c.l.s4 1983009808
        %v1054 = vunpack.c.0.s8 %v1053
        %v1055 = vlaneseq
        %v1056 = vshrl.u32 %v1055, 7
        %v1057 = vsub.s32 %v1054, %v1056
        %v1058 = vrot.slane %v1040, %v1057
        %v1059 = vcombine.low %v1051, %v1058
        %vm1061 = vcmask 1043458
        %vm1062 = vmor %vm1061, %vm919
        %vm1063 = vcmask 553988
        %vm1064 = vmor %vm1063, %vm1062
        %1065 = vst.msk [vmem:[#allocation3 + $0x2] sm:$0x3f] %vm1064, %v1059
        %v1066 = vld [vmem:[#allocation3] sm:$0xff]
        %v1068 = vcombine.high %v1066, %v1066
        %v1070 = vunpack.c.l.s4 1983009808
        %v1071 = vunpack.c.0.s8 %v1070
        %v1072 = vlaneseq
        %v1073 = vshrl.u32 %v1072, 7
        %v1074 = vsub.s32 %v1071, %v1073
        %v1075 = vrot.slane %v1066, %v1074
        %v1077 = vunpack.c.l.s4 1983009808
        %v1078 = vunpack.c.0.s8 %v1077
        %v1079 = vlaneseq
        %v1080 = vshrl.u32 %v1079, 7
        %v1081 = vsub.s32 %v1078, %v1080
        %v1082 = vrot.slane %v1068, %v1081
        %1083 = vrot.lane.b32.xlu0 %v1075, 19
        %v1084 = vpop.permute.xlu0 %1083
        %1085 = vrot.lane.b32.xlu0 %v1082, 19
        %v1086 = vpop.permute.xlu0 %1085
        %v1087 = vrot.slane %v1084, 4
        %v1088 = vrot.slane %v1086, 4
        %v1089 = vsel %vm613, %v1087, %v1088
        %v1090 = vsel %vm615, %v1084, %v1089
        %v1091 = vsel %vm615, %v1086, %v1088
        %1094 = vst [vmem:[#allocation4] sm:$0x33] %v1090
        %1095 = vst.msk [vmem:[#allocation4 + $0x8] sm:$0x3] %vm621, %v1091
        %v1096 = vld [vmem:[#allocation3] sm:$0xff]
        %v1098 = vcombine.low %v1096, %v1096
        %v1100 = vunpack.c.l.s4 1983009808
        %v1101 = vunpack.c.0.s8 %v1100
        %v1102 = vlaneseq
        %v1103 = vshrl.u32 %v1102, 7
        %v1104 = vsub.s32 %v1101, %v1103
        %v1105 = vrot.slane %v1098, %v1104
        %v1107 = vunpack.c.l.s4 1983009808
        %v1108 = vunpack.c.0.s8 %v1107
        %v1109 = vlaneseq
        %v1110 = vshrl.u32 %v1109, 7
        %v1111 = vsub.s32 %v1108, %v1110
        %v1112 = vrot.slane %v1096, %v1111
        %1113 = vrot.lane.b32.xlu0 %v1105, 18
        %v1114 = vpop.permute.xlu0 %1113
        %1115 = vrot.lane.b32.xlu0 %v1112, 18
        %v1116 = vpop.permute.xlu0 %1115
        %v1117 = vrot.slane %v1114, 4
        %v1118 = vrot.slane %v1116, 4
        %v1119 = vsel %vm613, %v1117, %v1118
        %v1120 = vsel %vm647, %v1114, %v1119
        %v1121 = vsel %vm647, %v1116, %v1118
        %1124 = vst [vmem:[#allocation4] sm:$0xcc] %v1120
        %1125 = vst.msk [vmem:[#allocation4 + $0x8] sm:$0xc] %vm653, %v1121
        %v1126 = vld [vmem:[#allocation3] sm:$0xff]
        %v1128 = vcombine.high %v1126, %v1126
        %v1130 = vunpack.c.l.s4 1983009808
        %v1131 = vunpack.c.0.s8 %v1130
        %v1132 = vlaneseq
        %v1133 = vshrl.u32 %v1132, 7
        %v1134 = vsub.s32 %v1131, %v1133
        %v1135 = vrot.slane %v1126, %v1134
        %v1137 = vunpack.c.l.s4 1983009808
        %v1138 = vunpack.c.0.s8 %v1137
        %v1139 = vlaneseq
        %v1140 = vshrl.u32 %v1139, 7
        %v1141 = vsub.s32 %v1138, %v1140
        %v1142 = vrot.slane %v1128, %v1141
        %1143 = vrot.lane.b32.xlu0 %v1135, 17
        %v1144 = vpop.permute.xlu0 %1143
        %1145 = vrot.lane.b32.xlu0 %v1142, 17
        %v1146 = vpop.permute.xlu0 %1145
        %v1147 = vrot.slane %v1144, 4
        %v1148 = vrot.slane %v1146, 4
        %v1149 = vsel %vm613, %v1147, %v1148
        %v1150 = vsel %vm679, %v1144, %v1149
        %v1151 = vsel %vm679, %v1146, %v1148
        %1154 = vst [vmem:[#allocation4 + $0xc] sm:$0x33] %v1150
        %1155 = vst.msk [vmem:[#allocation4 + $0x14] sm:$0x3] %vm621, %v1151
        %v1156 = vld [vmem:[#allocation3] sm:$0xff]
        %v1158 = vcombine.low %v1156, %v1156
        %v1160 = vunpack.c.l.s4 1983009808
        %v1161 = vunpack.c.0.s8 %v1160
        %v1162 = vlaneseq
        %v1163 = vshrl.u32 %v1162, 7
        %v1164 = vsub.s32 %v1161, %v1163
        %v1165 = vrot.slane %v1158, %v1164
        %v1167 = vunpack.c.l.s4 1983009808
        %v1168 = vunpack.c.0.s8 %v1167
        %v1169 = vlaneseq
        %v1170 = vshrl.u32 %v1169, 7
        %v1171 = vsub.s32 %v1168, %v1170
        %v1172 = vrot.slane %v1156, %v1171
        %1173 = vrot.lane.b32.xlu0 %v1165, 1
        %v1174 = vpop.permute.xlu0 %1173
        %1175 = vrot.lane.b32.xlu0 %v1172, 1
        %v1176 = vpop.permute.xlu0 %1175
        %v1177 = vrot.slane %v1174, 4
        %v1178 = vrot.slane %v1176, 4
        %v1179 = vsel %vm613, %v1177, %v1178
        %v1180 = vsel %vm710, %v1174, %v1179
        %v1181 = vsel %vm710, %v1176, %v1178
        %1184 = vst [vmem:[#allocation4 + $0xc] sm:$0xcc] %v1180
        %1185 = vst.msk [vmem:[#allocation4 + $0x14] sm:$0xc] %vm653, %v1181
        %v1186 = vld [vmem:[#allocation3 + $0x2] sm:$0x3f]
        %v1188 = vcombine.high %v1186, %v1186
        %v1190 = vunpack.c.l.s4 1983009808
        %v1191 = vunpack.c.0.s8 %v1190
        %v1192 = vlaneseq
        %v1193 = vshrl.u32 %v1192, 7
        %v1194 = vsub.s32 %v1191, %v1193
        %v1195 = vrot.slane %v1186, %v1194
        %v1197 = vunpack.c.l.s4 1983009808
        %v1198 = vunpack.c.0.s8 %v1197
        %v1199 = vlaneseq
        %v1200 = vshrl.u32 %v1199, 7
        %v1201 = vsub.s32 %v1198, %v1200
        %v1202 = vrot.slane %v1188, %v1201
        %1205 = vst [vmem:[#allocation4 + $0x18] sm:$0x33] %v1195
        %1206 = vst.msk [vmem:[#allocation4 + $0x20] sm:$0x3] %vm621, %v1202
        %v1207 = vld [vmem:[#allocation3 + $0x2] sm:$0x3f]
        %v1209 = vcombine.low %v1207, %v1207
        %v1211 = vunpack.c.l.s4 1983009808
        %v1212 = vunpack.c.0.s8 %v1211
        %v1213 = vlaneseq
        %v1214 = vshrl.u32 %v1213, 7
        %v1215 = vsub.s32 %v1212, %v1214
        %v1216 = vrot.slane %v1209, %v1215
        %v1218 = vunpack.c.l.s4 1983009808
        %v1219 = vunpack.c.0.s8 %v1218
        %v1220 = vlaneseq
        %v1221 = vshrl.u32 %v1220, 7
        %v1222 = vsub.s32 %v1219, %v1221
        %v1223 = vrot.slane %v1207, %v1222
        %1224 = vrot.lane.b32.xlu0 %v1216, 127
        %v1225 = vpop.permute.xlu0 %1224
        %1226 = vrot.lane.b32.xlu0 %v1223, 127
        %v1227 = vpop.permute.xlu0 %1226
        %v1228 = vrot.slane %v1225, 4
        %v1229 = vrot.slane %v1227, 4
        %v1230 = vsel %vm613, %v1228, %v1229
        %v1231 = vsel %vm762, %v1225, %v1230
        %1234 = vst [vmem:[#allocation4 + $0x18] sm:$0xcc] %v1231
        %1235 = vst.msk [vmem:[#allocation4 + $0x20] sm:$0xc] %vm653, %v1227
        %v1236 = vld [vmem:[#allocation3 + $0x2] sm:$0x3f]
        %v1238 = vcombine.high %v1236, %v1236
        %v1240 = vunpack.c.l.s4 1983009808
        %v1241 = vunpack.c.0.s8 %v1240
        %v1242 = vlaneseq
        %v1243 = vshrl.u32 %v1242, 7
        %v1244 = vsub.s32 %v1241, %v1243
        %v1245 = vrot.slane %v1236, %v1244
        %v1247 = vunpack.c.l.s4 1983009808
        %v1248 = vunpack.c.0.s8 %v1247
        %v1249 = vlaneseq
        %v1250 = vshrl.u32 %v1249, 7
        %v1251 = vsub.s32 %v1248, %v1250
        %v1252 = vrot.slane %v1238, %v1251
        %1253 = vrot.lane.b32.xlu0 %v1245, 111
        %v1254 = vpop.permute.xlu0 %1253
        %1255 = vrot.lane.b32.xlu0 %v1252, 111
        %v1256 = vpop.permute.xlu0 %1255
        %v1257 = vrot.slane %v1254, 4
        %v1258 = vrot.slane %v1256, 4
        %v1259 = vsel %vm613, %v1257, %v1258
        %v1260 = vsel %vm792, %v1254, %v1259
        %1263 = vst [vmem:[#allocation4 + $0x24] sm:$0x33] %v1260
        %1264 = vst.msk [vmem:[#allocation4 + $0x2c] sm:$0x3] %vm621, %v1256
        %v1265 = vld [vmem:[#allocation3 + $0x2] sm:$0x3f]
        %v1267 = vcombine.low %v1265, %v1265
        %v1269 = vunpack.c.l.s4 1983009808
        %v1270 = vunpack.c.0.s8 %v1269
        %v1271 = vlaneseq
        %v1272 = vshrl.u32 %v1271, 7
        %v1273 = vsub.s32 %v1270, %v1272
        %v1274 = vrot.slane %v1267, %v1273
        %v1276 = vunpack.c.l.s4 1983009808
        %v1277 = vunpack.c.0.s8 %v1276
        %v1278 = vlaneseq
        %v1279 = vshrl.u32 %v1278, 7
        %v1280 = vsub.s32 %v1277, %v1279
        %v1281 = vrot.slane %v1265, %v1280
        %1282 = vrot.lane.b32.xlu0 %v1274, 110
        %v1283 = vpop.permute.xlu0 %1282
        %1284 = vrot.lane.b32.xlu0 %v1281, 110
        %v1285 = vpop.permute.xlu0 %1284
        %v1286 = vrot.slane %v1283, 4
        %v1287 = vrot.slane %v1285, 4
        %v1288 = vsel %vm613, %v1286, %v1287
        %v1289 = vsel %vm822, %v1283, %v1288
        %1292 = vst [vmem:[#allocation4 + $0x24] sm:$0xcc] %v1289
        %1293 = vst.msk [vmem:[#allocation4 + $0x2c] sm:$0xc] %vm653, %v1285
        %v1294 = vld [vmem:[#allocation3 + $0x2] sm:$0x3f]
        %v1296 = vcombine.high %v1294, %v1294
        %v1298 = vunpack.c.l.s4 1983009808
        %v1299 = vunpack.c.0.s8 %v1298
        %v1300 = vlaneseq
        %v1301 = vshrl.u32 %v1300, 7
        %v1302 = vsub.s32 %v1299, %v1301
        %v1303 = vrot.slane %v1294, %v1302
        %v1305 = vunpack.c.l.s4 1983009808
        %v1306 = vunpack.c.0.s8 %v1305
        %v1307 = vlaneseq
        %v1308 = vshrl.u32 %v1307, 7
        %v1309 = vsub.s32 %v1306, %v1308
        %v1310 = vrot.slane %v1296, %v1309
        %1311 = vrot.lane.b32.xlu0 %v1303, 109
        %v1312 = vpop.permute.xlu0 %1311
        %1313 = vrot.lane.b32.xlu0 %v1310, 109
        %v1314 = vpop.permute.xlu0 %1313
        %v1315 = vrot.slane %v1312, 4
        %v1316 = vrot.slane %v1314, 4
        %v1317 = vsel %vm613, %v1315, %v1316
        %v1318 = vsel %vm852, %v1312, %v1317
        %1321 = vst [vmem:[#allocation4 + $0x30] sm:$0x33] %v1318
        %1322 = vst.msk [vmem:[#allocation4 + $0x38] sm:$0x3] %vm621, %v1314
        %v1323 = vld [vmem:[%s3] sm:$0xf]
        %v1324 = vld [vmem:[#allocation4] sm:$0xff]
        %v1325 = vld [vmem:[#allocation4 + $0x8] sm:$0xf]
        %v1326 = vld [vmem:[#allocation4 + $0xc] sm:$0xff]
        %v1327 = vld [vmem:[#allocation4 + $0x14] sm:$0xf]
        %v1328 = vld [vmem:[#allocation4 + $0x18] sm:$0xff]
        %v1329 = vld [vmem:[#allocation4 + $0x20] sm:$0xf]
        %v1330 = vld [vmem:[#allocation4 + $0x24] sm:$0xff]
        %v1331 = vld [vmem:[#allocation4 + $0x2c] sm:$0xf]
        %v1332 = vld [vmem:[#allocation4 + $0x30] sm:$0x33]
        %v1333 = vld [vmem:[#allocation4 + $0x38] sm:$0x3]
        %v1334 = vld [vmem:[%s4] sm:$0xff]
        %1336 = vset.pattern.permute.xlu0 0
        %1337 = vperm.xlu0 %1336, %v1334
        %v1338 = vpop.permute.xlu0 %1337
        %v1350 = vunpack.c.l.b16 %v1324
        %v1351 = vunpack.c.h.b16 %v1324
        %v1352 = vunpack.c.l.b16 %v1325
        %v1353 = vunpack.c.l.b16 %v1326
        %v1354 = vunpack.c.h.b16 %v1326
        %v1355 = vunpack.c.l.b16 %v1327
        %v1356 = vunpack.c.l.b16 %v1328
        %v1357 = vunpack.c.h.b16 %v1328
        %v1358 = vunpack.c.l.b16 %v1329
        %v1359 = vunpack.c.l.b16 %v1330
        %v1360 = vunpack.c.h.b16 %v1330
        %v1361 = vunpack.c.l.b16 %v1331
        %v1362 = vunpack.c.l.b16 %v1332
        %v1363 = vunpack.c.h.b16 %v1332
        %v1364 = vunpack.c.l.b16 %v1333
        %v1365 = vpack.c.b16 %v1353, %v1350
        %v1366 = vpack.c.b16 %v1354, %v1351
        %v1367 = vpack.c.b16 %v1355, %v1352
        %v1368 = vpack.c.b16 %v1359, %v1356
        %v1369 = vpack.c.b16 %v1360, %v1357
        %v1370 = vpack.c.b16 %v1361, %v1358
        %v1371 = vpack.c.b16 %v1362, %v1362
        %v1372 = vpack.c.b16 %v1363, %v1363
        %v1373 = vpack.c.b16 %v1364, %v1364
        %v1381 = vsel %vm915, %v1323, 0
        %v1384 = vsel %vm919, %v1371, 0
        %v1387 = vsel %vm919, %v1372, 0
        %v1390 = vsel %vm919, %v1373, 0
        %1392 = vmatprep.subr.bf16.mxu0 0
        %1393 = vmatpush1.bf16.msra.mxu0 0
        %1394 = vmatprep.subr.bf16.mxu0 0
        %1395 = vmatpush1.bf16.msra.mxu0 0
        %1396 = vmatprep.subr.bf16.mxu0 0
        %1397 = vmatpush1.bf16.msra.mxu0 0
        %1398 = vmatprep.subr.bf16.mxu0 0
        %1399 = vmatpush1.bf16.msra.mxu0 0
        %1400 = vmatprep.subr.bf16.mxu0 0
        %1401 = vmatpush1.bf16.msra.mxu0 0
        %1402 = vmatprep.subr.bf16.mxu0 %v1387
        %1403 = vmatpush1.bf16.msra.mxu0 %v1384
        %1404 = vmatprep.subr.bf16.mxu0 %v1369
        %1405 = vmatpush1.bf16.msra.mxu0 %v1368
        %1406 = vmatprep.subr.bf16.mxu0 %v1366
        %1407 = vmatpush1.bf16.msra.mxu0 %v1365
        %1408 = vmatprep.subr.bf16.mxu0 0
        %1409 = vmatpush2.bf16.msra.mxu0 0
        %1410 = vmatprep.subr.bf16.mxu0 0
        %1411 = vmatpush2.bf16.msra.mxu0 0
        %1412 = vmatprep.subr.bf16.mxu0 0
        %1413 = vmatpush2.bf16.msra.mxu0 0
        %1414 = vmatprep.subr.bf16.mxu0 0
        %1415 = vmatpush2.bf16.msra.mxu0 0
        %1416 = vmatprep.subr.bf16.mxu0 0
        %1417 = vmatpush2.bf16.msra.mxu0 0
        %1418 = vmatprep.subr.bf16.mxu0 0
        %1419 = vmatpush2.bf16.msra.mxu0 0
        %1420 = vmatprep.subr.bf16.mxu0 0
        %1421 = vmatpush2.bf16.msra.mxu0 0
        %1422 = vmatprep.subr.bf16.mxu0 0
        %1423 = vmatpush2.bf16.msra.mxu0 0
        %1424 = vmatprep.mubr.bf16.mxu0 0
        %1425 = vmatmul.mubr.bf16.gmra.mxu0 %v1381
        %v1426 = vpop.f32.mrf.mxu0
        %v1427 = vadd.f32 %v1338, %v1426
        %v1428 = vpop.f32.mrf.mxu0
        %v1429 = vadd.f32 %v1338, %v1428
        %v1430 = vpop.f32.mrf.mxu0
        %v1431 = vpop.f32.mrf.mxu0
        %1432 = vdwg.mxu0
        %1433 = vmatprep.subr.bf16.mxu0 0
        %1434 = vmatpush1.bf16.msra.mxu0 0
        %1435 = vmatprep.subr.bf16.mxu0 0
        %1436 = vmatpush1.bf16.msra.mxu0 0
        %1437 = vmatprep.subr.bf16.mxu0 0
        %1438 = vmatpush1.bf16.msra.mxu0 0
        %1439 = vmatprep.subr.bf16.mxu0 0
        %1440 = vmatpush1.bf16.msra.mxu0 0
        %1441 = vmatprep.subr.bf16.mxu0 0
        %1442 = vmatpush1.bf16.msra.mxu0 0
        %1443 = vmatprep.subr.bf16.mxu0 0
        %1444 = vmatpush1.bf16.msra.mxu0 %v1390
        %1445 = vmatprep.subr.bf16.mxu0 0
        %1446 = vmatpush1.bf16.msra.mxu0 %v1370
        %1447 = vmatprep.subr.bf16.mxu0 0
        %1448 = vmatpush1.bf16.msra.mxu0 %v1367
        %1449 = vmatprep.subr.bf16.mxu0 0
        %1450 = vmatpush2.bf16.msra.mxu0 0
        %1451 = vmatprep.subr.bf16.mxu0 0
        %1452 = vmatpush2.bf16.msra.mxu0 0
        %1453 = vmatprep.subr.bf16.mxu0 0
        %1454 = vmatpush2.bf16.msra.mxu0 0
        %1455 = vmatprep.subr.bf16.mxu0 0
        %1456 = vmatpush2.bf16.msra.mxu0 0
        %1457 = vmatprep.subr.bf16.mxu0 0
        %1458 = vmatpush2.bf16.msra.mxu0 0
        %1459 = vmatprep.subr.bf16.mxu0 0
        %1460 = vmatpush2.bf16.msra.mxu0 0
        %1461 = vmatprep.subr.bf16.mxu0 0
        %1462 = vmatpush2.bf16.msra.mxu0 0
        %1463 = vmatprep.subr.bf16.mxu0 0
        %1464 = vmatpush2.bf16.msra.mxu0 0
        %1465 = vmatprep.mubr.bf16.mxu0 0
        %1466 = vmatmul.mubr.bf16.gmra.mxu0 %v1381
        %v1467 = vpop.f32.mrf.mxu0
        %v1468 = vadd.f32 %v1338, %v1467
        %v1469 = vpop.f32.mrf.mxu0
        %v1470 = vpop.f32.mrf.mxu0
        %v1471 = vpop.f32.mrf.mxu0
        %1472 = vdwg.mxu0
        %vm1473 = vcmp.gt.f32.partialorder %v1427, 0.0
        %vm1474 = vcmp.gt.f32.partialorder %v1429, 0.0
        %vm1475 = vcmp.gt.f32.partialorder %v1468, 0.0
        %v1476 = vmul.f32 %v1427, 0.2
        %v1477 = vmul.f32 %v1429, 0.2
        %v1478 = vmul.f32 %v1468, 0.2
        %v1479 = vsel %vm1473, %v1427, %v1476
        %v1480 = vsel %vm1474, %v1429, %v1477
        %v1481 = vsel %vm1475, %v1468, %v1478
        %v1482 = vld [vmem:[%s5] sm:$0xf]
        %v1483 = vld [vmem:[#allocation2 + $0x2] sm:$0x3f]
        %v1485 = vcombine.high %v1483, %v1483
        %v1487 = vunpack.c.l.s4 1983009808
        %v1488 = vunpack.c.0.s8 %v1487
        %v1489 = vlaneseq
        %v1490 = vshrl.u32 %v1489, 7
        %v1491 = vsub.s32 %v1488, %v1490
        %v1492 = vrot.slane %v1483, %v1491
        %v1494 = vunpack.c.l.s4 1983009808
        %v1495 = vunpack.c.0.s8 %v1494
        %v1496 = vlaneseq
        %v1497 = vshrl.u32 %v1496, 7
        %v1498 = vsub.s32 %v1495, %v1497
        %v1499 = vrot.slane %v1485, %v1498
        %v1500 = vcombine.high %v1492, %v1492
        %vm1501 = vcmask 31744
        %v1503 = vsel %vm1501, %v1482, 0
        %v1506 = vsel %vm919, %v1492, 0
        %v1509 = vsel %vm919, %v1500, 0
        %v1512 = vsel %vm919, %v1499, 0
        %1514 = vmatprep.subr.bf16.mxu0 0
        %1515 = vmatpush1.bf16.msra.mxu0 0
        %1516 = vmatprep.subr.bf16.mxu0 0
        %1517 = vmatpush1.bf16.msra.mxu0 0
        %1518 = vmatprep.subr.bf16.mxu0 0
        %1519 = vmatpush1.bf16.msra.mxu0 0
        %1520 = vmatprep.subr.bf16.mxu0 0
        %1521 = vmatpush1.bf16.msra.mxu0 0
        %1522 = vmatprep.subr.bf16.mxu0 0
        %1523 = vmatpush1.bf16.msra.mxu0 0
        %1524 = vmatprep.subr.bf16.mxu0 0
        %1525 = vmatpush1.bf16.msra.mxu0 0
        %1526 = vmatprep.subr.bf16.mxu0 0
        %1527 = vmatpush1.bf16.msra.mxu0 0
        %1528 = vmatprep.subr.bf16.mxu0 %v1509
        %1529 = vmatpush1.bf16.msra.mxu0 %v1506
        %1530 = vmatprep.subr.bf16.mxu0 0
        %1531 = vmatpush2.bf16.msra.mxu0 0
        %1532 = vmatprep.subr.bf16.mxu0 0
        %1533 = vmatpush2.bf16.msra.mxu0 0
        %1534 = vmatprep.subr.bf16.mxu0 0
        %1535 = vmatpush2.bf16.msra.mxu0 0
        %1536 = vmatprep.subr.bf16.mxu0 0
        %1537 = vmatpush2.bf16.msra.mxu0 0
        %1538 = vmatprep.subr.bf16.mxu0 0
        %1539 = vmatpush2.bf16.msra.mxu0 0
        %1540 = vmatprep.subr.bf16.mxu0 0
        %1541 = vmatpush2.bf16.msra.mxu0 0
        %1542 = vmatprep.subr.bf16.mxu0 0
        %1543 = vmatpush2.bf16.msra.mxu0 0
        %1544 = vmatprep.subr.bf16.mxu0 0
        %1545 = vmatpush2.bf16.msra.mxu0 0
        %1546 = vmatprep.mubr.bf16.mxu0 0
        %1547 = vmatmul.mubr.bf16.gmra.mxu0 %v1503
        %v1548 = vpop.f32.mrf.mxu0
        %v1549 = vadd.f32 0.0, %v1548
        %v1550 = vpop.f32.mrf.mxu0
        %v1551 = vadd.f32 0.0, %v1550
        %v1552 = vpop.f32.mrf.mxu0
        %v1553 = vpop.f32.mrf.mxu0
        %1554 = vdwg.mxu0
        %1555 = vmatprep.subr.bf16.mxu0 0
        %1556 = vmatpush1.bf16.msra.mxu0 0
        %1557 = vmatprep.subr.bf16.mxu0 0
        %1558 = vmatpush1.bf16.msra.mxu0 0
        %1559 = vmatprep.subr.bf16.mxu0 0
        %1560 = vmatpush1.bf16.msra.mxu0 0
        %1561 = vmatprep.subr.bf16.mxu0 0
        %1562 = vmatpush1.bf16.msra.mxu0 0
        %1563 = vmatprep.subr.bf16.mxu0 0
        %1564 = vmatpush1.bf16.msra.mxu0 0
        %1565 = vmatprep.subr.bf16.mxu0 0
        %1566 = vmatpush1.bf16.msra.mxu0 0
        %1567 = vmatprep.subr.bf16.mxu0 0
        %1568 = vmatpush1.bf16.msra.mxu0 0
        %1569 = vmatprep.subr.bf16.mxu0 0
        %1570 = vmatpush1.bf16.msra.mxu0 %v1512
        %1571 = vmatprep.subr.bf16.mxu0 0
        %1572 = vmatpush2.bf16.msra.mxu0 0
        %1573 = vmatprep.subr.bf16.mxu0 0
        %1574 = vmatpush2.bf16.msra.mxu0 0
        %1575 = vmatprep.subr.bf16.mxu0 0
        %1576 = vmatpush2.bf16.msra.mxu0 0
        %1577 = vmatprep.subr.bf16.mxu0 0
        %1578 = vmatpush2.bf16.msra.mxu0 0
        %1579 = vmatprep.subr.bf16.mxu0 0
        %1580 = vmatpush2.bf16.msra.mxu0 0
        %1581 = vmatprep.subr.bf16.mxu0 0
        %1582 = vmatpush2.bf16.msra.mxu0 0
        %1583 = vmatprep.subr.bf16.mxu0 0
        %1584 = vmatpush2.bf16.msra.mxu0 0
        %1585 = vmatprep.subr.bf16.mxu0 0
        %1586 = vmatpush2.bf16.msra.mxu0 0
        %1587 = vmatprep.mubr.bf16.mxu0 0
        %1588 = vmatmul.mubr.bf16.gmra.mxu0 %v1503
        %v1589 = vpop.f32.mrf.mxu0
        %v1590 = vadd.f32 0.0, %v1589
        %v1591 = vpop.f32.mrf.mxu0
        %v1592 = vpop.f32.mrf.mxu0
        %v1593 = vpop.f32.mrf.mxu0
        %1594 = vdwg.mxu0
        %v1595 = vadd.f32 %v1479, %v1549
        %v1596 = vadd.f32 %v1480, %v1551
        %v1597 = vadd.f32 %v1481, %v1590
        %1601 = vrot.lane.b32.xlu0 %v1595, 110
        %v1602 = vpop.permute.xlu0 %1601
        %1603 = vrot.lane.b32.xlu0 %v1596, 110
        %v1604 = vpop.permute.xlu0 %1603
        %1605 = vrot.lane.b32.xlu0 %v1597, 110
        %v1606 = vpop.permute.xlu0 %1605
        %vm1607 = vcmask 900096
        %v1608 = vsel %vm1607, %v1602, %v1604
        %v1609 = vsel %vm1607, %v1604, %v1606
        %v1613 = vadd.f32 %v1595, %v1608
        %v1614 = vadd.f32 %v1596, %v1609
        %v1615 = vadd.f32 %v1597, %v1606
        %v1616 = vld [vmem:[%s8] sm:$0xf]
        %v1617 = vld [vmem:[%s8 + $0x4] sm:$0xf]
        %v1618 = vpack.c.bf16 %v1613, %v1613
        %v1619 = vld [vmem:[%s6] sm:$0xff]
        %1621 = vset.pattern.permute.xlu0 0
        %1622 = vperm.xlu0 %1621, %v1619
        %v1623 = vpop.permute.xlu0 %1622
        %1626 = vrot.lane.b32.xlu0 %v1618, 109
        %v1627 = vpop.permute.xlu0 %1626
        %v1630 = vunpack.c.l.b16 %v1616
        %v1631 = vunpack.c.l.b16 %v1617
        %v1632 = vpack.c.b16 %v1631, %v1630
        %vm1634 = vcmask 130048
        %v1636 = vsel %vm1634, %v1627, 0
        %1638 = vmatprep.subr.bf16.mxu0 0
        %1639 = vmatpush1.bf16.msra.mxu0 0
        %1640 = vmatprep.subr.bf16.mxu0 0
        %1641 = vmatpush1.bf16.msra.mxu0 0
        %1642 = vmatprep.subr.bf16.mxu0 0
        %1643 = vmatpush1.bf16.msra.mxu0 0
        %1644 = vmatprep.subr.bf16.mxu0 0
        %1645 = vmatpush1.bf16.msra.mxu0 0
        %1646 = vmatprep.subr.bf16.mxu0 0
        %1647 = vmatpush1.bf16.msra.mxu0 0
        %1648 = vmatprep.subr.bf16.mxu0 0
        %1649 = vmatpush1.bf16.msra.mxu0 0
        %1650 = vmatprep.subr.bf16.mxu0 0
        %1651 = vmatpush1.bf16.msra.mxu0 0
        %1652 = vmatprep.subr.bf16.mxu0 0
        %1653 = vmatpush1.bf16.msra.mxu0 %v1632
        %1654 = vmatprep.subr.bf16.mxu0 0
        %1655 = vmatpush2.bf16.msra.mxu0 0
        %1656 = vmatprep.subr.bf16.mxu0 0
        %1657 = vmatpush2.bf16.msra.mxu0 0
        %1658 = vmatprep.subr.bf16.mxu0 0
        %1659 = vmatpush2.bf16.msra.mxu0 0
        %1660 = vmatprep.subr.bf16.mxu0 0
        %1661 = vmatpush2.bf16.msra.mxu0 0
        %1662 = vmatprep.subr.bf16.mxu0 0
        %1663 = vmatpush2.bf16.msra.mxu0 0
        %1664 = vmatprep.subr.bf16.mxu0 0
        %1665 = vmatpush2.bf16.msra.mxu0 0
        %1666 = vmatprep.subr.bf16.mxu0 0
        %1667 = vmatpush2.bf16.msra.mxu0 0
        %1668 = vmatprep.subr.bf16.mxu0 0
        %1669 = vmatpush2.bf16.msra.mxu0 0
        %1670 = vmatprep.mubr.bf16.mxu0 0
        %1671 = vmatmul.mubr.bf16.gmra.mxu0 %v1636
        %v1672 = vpop.f32.mrf.mxu0
        %v1673 = vadd.f32 %v1623, %v1672
        %v1674 = vpop.f32.mrf.mxu0
        %v1675 = vpop.f32.mrf.mxu0
        %v1676 = vpop.f32.mrf.mxu0
        %1677 = vdwg.mxu0
        %v1678 = vmul.f32 %v1673, 0.70710677
        %v1679 = vpack.c.bf16 %v1678, %v1678
        %vm1680 = vcmask 60416
        %1681 = vst.msk [vmem:[%s325] sm:$0xf] %vm1680, %v1679
        %v1682 = vld [vmem:[%s6] sm:$0xff]
        %1684 = vset.pattern.permute.xlu0 0
        %1685 = vperm.xlu0 %1684, %v1682
        %v1686 = vpop.permute.xlu0 %1685
        %1688 = vrot.lane.b32.xlu0 %v1618, 73
        %v1689 = vpop.permute.xlu0 %1688
        %v1691 = vsel %vm1634, %v1689, 0
        %1693 = vmatprep.subr.bf16.mxu0 0
        %1694 = vmatpush1.bf16.msra.mxu0 0
        %1695 = vmatprep.subr.bf16.mxu0 0
        %1696 = vmatpush1.bf16.msra.mxu0 0
        %1697 = vmatprep.subr.bf16.mxu0 0
        %1698 = vmatpush1.bf16.msra.mxu0 0
        %1699 = vmatprep.subr.bf16.mxu0 0
        %1700 = vmatpush1.bf16.msra.mxu0 0
        %1701 = vmatprep.subr.bf16.mxu0 0
        %1702 = vmatpush1.bf16.msra.mxu0 0
        %1703 = vmatprep.subr.bf16.mxu0 0
        %1704 = vmatpush1.bf16.msra.mxu0 0
        %1705 = vmatprep.subr.bf16.mxu0 0
        %1706 = vmatpush1.bf16.msra.mxu0 0
        %1707 = vmatprep.subr.bf16.mxu0 0
        %1708 = vmatpush1.bf16.msra.mxu0 %v1632
        %1709 = vmatprep.subr.bf16.mxu0 0
        %1710 = vmatpush2.bf16.msra.mxu0 0
        %1711 = vmatprep.subr.bf16.mxu0 0
        %1712 = vmatpush2.bf16.msra.mxu0 0
        %1713 = vmatprep.subr.bf16.mxu0 0
        %1714 = vmatpush2.bf16.msra.mxu0 0
        %1715 = vmatprep.subr.bf16.mxu0 0
        %1716 = vmatpush2.bf16.msra.mxu0 0
        %1717 = vmatprep.subr.bf16.mxu0 0
        %1718 = vmatpush2.bf16.msra.mxu0 0
        %1719 = vmatprep.subr.bf16.mxu0 0
        %1720 = vmatpush2.bf16.msra.mxu0 0
        %1721 = vmatprep.subr.bf16.mxu0 0
        %1722 = vmatpush2.bf16.msra.mxu0 0
        %1723 = vmatprep.subr.bf16.mxu0 0
        %1724 = vmatpush2.bf16.msra.mxu0 0
        %1725 = vmatprep.mubr.bf16.mxu0 0
        %1726 = vmatmul.mubr.bf16.gmra.mxu0 %v1691
        %v1727 = vpop.f32.mrf.mxu0
        %v1728 = vadd.f32 %v1686, %v1727
        %v1729 = vpop.f32.mrf.mxu0
        %v1730 = vpop.f32.mrf.mxu0
        %v1731 = vpop.f32.mrf.mxu0
        %1732 = vdwg.mxu0
        %v1733 = vmul.f32 %v1728, 0.70710677
        %v1734 = vpack.c.bf16 %v1733, %v1733
        %v1736 = vunpack.c.l.b16 %v1734
        %v1737 = vpack.c.b16 %v1736, %v1736
        %1738 = vrot.lane.b32.xlu0 %v1737, 8
        %v1739 = vpop.permute.xlu0 %1738
        %vm1741 = vcmask 126016
        %1742 = vst.msk [vmem:[%s325] sm:$0xf] %vm1741, %v1739
        %v1743 = vld [vmem:[%s6] sm:$0xff]
        %1745 = vset.pattern.permute.xlu0 0
        %1746 = vperm.xlu0 %1745, %v1743
        %v1747 = vpop.permute.xlu0 %1746
        %1749 = vrot.lane.b32.xlu0 %v1618, 37
        %v1750 = vpop.permute.xlu0 %1749
        %v1752 = vsel %vm1634, %v1750, 0
        %1754 = vmatprep.subr.bf16.mxu0 0
        %1755 = vmatpush1.bf16.msra.mxu0 0
        %1756 = vmatprep.subr.bf16.mxu0 0
        %1757 = vmatpush1.bf16.msra.mxu0 0
        %1758 = vmatprep.subr.bf16.mxu0 0
        %1759 = vmatpush1.bf16.msra.mxu0 0
        %1760 = vmatprep.subr.bf16.mxu0 0
        %1761 = vmatpush1.bf16.msra.mxu0 0
        %1762 = vmatprep.subr.bf16.mxu0 0
        %1763 = vmatpush1.bf16.msra.mxu0 0
        %1764 = vmatprep.subr.bf16.mxu0 0
        %1765 = vmatpush1.bf16.msra.mxu0 0
        %1766 = vmatprep.subr.bf16.mxu0 0
        %1767 = vmatpush1.bf16.msra.mxu0 0
        %1768 = vmatprep.subr.bf16.mxu0 0
        %1769 = vmatpush1.bf16.msra.mxu0 %v1632
        %1770 = vmatprep.subr.bf16.mxu0 0
        %1771 = vmatpush2.bf16.msra.mxu0 0
        %1772 = vmatprep.subr.bf16.mxu0 0
        %1773 = vmatpush2.bf16.msra.mxu0 0
        %1774 = vmatprep.subr.bf16.mxu0 0
        %1775 = vmatpush2.bf16.msra.mxu0 0
        %1776 = vmatprep.subr.bf16.mxu0 0
        %1777 = vmatpush2.bf16.msra.mxu0 0
        %1778 = vmatprep.subr.bf16.mxu0 0
        %1779 = vmatpush2.bf16.msra.mxu0 0
        %1780 = vmatprep.subr.bf16.mxu0 0
        %1781 = vmatpush2.bf16.msra.mxu0 0
        %1782 = vmatprep.subr.bf16.mxu0 0
        %1783 = vmatpush2.bf16.msra.mxu0 0
        %1784 = vmatprep.subr.bf16.mxu0 0
        %1785 = vmatpush2.bf16.msra.mxu0 0
        %1786 = vmatprep.mubr.bf16.mxu0 0
        %1787 = vmatmul.mubr.bf16.gmra.mxu0 %v1752
        %v1788 = vpop.f32.mrf.mxu0
        %v1789 = vadd.f32 %v1747, %v1788
        %v1790 = vpop.f32.mrf.mxu0
        %v1791 = vpop.f32.mrf.mxu0
        %v1792 = vpop.f32.mrf.mxu0
        %1793 = vdwg.mxu0
        %v1794 = vmul.f32 %v1789, 0.70710677
        %v1795 = vpack.c.bf16 %v1794, %v1794
        %v1797 = vunpack.c.l.b16 %v1795
        %v1798 = vpack.c.b16 %v1797, %v1797
        %1799 = vrot.lane.b32.xlu0 %v1798, 16
        %v1800 = vpop.permute.xlu0 %1799
        %vm1802 = vcmask 191616
        %1803 = vst.msk [vmem:[%s325] sm:$0xf] %vm1802, %v1800
        %v1804 = vpack.c.bf16 %v1614, %v1614
        %v1805 = vld [vmem:[%s6] sm:$0xff]
        %1807 = vset.pattern.permute.xlu0 0
        %1808 = vperm.xlu0 %1807, %v1805
        %v1809 = vpop.permute.xlu0 %1808
        %1812 = vrot.lane.b32.xlu0 %v1618, 1
        %v1813 = vpop.permute.xlu0 %1812
        %1814 = vrot.lane.b32.xlu0 %v1804, 1
        %v1815 = vpop.permute.xlu0 %1814
        %v1816 = vsel %vm710, %v1813, %v1815
        %v1818 = vsel %vm1634, %v1816, 0
        %1820 = vmatprep.subr.bf16.mxu0 0
        %1821 = vmatpush1.bf16.msra.mxu0 0
        %1822 = vmatprep.subr.bf16.mxu0 0
        %1823 = vmatpush1.bf16.msra.mxu0 0
        %1824 = vmatprep.subr.bf16.mxu0 0
        %1825 = vmatpush1.bf16.msra.mxu0 0
        %1826 = vmatprep.subr.bf16.mxu0 0
        %1827 = vmatpush1.bf16.msra.mxu0 0
        %1828 = vmatprep.subr.bf16.mxu0 0
        %1829 = vmatpush1.bf16.msra.mxu0 0
        %1830 = vmatprep.subr.bf16.mxu0 0
        %1831 = vmatpush1.bf16.msra.mxu0 0
        %1832 = vmatprep.subr.bf16.mxu0 0
        %1833 = vmatpush1.bf16.msra.mxu0 0
        %1834 = vmatprep.subr.bf16.mxu0 0
        %1835 = vmatpush1.bf16.msra.mxu0 %v1632
        %1836 = vmatprep.subr.bf16.mxu0 0
        %1837 = vmatpush2.bf16.msra.mxu0 0
        %1838 = vmatprep.subr.bf16.mxu0 0
        %1839 = vmatpush2.bf16.msra.mxu0 0
        %1840 = vmatprep.subr.bf16.mxu0 0
        %1841 = vmatpush2.bf16.msra.mxu0 0
        %1842 = vmatprep.subr.bf16.mxu0 0
        %1843 = vmatpush2.bf16.msra.mxu0 0
        %1844 = vmatprep.subr.bf16.mxu0 0
        %1845 = vmatpush2.bf16.msra.mxu0 0
        %1846 = vmatprep.subr.bf16.mxu0 0
        %1847 = vmatpush2.bf16.msra.mxu0 0
        %1848 = vmatprep.subr.bf16.mxu0 0
        %1849 = vmatpush2.bf16.msra.mxu0 0
        %1850 = vmatprep.subr.bf16.mxu0 0
        %1851 = vmatpush2.bf16.msra.mxu0 0
        %1852 = vmatprep.mubr.bf16.mxu0 0
        %1853 = vmatmul.mubr.bf16.gmra.mxu0 %v1818
        %v1854 = vpop.f32.mrf.mxu0
        %v1855 = vadd.f32 %v1809, %v1854
        %v1856 = vpop.f32.mrf.mxu0
        %v1857 = vpop.f32.mrf.mxu0
        %v1858 = vpop.f32.mrf.mxu0
        %1859 = vdwg.mxu0
        %v1860 = vmul.f32 %v1855, 0.70710677
        %v1861 = vpack.c.bf16 %v1860, %v1860
        %v1863 = vunpack.c.l.b16 %v1861
        %v1864 = vpack.c.b16 %v1863, %v1863
        %1865 = vrot.lane.b32.xlu0 %v1864, 24
        %v1866 = vpop.permute.xlu0 %1865
        %vm1868 = vcmask 257216
        %1869 = vst.msk [vmem:[%s325] sm:$0xf] %vm1868, %v1866
        %v1870 = vld [vmem:[%s6] sm:$0xff]
        %1872 = vset.pattern.permute.xlu0 0
        %1873 = vperm.xlu0 %1872, %v1870
        %v1874 = vpop.permute.xlu0 %1873
        %1876 = vrot.lane.b32.xlu0 %v1804, 93
        %v1877 = vpop.permute.xlu0 %1876
        %v1879 = vsel %vm1634, %v1877, 0
        %1881 = vmatprep.subr.bf16.mxu0 0
        %1882 = vmatpush1.bf16.msra.mxu0 0
        %1883 = vmatprep.subr.bf16.mxu0 0
        %1884 = vmatpush1.bf16.msra.mxu0 0
        %1885 = vmatprep.subr.bf16.mxu0 0
        %1886 = vmatpush1.bf16.msra.mxu0 0
        %1887 = vmatprep.subr.bf16.mxu0 0
        %1888 = vmatpush1.bf16.msra.mxu0 0
        %1889 = vmatprep.subr.bf16.mxu0 0
        %1890 = vmatpush1.bf16.msra.mxu0 0
        %1891 = vmatprep.subr.bf16.mxu0 0
        %1892 = vmatpush1.bf16.msra.mxu0 0
        %1893 = vmatprep.subr.bf16.mxu0 0
        %1894 = vmatpush1.bf16.msra.mxu0 0
        %1895 = vmatprep.subr.bf16.mxu0 0
        %1896 = vmatpush1.bf16.msra.mxu0 %v1632
        %1897 = vmatprep.subr.bf16.mxu0 0
        %1898 = vmatpush2.bf16.msra.mxu0 0
        %1899 = vmatprep.subr.bf16.mxu0 0
        %1900 = vmatpush2.bf16.msra.mxu0 0
        %1901 = vmatprep.subr.bf16.mxu0 0
        %1902 = vmatpush2.bf16.msra.mxu0 0
        %1903 = vmatprep.subr.bf16.mxu0 0
        %1904 = vmatpush2.bf16.msra.mxu0 0
        %1905 = vmatprep.subr.bf16.mxu0 0
        %1906 = vmatpush2.bf16.msra.mxu0 0
        %1907 = vmatprep.subr.bf16.mxu0 0
        %1908 = vmatpush2.bf16.msra.mxu0 0
        %1909 = vmatprep.subr.bf16.mxu0 0
        %1910 = vmatpush2.bf16.msra.mxu0 0
        %1911 = vmatprep.subr.bf16.mxu0 0
        %1912 = vmatpush2.bf16.msra.mxu0 0
        %1913 = vmatprep.mubr.bf16.mxu0 0
        %1914 = vmatmul.mubr.bf16.gmra.mxu0 %v1879
        %v1915 = vpop.f32.mrf.mxu0
        %v1916 = vadd.f32 %v1874, %v1915
        %v1917 = vpop.f32.mrf.mxu0
        %v1918 = vpop.f32.mrf.mxu0
        %v1919 = vpop.f32.mrf.mxu0
        %1920 = vdwg.mxu0
        %v1921 = vmul.f32 %v1916, 0.70710677
        %v1922 = vpack.c.bf16 %v1921, %v1921
        %v1924 = vunpack.c.l.b16 %v1922
        %v1925 = vpack.c.b16 %v1924, %v1924
        %1926 = vrot.lane.b32.xlu0 %v1925, 32
        %v1927 = vpop.permute.xlu0 %1926
        %vm1929 = vcmask 322816
        %1930 = vst.msk [vmem:[%s325] sm:$0xf] %vm1929, %v1927
        %v1931 = vld [vmem:[%s6] sm:$0xff]
        %1933 = vset.pattern.permute.xlu0 0
        %1934 = vperm.xlu0 %1933, %v1931
        %v1935 = vpop.permute.xlu0 %1934
        %1937 = vrot.lane.b32.xlu0 %v1804, 57
        %v1938 = vpop.permute.xlu0 %1937
        %v1940 = vsel %vm1634, %v1938, 0
        %1942 = vmatprep.subr.bf16.mxu0 0
        %1943 = vmatpush1.bf16.msra.mxu0 0
        %1944 = vmatprep.subr.bf16.mxu0 0
        %1945 = vmatpush1.bf16.msra.mxu0 0
        %1946 = vmatprep.subr.bf16.mxu0 0
        %1947 = vmatpush1.bf16.msra.mxu0 0
        %1948 = vmatprep.subr.bf16.mxu0 0
        %1949 = vmatpush1.bf16.msra.mxu0 0
        %1950 = vmatprep.subr.bf16.mxu0 0
        %1951 = vmatpush1.bf16.msra.mxu0 0
        %1952 = vmatprep.subr.bf16.mxu0 0
        %1953 = vmatpush1.bf16.msra.mxu0 0
        %1954 = vmatprep.subr.bf16.mxu0 0
        %1955 = vmatpush1.bf16.msra.mxu0 0
        %1956 = vmatprep.subr.bf16.mxu0 0
        %1957 = vmatpush1.bf16.msra.mxu0 %v1632
        %1958 = vmatprep.subr.bf16.mxu0 0
        %1959 = vmatpush2.bf16.msra.mxu0 0
        %1960 = vmatprep.subr.bf16.mxu0 0
        %1961 = vmatpush2.bf16.msra.mxu0 0
        %1962 = vmatprep.subr.bf16.mxu0 0
        %1963 = vmatpush2.bf16.msra.mxu0 0
        %1964 = vmatprep.subr.bf16.mxu0 0
        %1965 = vmatpush2.bf16.msra.mxu0 0
        %1966 = vmatprep.subr.bf16.mxu0 0
        %1967 = vmatpush2.bf16.msra.mxu0 0
        %1968 = vmatprep.subr.bf16.mxu0 0
        %1969 = vmatpush2.bf16.msra.mxu0 0
        %1970 = vmatprep.subr.bf16.mxu0 0
        %1971 = vmatpush2.bf16.msra.mxu0 0
        %1972 = vmatprep.subr.bf16.mxu0 0
        %1973 = vmatpush2.bf16.msra.mxu0 0
        %1974 = vmatprep.mubr.bf16.mxu0 0
        %1975 = vmatmul.mubr.bf16.gmra.mxu0 %v1940
        %v1976 = vpop.f32.mrf.mxu0
        %v1977 = vadd.f32 %v1935, %v1976
        %v1978 = vpop.f32.mrf.mxu0
        %v1979 = vpop.f32.mrf.mxu0
        %v1980 = vpop.f32.mrf.mxu0
        %1981 = vdwg.mxu0
        %v1982 = vmul.f32 %v1977, 0.70710677
        %v1983 = vpack.c.bf16 %v1982, %v1982
        %v1985 = vunpack.c.l.b16 %v1983
        %v1986 = vpack.c.b16 %v1985, %v1985
        %1987 = vrot.lane.b32.xlu0 %v1986, 40
        %v1988 = vpop.permute.xlu0 %1987
        %vm1990 = vcmask 388416
        %1991 = vst.msk [vmem:[%s325] sm:$0xf] %vm1990, %v1988
        %v1992 = vld [vmem:[%s6] sm:$0xff]
        %1994 = vset.pattern.permute.xlu0 0
        %1995 = vperm.xlu0 %1994, %v1992
        %v1996 = vpop.permute.xlu0 %1995
        %1998 = vrot.lane.b32.xlu0 %v1804, 21
        %v1999 = vpop.permute.xlu0 %1998
        %v2001 = vsel %vm1634, %v1999, 0
        %2003 = vmatprep.subr.bf16.mxu0 0
        %2004 = vmatpush1.bf16.msra.mxu0 0
        %2005 = vmatprep.subr.bf16.mxu0 0
        %2006 = vmatpush1.bf16.msra.mxu0 0
        %2007 = vmatprep.subr.bf16.mxu0 0
        %2008 = vmatpush1.bf16.msra.mxu0 0
        %2009 = vmatprep.subr.bf16.mxu0 0
        %2010 = vmatpush1.bf16.msra.mxu0 0
        %2011 = vmatprep.subr.bf16.mxu0 0
        %2012 = vmatpush1.bf16.msra.mxu0 0
        %2013 = vmatprep.subr.bf16.mxu0 0
        %2014 = vmatpush1.bf16.msra.mxu0 0
        %2015 = vmatprep.subr.bf16.mxu0 0
        %2016 = vmatpush1.bf16.msra.mxu0 0
        %2017 = vmatprep.subr.bf16.mxu0 0
        %2018 = vmatpush1.bf16.msra.mxu0 %v1632
        %2019 = vmatprep.subr.bf16.mxu0 0
        %2020 = vmatpush2.bf16.msra.mxu0 0
        %2021 = vmatprep.subr.bf16.mxu0 0
        %2022 = vmatpush2.bf16.msra.mxu0 0
        %2023 = vmatprep.subr.bf16.mxu0 0
        %2024 = vmatpush2.bf16.msra.mxu0 0
        %2025 = vmatprep.subr.bf16.mxu0 0
        %2026 = vmatpush2.bf16.msra.mxu0 0
        %2027 = vmatprep.subr.bf16.mxu0 0
        %2028 = vmatpush2.bf16.msra.mxu0 0
        %2029 = vmatprep.subr.bf16.mxu0 0
        %2030 = vmatpush2.bf16.msra.mxu0 0
        %2031 = vmatprep.subr.bf16.mxu0 0
        %2032 = vmatpush2.bf16.msra.mxu0 0
        %2033 = vmatprep.subr.bf16.mxu0 0
        %2034 = vmatpush2.bf16.msra.mxu0 0
        %2035 = vmatprep.mubr.bf16.mxu0 0
        %2036 = vmatmul.mubr.bf16.gmra.mxu0 %v2001
        %v2037 = vpop.f32.mrf.mxu0
        %v2038 = vadd.f32 %v1996, %v2037
        %v2039 = vpop.f32.mrf.mxu0
        %v2040 = vpop.f32.mrf.mxu0
        %v2041 = vpop.f32.mrf.mxu0
        %2042 = vdwg.mxu0
        %v2043 = vmul.f32 %v2038, 0.70710677
        %v2044 = vpack.c.bf16 %v2043, %v2043
        %v2046 = vunpack.c.l.b16 %v2044
        %v2047 = vpack.c.b16 %v2046, %v2046
        %2048 = vrot.lane.b32.xlu0 %v2047, 48
        %v2049 = vpop.permute.xlu0 %2048
        %vm2051 = vcmask 454016
        %2052 = vst.msk [vmem:[%s325] sm:$0xf] %vm2051, %v2049
        %v2053 = vpack.c.bf16 %v1615, %v1615
        %v2054 = vld [vmem:[%s6] sm:$0xff]
        %2056 = vset.pattern.permute.xlu0 0
        %2057 = vperm.xlu0 %2056, %v2054
        %v2058 = vpop.permute.xlu0 %2057
        %2061 = vrot.lane.b32.xlu0 %v2053, 113
        %v2062 = vpop.permute.xlu0 %2061
        %v2064 = vsel %vm1634, %v2062, 0
        %2066 = vmatprep.subr.bf16.mxu0 0
        %2067 = vmatpush1.bf16.msra.mxu0 0
        %2068 = vmatprep.subr.bf16.mxu0 0
        %2069 = vmatpush1.bf16.msra.mxu0 0
        %2070 = vmatprep.subr.bf16.mxu0 0
        %2071 = vmatpush1.bf16.msra.mxu0 0
        %2072 = vmatprep.subr.bf16.mxu0 0
        %2073 = vmatpush1.bf16.msra.mxu0 0
        %2074 = vmatprep.subr.bf16.mxu0 0
        %2075 = vmatpush1.bf16.msra.mxu0 0
        %2076 = vmatprep.subr.bf16.mxu0 0
        %2077 = vmatpush1.bf16.msra.mxu0 0
        %2078 = vmatprep.subr.bf16.mxu0 0
        %2079 = vmatpush1.bf16.msra.mxu0 0
        %2080 = vmatprep.subr.bf16.mxu0 0
        %2081 = vmatpush1.bf16.msra.mxu0 %v1632
        %2082 = vmatprep.subr.bf16.mxu0 0
        %2083 = vmatpush2.bf16.msra.mxu0 0
        %2084 = vmatprep.subr.bf16.mxu0 0
        %2085 = vmatpush2.bf16.msra.mxu0 0
        %2086 = vmatprep.subr.bf16.mxu0 0
        %2087 = vmatpush2.bf16.msra.mxu0 0
        %2088 = vmatprep.subr.bf16.mxu0 0
        %2089 = vmatpush2.bf16.msra.mxu0 0
        %2090 = vmatprep.subr.bf16.mxu0 0
        %2091 = vmatpush2.bf16.msra.mxu0 0
        %2092 = vmatprep.subr.bf16.mxu0 0
        %2093 = vmatpush2.bf16.msra.mxu0 0
        %2094 = vmatprep.subr.bf16.mxu0 0
        %2095 = vmatpush2.bf16.msra.mxu0 0
        %2096 = vmatprep.subr.bf16.mxu0 0
        %2097 = vmatpush2.bf16.msra.mxu0 0
        %2098 = vmatprep.mubr.bf16.mxu0 0
        %2099 = vmatmul.mubr.bf16.gmra.mxu0 %v2064
        %v2100 = vpop.f32.mrf.mxu0
        %v2101 = vadd.f32 %v2058, %v2100
        %v2102 = vpop.f32.mrf.mxu0
        %v2103 = vpop.f32.mrf.mxu0
        %v2104 = vpop.f32.mrf.mxu0
        %2105 = vdwg.mxu0
        %v2106 = vmul.f32 %v2101, 0.70710677
        %v2107 = vpack.c.bf16 %v2106, %v2106
        %v2109 = vunpack.c.l.b16 %v2107
        %v2110 = vpack.c.b16 %v2109, %v2109
        %2111 = vrot.lane.b32.xlu0 %v2110, 56
        %v2112 = vpop.permute.xlu0 %2111
        %vm2114 = vcmask 519616
        %2115 = vst.msk [vmem:[%s325] sm:$0xf] %vm2114, %v2112
        %s2116 = sand.u32 %s225, 1
        %s2117 = scalar_lea.sflag [#allocation6], %s2116
        %s2118 = sand.u32 %s225, 1
        %s2119 = smul.addr %s2118, 4
        %s2120 = scalar_lea.vmem [#allocation5], %s2119
        // Predicated region
        $region61: #{tpu_custom_call.1} parent=55 // pred_check
          %p2121 = pneg %p235
        $region62: #{tpu_custom_call.1} parent=55 // pred_check_branch
          %2123 = sbr.rel (%p2121) target = $region64
        $region63: #{tpu_custom_call.1} parent=55 // pred_region
          %s2125 = ssub.s32 64, 64
          %2126 = vsyncadd %s2117, %s2125
          %s2127 = smul.addr %s23, 64
          %s2128 = scalar_lea.hbm %s9, %s2127
          %s2130 = sshll.u32 %s2120, 4
          %s2131 = int_to_ptr.vmem [resolvable:$true] %s2130
          %2133 = dma.vmem_to_hbm [thread:$0]  %s2131, 64, %s2128, %s2117
        $region64: #{tpu_custom_call.1} parent=55 // pred_fallthru
          _
      $region56: #{tpu_custom_call.1} parent=5 // pred_fallthru
        _
      %p2134 = scmp.le.s32.totalorder 2, %s18
      // Predicated region
      $region65: #{tpu_custom_call.1} parent=5 // pred_check
        %p2135 = pneg %p2134
      $region66: #{tpu_custom_call.1} parent=5 // pred_check_branch
        %2137 = sbr.rel (%p2135) target = $region68
      $region67: #{tpu_custom_call.1} parent=5 // pred_region
        %s2138 = ssub.s32 %s18, 2
        // Predicated region
        $region69: #{tpu_custom_call.1} parent=67 // pred_check
          %p2139 = pneg %p241
        $region70: #{tpu_custom_call.1} parent=67 // pred_check_branch
          %2141 = sbr.rel (%p2139) target = $region72
        $region71: #{tpu_custom_call.1} parent=67 // pred_region
          %s2142 = sand.u32 %s226, 1
          %s2143 = scalar_lea.sflag [#allocation6], %s2142
          %s2144 = sand.u32 %s226, 1
          %s2145 = smul.addr %s2144, 4
          %s2146 = scalar_lea.vmem [#allocation5], %s2145
          %2147 = dma.done %s2143, 64
        $region72: #{tpu_custom_call.1} parent=67 // pred_fallthru
          _
      $region68: #{tpu_custom_call.1} parent=5 // pred_fallthru
        _
    $region6: #{tpu_custom_call.1} parent=1 // loop_footer
      %s22 = sadd.s32 1, %s18
    $region7: #{tpu_custom_call.1} parent=1 // loop_footer_branch
      %17 = sbr.rel target = $region3
    $region8: #{tpu_custom_call.1} parent=1 // loop_exit
      _
    %2148 = vsyncpa [#allocation6], 1
    %s2149 = scalar_lea.sflag [#allocation6], 1
    %2150 = vsyncpa %s2149, 1

</llo_original>
